<compile_context>
chip_gen: v6e
topology: v6e:2x2x1
jax: 0.10.0
libtpu: 0.0.40
codegen_flags: <defaults>
</compile_context>

<pallas_src>
import math

import jax
import jax.numpy as jnp
from jax import lax
from jax.experimental import pallas as pl
from jax.experimental.pallas import tpu as pltpu

# Small synthetic sizes consistent with the module.
NUM_USERS = 16
NUM_ITEMS = 32
EMBED = 32
NUM_EVENTS = 8
NUM_NEG = 4
T_BEGIN = 0.0

H3 = 3 * EMBED  # per-cell gate width


def _softplus(x):
    # Numerically stable softplus (matches F.softplus): max(x,0) + log1p(exp(-|x|)).
    return jnp.maximum(x, 0.0) + jnp.log1p(jnp.exp(-jnp.abs(x)))


def _gru_combine(gi, gh, h):
    """PyTorch nn.GRUCell combine given pre-activations gi = x@W_ih^T + b_ih,
    gh = h@W_hh^T + b_hh (each (1, 3H)) and previous hidden h (1, H)."""
    H = EMBED
    rz = jax.nn.sigmoid(gi[:, :2 * H] + gh[:, :2 * H])   # r|z in one 64-lane EUP push
    r = rz[:, :H]
    z = rz[:, H:2 * H]
    n = jnp.tanh(gi[:, 2 * H:] + r * gh[:, 2 * H:])
    return (1.0 - z) * n + z * h


def deepcoevolve_kernel(
    uid_ref, iid_ref, negu_ref, negi_ref, dur_ref,        # SMEM event streams
    hdt2_nu_ref, hdt2_ni_ref,                             # VMEM (E, NEG): 0.5*dt^2
    uemb_ref, iemb_ref,                                   # VMEM embedding tables
    gru_w_ref, gru_b_ref,                                 # fused GRU weights (4H,12H), (1,12H)
    stats_ref, ustate_ref, istate_ref,                    # outputs
):
    # Evolving embedding state starts from the embedding tables (mirrors the
    # lazily-initialized user_lookup_embed / item_lookup_embed dicts).
    ustate_ref[...] = uemb_ref[...]
    istate_ref[...] = iemb_ref[...]

    loss = jnp.zeros((1, 1), jnp.float32)
    mae = jnp.zeros((1, 1), jnp.float32)
    mse = jnp.zeros((1, 1), jnp.float32)

    # Event loop fully unrolled (static, tiny trip count): the scheduler can
    # interleave gathers / MXU pushes / EUP pushes across adjacent events, and
    # the last-event GRU update is statically skipped.
    for e in range(NUM_EVENTS):
        u = uid_ref[e]
        it = iid_ref[e]

        # Direct dynamic single-row loads (replaces full-table masked gathers).
        u_emb = ustate_ref[pl.ds(u, 1), :]                # (1, H)
        i_emb = istate_ref[pl.ds(it, 1), :]               # (1, H)

        # Gather negative-sample rows and batch them.
        nu_rows = [ustate_ref[pl.ds(negu_ref[e * NUM_NEG + k], 1), :]
                   for k in range(NUM_NEG)]
        ni_rows = [istate_ref[pl.ds(negi_ref[e * NUM_NEG + k], 1), :]
                   for k in range(NUM_NEG)]
        nu_blk = jnp.concatenate(nu_rows, axis=0)                    # (NEG, H)
        # Positive item first so the base compatibility comes out of the same
        # matmul as the negative-item compatibilities.
        ni_blk = jnp.concatenate([i_emb] + ni_rows, axis=0)          # (1+NEG, H)

        # Compatibilities: softplus(<a, b>) for all pairs at once (A @ B^T).
        comp_i = _softplus(lax.dot_general(
            u_emb, ni_blk, (((1,), (1,)), ((), ())),
            preferred_element_type=jnp.float32))                     # (1, 1+NEG)
        comp_nu = _softplus(lax.dot_general(
            i_emb, nu_blk, (((1,), (1,)), ((), ())),
            preferred_element_type=jnp.float32))                     # (1, NEG)

        comp = jnp.maximum(comp_i[:, 0:1], 1e-20)   # guard -log / divide underflow
        comp_ni = comp_i[:, 1:]                                      # (1, NEG)

        # Rayleigh time prediction vs. observed duration (dur precomputed).
        dur = dur_ref[e]
        time_pred = jnp.sqrt(jnp.pi / (2.0 * comp))
        diff = time_pred - dur
        mae = mae + jnp.abs(diff)
        mse = mse + diff * diff

        # Survival over negative samples: sum_k 0.5 * comp * dt^2
        # (0.5*dt^2 precomputed from the deterministic event stream).
        surv = jnp.sum(comp_nu * hdt2_nu_ref[pl.ds(e, 1), :]
                       + comp_ni * hdt2_ni_ref[pl.ds(e, 1), :],
                       axis=-1, keepdims=True)                       # (1, 1)
        loss = loss + (-jnp.log(comp) + surv)

        # Co-evolution GRU updates; statically skipped for the final event
        # (the PyTorch loop breaks before updating).
        if e + 1 < NUM_EVENTS:
            # Four (1,H)@(H,3H) matmuls fused into one (1,4H)@(4H,12H):
            # output = [gi_u | gh_u | gi_i | gh_i], biases folded in.
            x_fused = jnp.concatenate([i_emb, u_emb, u_emb, i_emb], axis=1)
            g = jnp.dot(x_fused, gru_w_ref[...],
                        preferred_element_type=jnp.float32) + gru_b_ref[...]
            u_new = _gru_combine(g[:, 0 * H3:1 * H3], g[:, 1 * H3:2 * H3], u_emb)
            i_new = _gru_combine(g[:, 2 * H3:3 * H3], g[:, 3 * H3:4 * H3], i_emb)
            # Single-row writebacks (no full-table select + store).
            ustate_ref[pl.ds(u, 1), :] = u_new
            istate_ref[pl.ds(it, 1), :] = i_new

    # Pack the three scalars into one lane-dense (1, 128) unmasked store.
    lane = lax.broadcasted_iota(jnp.int32, (1, 128), 1)
    stats_ref[...] = (jnp.where(lane == 0, loss, 0.0)
                      + jnp.where(lane == 1, mae, 0.0)
                      + jnp.where(lane == 2, mse, 0.0))


def make_params(key):
    ks = jax.random.split(key, 10)
    bound = 1.0 / math.sqrt(EMBED)

    def unif(k, shape):
        return jax.random.uniform(k, shape, jnp.float32, minval=-bound, maxval=bound)

    return dict(
        user_emb=jax.random.normal(ks[0], (NUM_USERS, EMBED), jnp.float32) * 0.1,
        item_emb=jax.random.normal(ks[1], (NUM_ITEMS, EMBED), jnp.float32) * 0.1,
        # nn.GRUCell(embed, embed) weights, pre-transposed to (EMBED, 3*EMBED)
        u_wih_t=unif(ks[2], (EMBED, 3 * EMBED)),
        u_whh_t=unif(ks[3], (EMBED, 3 * EMBED)),
        u_bih=unif(ks[4], (1, 3 * EMBED)),
        u_bhh=unif(ks[5], (1, 3 * EMBED)),
        i_wih_t=unif(ks[6], (EMBED, 3 * EMBED)),
        i_whh_t=unif(ks[7], (EMBED, 3 * EMBED)),
        i_bih=unif(ks[8], (1, 3 * EMBED)),
        i_bhh=unif(ks[9], (1, 3 * EMBED)),
    )
    # TODO(synk): inter_linear / neibor_linear are declared in __init__ but never
    #             used in forward, so they are not materialized here.


def _fused_gru_params(params):
    """Block-diagonal fused GRU weight (4H, 12H) and concatenated bias (1, 12H):
    [i_emb | u_emb | u_emb | i_emb] @ W + b = [gi_u | gh_u | gi_i | gh_i]."""
    H = EMBED
    w = jnp.zeros((4 * H, 4 * H3), jnp.float32)
    w = w.at[0 * H:1 * H, 0 * H3:1 * H3].set(params['u_wih_t'])
    w = w.at[1 * H:2 * H, 1 * H3:2 * H3].set(params['u_whh_t'])
    w = w.at[2 * H:3 * H, 2 * H3:3 * H3].set(params['i_wih_t'])
    w = w.at[3 * H:4 * H, 3 * H3:4 * H3].set(params['i_whh_t'])
    b = jnp.concatenate(
        [params['u_bih'], params['u_bhh'], params['i_bih'], params['i_bhh']], axis=1)
    return w, b


def _precompute_time_deltas(uid, iid, times, neg_u, neg_i, t_begin):
    """Replica of cur_time outside the kernel: dur for the positive pair and
    0.5*dt^2 for every negative pair, per event.  Depends only on the event
    stream (not on embeddings), so it removes the O(U*I) in-kernel table."""
    last_t = jnp.full((NUM_USERS, NUM_ITEMS), t_begin, jnp.float32)  # cur_time.reset
    dur, hdt2_nu, hdt2_ni = [], [], []
    for e in range(NUM_EVENTS):
        u, it, t = uid[e], iid[e], times[e]
        nu = neg_u[e * NUM_NEG:(e + 1) * NUM_NEG]
        ni = neg_i[e * NUM_NEG:(e + 1) * NUM_NEG]
        dur.append(t - last_t[u, it])
        dt_nu = t - last_t[nu, it]
        dt_ni = t - last_t[u, ni]
        hdt2_nu.append(0.5 * dt_nu * dt_nu)
        hdt2_ni.append(0.5 * dt_ni * dt_ni)
        last_t = last_t.at[u, it].set(t)          # cur_time.update_event
    return jnp.stack(dur), jnp.stack(hdt2_nu), jnp.stack(hdt2_ni)


@jax.jit
def deepcoevolve_forward(params, uid, iid, times, neg_u, neg_i, t_begin):
    dur, hdt2_nu, hdt2_ni = _precompute_time_deltas(
        uid, iid, times, neg_u, neg_i, t_begin)
    gru_w, gru_b = _fused_gru_params(params)

    smem = pl.BlockSpec(memory_space=pltpu.MemorySpace.SMEM)
    vmem = pl.BlockSpec(memory_space=pltpu.MemorySpace.VMEM)
    out_shape = (
        jax.ShapeDtypeStruct((1, 128), jnp.float32),             # [loss, mae_sum, mse_sum, ...]
        jax.ShapeDtypeStruct((NUM_USERS, EMBED), jnp.float32),   # evolved user embeddings
        jax.ShapeDtypeStruct((NUM_ITEMS, EMBED), jnp.float32),   # evolved item embeddings
    )
    fn = pl.pallas_call(
        deepcoevolve_kernel,
        out_shape=out_shape,
        in_specs=[smem] * 5 + [vmem] * 6,
        out_specs=(vmem, vmem, vmem),
    )
    stats, ustate, istate = fn(
        uid, iid, neg_u, neg_i, dur,
        hdt2_nu, hdt2_ni,
        params['user_emb'], params['item_emb'],
        gru_w, gru_b,
    )
    loss = stats[0, 0]
    mae = stats[0, 1] / NUM_EVENTS
    rmse = jnp.sqrt(stats[0, 2] / NUM_EVENTS)
    return loss, mae, rmse, ustate, istate


if __name__ == "__main__":
    key = jax.random.PRNGKey(0)
    pkey, ekey = jax.random.split(key)
    params = make_params(pkey)

    k1, k2, k3, k4, k5 = jax.random.split(ekey, 5)
    # Deterministic synthetic event stream (user, item, increasing times).
    uid = jax.random.randint(k1, (NUM_EVENTS,), 0, NUM_USERS, jnp.int32)
    iid = jax.random.randint(k2, (NUM_EVENTS,), 0, NUM_ITEMS, jnp.int32)
    times = jnp.cumsum(
        jax.random.uniform(k3, (NUM_EVENTS,), jnp.float32, 0.1, 1.0)) + T_BEGIN
    # Deterministic negative samples (stand-in for rand_sampler.sample_neg_*).
    neg_u = jax.random.randint(k4, (NUM_EVENTS * NUM_NEG,), 0, NUM_USERS, jnp.int32)
    neg_i = jax.random.randint(k5, (NUM_EVENTS * NUM_NEG,), 0, NUM_ITEMS, jnp.int32)

    out = deepcoevolve_forward(params, uid, iid, times, neg_u, neg_i, T_BEGIN)
    out = jax.block_until_ready(out)
    loss, mae, rmse, ustate, istate = out
    assert jnp.isfinite(loss) and jnp.isfinite(mae) and jnp.isfinite(rmse)
    assert ustate.shape == (NUM_USERS, EMBED) and istate.shape == (NUM_ITEMS, EMBED)
    print("KERNEL_OK")
</pallas_src>

<mosaic_0001>
module attributes {stable_mosaic.version = 11 : i64} {
  func.func @deepcoevolve_kernel(%arg0: memref<8xi32, #tpu.memory_space<smem>>, %arg1: memref<8xi32, #tpu.memory_space<smem>>, %arg2: memref<32xi32, #tpu.memory_space<smem>>, %arg3: memref<32xi32, #tpu.memory_space<smem>>, %arg4: memref<8xf32, #tpu.memory_space<smem>>, %arg5: memref<8x4xf32, #tpu.memory_space<vmem>>, %arg6: memref<8x4xf32, #tpu.memory_space<vmem>>, %arg7: memref<16x32xf32, #tpu.memory_space<vmem>>, %arg8: memref<32x32xf32, #tpu.memory_space<vmem>>, %arg9: memref<128x384xf32, #tpu.memory_space<vmem>>, %arg10: memref<1x384xf32, #tpu.memory_space<vmem>>, %arg11: memref<1x128xf32, #tpu.memory_space<vmem>>, %arg12: memref<16x32xf32, #tpu.memory_space<vmem>>, %arg13: memref<32x32xf32, #tpu.memory_space<vmem>>) attributes {dimension_semantics = [], scalar_prefetch = 0 : i64, scratch_operands = 0 : i64, tpu.core_type = #tpu.core_type<tc>} {
    %c0 = arith.constant 0 : index
    %c0_0 = arith.constant 0 : index
    %0 = vector.load %arg7[%c0, %c0_0] : memref<16x32xf32, #tpu.memory_space<vmem>>, vector<16x32xf32>
    %c0_1 = arith.constant 0 : index
    %c0_2 = arith.constant 0 : index
    %1 = vector.load %arg12[%c0_1, %c0_2] : memref<16x32xf32, #tpu.memory_space<vmem>>, vector<16x32xf32>
    tpu.vector_store %arg12[%c0_1, %c0_2], %0 {strides = array<i32>} : memref<16x32xf32, #tpu.memory_space<vmem>>, vector<16x32xf32>,
    %c0_3 = arith.constant 0 : index
    %c0_4 = arith.constant 0 : index
    %2 = vector.load %arg8[%c0_3, %c0_4] : memref<32x32xf32, #tpu.memory_space<vmem>>, vector<32x32xf32>
    %c0_5 = arith.constant 0 : index
    %c0_6 = arith.constant 0 : index
    %3 = vector.load %arg13[%c0_5, %c0_6] : memref<32x32xf32, #tpu.memory_space<vmem>>, vector<32x32xf32>
    tpu.vector_store %arg13[%c0_5, %c0_6], %2 {strides = array<i32>} : memref<32x32xf32, #tpu.memory_space<vmem>>, vector<32x32xf32>,
    %cst = arith.constant 0.000000e+00 : f32
    %4 = vector.broadcast %cst : f32 to vector<1x1xf32>
    %cst_7 = arith.constant 0.000000e+00 : f32
    %5 = vector.broadcast %cst_7 : f32 to vector<1x1xf32>
    %cst_8 = arith.constant 0.000000e+00 : f32
    %6 = vector.broadcast %cst_8 : f32 to vector<1x1xf32>
    %c0_9 = arith.constant 0 : index
    %7 = memref.load %arg0[%c0_9] : memref<8xi32, #tpu.memory_space<smem>>
    %c0_10 = arith.constant 0 : index
    %8 = memref.load %arg1[%c0_10] : memref<8xi32, #tpu.memory_space<smem>>
    %9 = arith.index_cast %7 : i32 to index
    %c0_11 = arith.constant 0 : index
    %10 = vector.load %arg12[%9, %c0_11] : memref<16x32xf32, #tpu.memory_space<vmem>>, vector<1x32xf32>
    %11 = arith.index_cast %8 : i32 to index
    %c0_12 = arith.constant 0 : index
    %12 = vector.load %arg13[%11, %c0_12] : memref<32x32xf32, #tpu.memory_space<vmem>>, vector<1x32xf32>
    %c0_13 = arith.constant 0 : index
    %13 = memref.load %arg2[%c0_13] : memref<32xi32, #tpu.memory_space<smem>>
    %14 = arith.index_cast %13 : i32 to index
    %c0_14 = arith.constant 0 : index
    %15 = vector.load %arg12[%14, %c0_14] : memref<16x32xf32, #tpu.memory_space<vmem>>, vector<1x32xf32>
    %c1 = arith.constant 1 : index
    %16 = memref.load %arg2[%c1] : memref<32xi32, #tpu.memory_space<smem>>
    %17 = arith.index_cast %16 : i32 to index
    %c0_15 = arith.constant 0 : index
    %18 = vector.load %arg12[%17, %c0_15] : memref<16x32xf32, #tpu.memory_space<vmem>>, vector<1x32xf32>
    %c2 = arith.constant 2 : index
    %19 = memref.load %arg2[%c2] : memref<32xi32, #tpu.memory_space<smem>>
    %20 = arith.index_cast %19 : i32 to index
    %c0_16 = arith.constant 0 : index
    %21 = vector.load %arg12[%20, %c0_16] : memref<16x32xf32, #tpu.memory_space<vmem>>, vector<1x32xf32>
    %c3 = arith.constant 3 : index
    %22 = memref.load %arg2[%c3] : memref<32xi32, #tpu.memory_space<smem>>
    %23 = arith.index_cast %22 : i32 to index
    %c0_17 = arith.constant 0 : index
    %24 = vector.load %arg12[%23, %c0_17] : memref<16x32xf32, #tpu.memory_space<vmem>>, vector<1x32xf32>
    %c0_18 = arith.constant 0 : index
    %25 = memref.load %arg3[%c0_18] : memref<32xi32, #tpu.memory_space<smem>>
    %26 = arith.index_cast %25 : i32 to index
    %c0_19 = arith.constant 0 : index
    %27 = vector.load %arg13[%26, %c0_19] : memref<32x32xf32, #tpu.memory_space<vmem>>, vector<1x32xf32>
    %c1_20 = arith.constant 1 : index
    %28 = memref.load %arg3[%c1_20] : memref<32xi32, #tpu.memory_space<smem>>
    %29 = arith.index_cast %28 : i32 to index
    %c0_21 = arith.constant 0 : index
    %30 = vector.load %arg13[%29, %c0_21] : memref<32x32xf32, #tpu.memory_space<vmem>>, vector<1x32xf32>
    %c2_22 = arith.constant 2 : index
    %31 = memref.load %arg3[%c2_22] : memref<32xi32, #tpu.memory_space<smem>>
    %32 = arith.index_cast %31 : i32 to index
    %c0_23 = arith.constant 0 : index
    %33 = vector.load %arg13[%32, %c0_23] : memref<32x32xf32, #tpu.memory_space<vmem>>, vector<1x32xf32>
    %c3_24 = arith.constant 3 : index
    %34 = memref.load %arg3[%c3_24] : memref<32xi32, #tpu.memory_space<smem>>
    %35 = arith.index_cast %34 : i32 to index
    %c0_25 = arith.constant 0 : index
    %36 = vector.load %arg13[%35, %c0_25] : memref<32x32xf32, #tpu.memory_space<vmem>>, vector<1x32xf32>
    %37 = tpu.concatenate %15, %18, %21, %24 in 0 : vector<1x32xf32>, vector<1x32xf32>, vector<1x32xf32>, vector<1x32xf32> -> vector<4x32xf32>
    %38 = tpu.concatenate %12, %27, %30, %33, %36 in 0 : vector<1x32xf32>, vector<1x32xf32>, vector<1x32xf32>, vector<1x32xf32>, vector<1x32xf32> -> vector<5x32xf32>
    %cst_26 = arith.constant dense<0.000000e+00> : vector<1x5xf32>
    %39 = tpu.matmul %10, %38, %cst_26 {dimension_numbers = #tpu.dot_dimension_numbers<[1], [1], [0], [0], [0, 0, 1, 0], [], []>} : vector<1x32xf32>, vector<5x32xf32>, vector<1x5xf32> -> vector<1x5xf32>
    %cst_27 = arith.constant 0.000000e+00 : f32
    %40 = vector.broadcast %cst_27 : f32 to vector<1x5xf32>
    %41 = arith.maximumf %39, %40 : vector<1x5xf32>
    %42 = math.absf %39 : vector<1x5xf32>
    %cst_28 = arith.constant 0.000000e+00 : f32
    %43 = vector.broadcast %cst_28 : f32 to vector<1x5xf32>
    %44 = arith.subf %43, %42 : vector<1x5xf32>
    %45 = math.exp %44 : vector<1x5xf32>
    %46 = math.log1p %45 : vector<1x5xf32>
    %47 = arith.addf %41, %46 : vector<1x5xf32>
    %cst_29 = arith.constant dense<0.000000e+00> : vector<1x4xf32>
    %48 = tpu.matmul %12, %37, %cst_29 {dimension_numbers = #tpu.dot_dimension_numbers<[1], [1], [0], [0], [0, 0, 1, 0], [], []>} : vector<1x32xf32>, vector<4x32xf32>, vector<1x4xf32> -> vector<1x4xf32>
    %cst_30 = arith.constant 0.000000e+00 : f32
    %49 = vector.broadcast %cst_30 : f32 to vector<1x4xf32>
    %50 = arith.maximumf %48, %49 : vector<1x4xf32>
    %51 = math.absf %48 : vector<1x4xf32>
    %cst_31 = arith.constant 0.000000e+00 : f32
    %52 = vector.broadcast %cst_31 : f32 to vector<1x4xf32>
    %53 = arith.subf %52, %51 : vector<1x4xf32>
    %54 = math.exp %53 : vector<1x4xf32>
    %55 = math.log1p %54 : vector<1x4xf32>
    %56 = arith.addf %50, %55 : vector<1x4xf32>
    %57 = vector.extract_strided_slice %47 {offsets = [0, 0], sizes = [1, 1], strides = [1, 1]} : vector<1x5xf32> to vector<1x1xf32>
    %cst_32 = arith.constant 9.99999968E-21 : f32
    %58 = vector.broadcast %cst_32 : f32 to vector<1x1xf32>
    %59 = arith.maximumf %57, %58 : vector<1x1xf32>
    %60 = vector.extract_strided_slice %47 {offsets = [0, 1], sizes = [1, 4], strides = [1, 1]} : vector<1x5xf32> to vector<1x4xf32>
    %c0_33 = arith.constant 0 : index
    %61 = memref.load %arg4[%c0_33] : memref<8xf32, #tpu.memory_space<smem>>
    %cst_34 = arith.constant 2.000000e+00 : f32
    %62 = vector.broadcast %cst_34 : f32 to vector<1x1xf32>
    %63 = arith.mulf %62, %59 : vector<1x1xf32>
    %cst_35 = arith.constant 3.14159274 : f32
    %64 = vector.broadcast %cst_35 : f32 to vector<1x1xf32>
    %65 = arith.divf %64, %63 : vector<1x1xf32>
    %66 = math.sqrt %65 : vector<1x1xf32>
    %67 = vector.broadcast %61 : f32 to vector<1x1xf32>
    %68 = arith.subf %66, %67 : vector<1x1xf32>
    %69 = math.absf %68 : vector<1x1xf32>
    %70 = arith.addf %5, %69 : vector<1x1xf32>
    %71 = arith.mulf %68, %68 : vector<1x1xf32>
    %72 = arith.addf %6, %71 : vector<1x1xf32>
    %c0_36 = arith.constant 0 : index
    %c0_37 = arith.constant 0 : index
    %73 = vector.load %arg5[%c0_36, %c0_37] : memref<8x4xf32, #tpu.memory_space<vmem>>, vector<1x4xf32>
    %74 = arith.mulf %56, %73 : vector<1x4xf32>
    %c0_38 = arith.constant 0 : index
    %c0_39 = arith.constant 0 : index
    %75 = vector.load %arg6[%c0_38, %c0_39] : memref<8x4xf32, #tpu.memory_space<vmem>>, vector<1x4xf32>
    %76 = arith.mulf %60, %75 : vector<1x4xf32>
    %77 = arith.addf %74, %76 : vector<1x4xf32>
    %cst_40 = arith.constant dense<0.000000e+00> : vector<1xf32>
    %78 = vector.multi_reduction <add>, %77, %cst_40 [1] : vector<1x4xf32> to vector<1xf32>
    %79 = vector.shape_cast %78 : vector<1xf32> to vector<1x1xf32>
    %80 = math.log %59 : vector<1x1xf32>
    %cst_41 = arith.constant 0.000000e+00 : f32
    %81 = vector.broadcast %cst_41 : f32 to vector<1x1xf32>
    %82 = arith.subf %81, %80 : vector<1x1xf32>
    %83 = arith.addf %82, %79 : vector<1x1xf32>
    %84 = arith.addf %4, %83 : vector<1x1xf32>
    %85 = tpu.concatenate %12, %10, %10, %12 in 1 : vector<1x32xf32>, vector<1x32xf32>, vector<1x32xf32>, vector<1x32xf32> -> vector<1x128xf32>
    %c0_42 = arith.constant 0 : index
    %c0_43 = arith.constant 0 : index
    %86 = vector.load %arg9[%c0_42, %c0_43] : memref<128x384xf32, #tpu.memory_space<vmem>>, vector<128x384xf32>
    %cst_44 = arith.constant dense<0.000000e+00> : vector<1x384xf32>
    %87 = tpu.matmul %85, %86, %cst_44 {dimension_numbers = #tpu.dot_dimension_numbers<[1], [0], [0], [1], [0, 0, 1, 1], [], []>} : vector<1x128xf32>, vector<128x384xf32>, vector<1x384xf32> -> vector<1x384xf32>
    %c0_45 = arith.constant 0 : index
    %c0_46 = arith.constant 0 : index
    %88 = vector.load %arg10[%c0_45, %c0_46] : memref<1x384xf32, #tpu.memory_space<vmem>>, vector<1x384xf32>
    %89 = arith.addf %87, %88 : vector<1x384xf32>
    %90 = vector.extract_strided_slice %89 {offsets = [0, 0], sizes = [1, 96], strides = [1, 1]} : vector<1x384xf32> to vector<1x96xf32>
    %91 = vector.extract_strided_slice %89 {offsets = [0, 96], sizes = [1, 96], strides = [1, 1]} : vector<1x384xf32> to vector<1x96xf32>
    %92 = vector.extract_strided_slice %90 {offsets = [0, 0], sizes = [1, 64], strides = [1, 1]} : vector<1x96xf32> to vector<1x64xf32>
    %93 = vector.extract_strided_slice %91 {offsets = [0, 0], sizes = [1, 64], strides = [1, 1]} : vector<1x96xf32> to vector<1x64xf32>
    %94 = arith.addf %92, %93 : vector<1x64xf32>
    %95 = arith.negf %94 : vector<1x64xf32>
    %96 = math.exp %95 : vector<1x64xf32>
    %cst_47 = arith.constant 1.000000e+00 : f32
    %97 = vector.broadcast %cst_47 : f32 to vector<1x64xf32>
    %98 = arith.addf %97, %96 : vector<1x64xf32>
    %99 = arith.divf %97, %98 : vector<1x64xf32>
    %100 = vector.extract_strided_slice %99 {offsets = [0, 0], sizes = [1, 32], strides = [1, 1]} : vector<1x64xf32> to vector<1x32xf32>
    %101 = vector.extract_strided_slice %99 {offsets = [0, 32], sizes = [1, 32], strides = [1, 1]} : vector<1x64xf32> to vector<1x32xf32>
    %102 = vector.extract_strided_slice %90 {offsets = [0, 64], sizes = [1, 32], strides = [1, 1]} : vector<1x96xf32> to vector<1x32xf32>
    %103 = vector.extract_strided_slice %91 {offsets = [0, 64], sizes = [1, 32], strides = [1, 1]} : vector<1x96xf32> to vector<1x32xf32>
    %104 = arith.mulf %100, %103 : vector<1x32xf32>
    %105 = arith.addf %102, %104 : vector<1x32xf32>
    %106 = math.tanh %105 : vector<1x32xf32>
    %cst_48 = arith.constant 1.000000e+00 : f32
    %107 = vector.broadcast %cst_48 : f32 to vector<1x32xf32>
    %108 = arith.subf %107, %101 : vector<1x32xf32>
    %109 = arith.mulf %108, %106 : vector<1x32xf32>
    %110 = arith.mulf %101, %10 : vector<1x32xf32>
    %111 = arith.addf %109, %110 : vector<1x32xf32>
    %112 = vector.extract_strided_slice %89 {offsets = [0, 192], sizes = [1, 96], strides = [1, 1]} : vector<1x384xf32> to vector<1x96xf32>
    %113 = vector.extract_strided_slice %89 {offsets = [0, 288], sizes = [1, 96], strides = [1, 1]} : vector<1x384xf32> to vector<1x96xf32>
    %114 = vector.extract_strided_slice %112 {offsets = [0, 0], sizes = [1, 64], strides = [1, 1]} : vector<1x96xf32> to vector<1x64xf32>
    %115 = vector.extract_strided_slice %113 {offsets = [0, 0], sizes = [1, 64], strides = [1, 1]} : vector<1x96xf32> to vector<1x64xf32>
    %116 = arith.addf %114, %115 : vector<1x64xf32>
    %117 = arith.negf %116 : vector<1x64xf32>
    %118 = math.exp %117 : vector<1x64xf32>
    %cst_49 = arith.constant 1.000000e+00 : f32
    %119 = vector.broadcast %cst_49 : f32 to vector<1x64xf32>
    %120 = arith.addf %119, %118 : vector<1x64xf32>
    %121 = arith.divf %119, %120 : vector<1x64xf32>
    %122 = vector.extract_strided_slice %121 {offsets = [0, 0], sizes = [1, 32], strides = [1, 1]} : vector<1x64xf32> to vector<1x32xf32>
    %123 = vector.extract_strided_slice %121 {offsets = [0, 32], sizes = [1, 32], strides = [1, 1]} : vector<1x64xf32> to vector<1x32xf32>
    %124 = vector.extract_strided_slice %112 {offsets = [0, 64], sizes = [1, 32], strides = [1, 1]} : vector<1x96xf32> to vector<1x32xf32>
    %125 = vector.extract_strided_slice %113 {offsets = [0, 64], sizes = [1, 32], strides = [1, 1]} : vector<1x96xf32> to vector<1x32xf32>
    %126 = arith.mulf %122, %125 : vector<1x32xf32>
    %127 = arith.addf %124, %126 : vector<1x32xf32>
    %128 = math.tanh %127 : vector<1x32xf32>
    %cst_50 = arith.constant 1.000000e+00 : f32
    %129 = vector.broadcast %cst_50 : f32 to vector<1x32xf32>
    %130 = arith.subf %129, %123 : vector<1x32xf32>
    %131 = arith.mulf %130, %128 : vector<1x32xf32>
    %132 = arith.mulf %123, %12 : vector<1x32xf32>
    %133 = arith.addf %131, %132 : vector<1x32xf32>
    %134 = arith.index_cast %7 : i32 to index
    %c0_51 = arith.constant 0 : index
    %135 = vector.load %arg12[%134, %c0_51] : memref<16x32xf32, #tpu.memory_space<vmem>>, vector<1x32xf32>
    tpu.vector_store %arg12[%134, %c0_51], %111 {strides = array<i32>} : memref<16x32xf32, #tpu.memory_space<vmem>>, vector<1x32xf32>,
    %136 = arith.index_cast %8 : i32 to index
    %c0_52 = arith.constant 0 : index
    %137 = vector.load %arg13[%136, %c0_52] : memref<32x32xf32, #tpu.memory_space<vmem>>, vector<1x32xf32>
    tpu.vector_store %arg13[%136, %c0_52], %133 {strides = array<i32>} : memref<32x32xf32, #tpu.memory_space<vmem>>, vector<1x32xf32>,
    %c1_53 = arith.constant 1 : index
    %138 = memref.load %arg0[%c1_53] : memref<8xi32, #tpu.memory_space<smem>>
    %c1_54 = arith.constant 1 : index
    %139 = memref.load %arg1[%c1_54] : memref<8xi32, #tpu.memory_space<smem>>
    %140 = arith.index_cast %138 : i32 to index
    %c0_55 = arith.constant 0 : index
    %141 = vector.load %arg12[%140, %c0_55] : memref<16x32xf32, #tpu.memory_space<vmem>>, vector<1x32xf32>
    %142 = arith.index_cast %139 : i32 to index
    %c0_56 = arith.constant 0 : index
    %143 = vector.load %arg13[%142, %c0_56] : memref<32x32xf32, #tpu.memory_space<vmem>>, vector<1x32xf32>
    %c4 = arith.constant 4 : index
    %144 = memref.load %arg2[%c4] : memref<32xi32, #tpu.memory_space<smem>>
    %145 = arith.index_cast %144 : i32 to index
    %c0_57 = arith.constant 0 : index
    %146 = vector.load %arg12[%145, %c0_57] : memref<16x32xf32, #tpu.memory_space<vmem>>, vector<1x32xf32>
    %c5 = arith.constant 5 : index
    %147 = memref.load %arg2[%c5] : memref<32xi32, #tpu.memory_space<smem>>
    %148 = arith.index_cast %147 : i32 to index
    %c0_58 = arith.constant 0 : index
    %149 = vector.load %arg12[%148, %c0_58] : memref<16x32xf32, #tpu.memory_space<vmem>>, vector<1x32xf32>
    %c6 = arith.constant 6 : index
    %150 = memref.load %arg2[%c6] : memref<32xi32, #tpu.memory_space<smem>>
    %151 = arith.index_cast %150 : i32 to index
    %c0_59 = arith.constant 0 : index
    %152 = vector.load %arg12[%151, %c0_59] : memref<16x32xf32, #tpu.memory_space<vmem>>, vector<1x32xf32>
    %c7 = arith.constant 7 : index
    %153 = memref.load %arg2[%c7] : memref<32xi32, #tpu.memory_space<smem>>
    %154 = arith.index_cast %153 : i32 to index
    %c0_60 = arith.constant 0 : index
    %155 = vector.load %arg12[%154, %c0_60] : memref<16x32xf32, #tpu.memory_space<vmem>>, vector<1x32xf32>
    %c4_61 = arith.constant 4 : index
    %156 = memref.load %arg3[%c4_61] : memref<32xi32, #tpu.memory_space<smem>>
    %157 = arith.index_cast %156 : i32 to index
    %c0_62 = arith.constant 0 : index
    %158 = vector.load %arg13[%157, %c0_62] : memref<32x32xf32, #tpu.memory_space<vmem>>, vector<1x32xf32>
    %c5_63 = arith.constant 5 : index
    %159 = memref.load %arg3[%c5_63] : memref<32xi32, #tpu.memory_space<smem>>
    %160 = arith.index_cast %159 : i32 to index
    %c0_64 = arith.constant 0 : index
    %161 = vector.load %arg13[%160, %c0_64] : memref<32x32xf32, #tpu.memory_space<vmem>>, vector<1x32xf32>
    %c6_65 = arith.constant 6 : index
    %162 = memref.load %arg3[%c6_65] : memref<32xi32, #tpu.memory_space<smem>>
    %163 = arith.index_cast %162 : i32 to index
    %c0_66 = arith.constant 0 : index
    %164 = vector.load %arg13[%163, %c0_66] : memref<32x32xf32, #tpu.memory_space<vmem>>, vector<1x32xf32>
    %c7_67 = arith.constant 7 : index
    %165 = memref.load %arg3[%c7_67] : memref<32xi32, #tpu.memory_space<smem>>
    %166 = arith.index_cast %165 : i32 to index
    %c0_68 = arith.constant 0 : index
    %167 = vector.load %arg13[%166, %c0_68] : memref<32x32xf32, #tpu.memory_space<vmem>>, vector<1x32xf32>
    %168 = tpu.concatenate %146, %149, %152, %155 in 0 : vector<1x32xf32>, vector<1x32xf32>, vector<1x32xf32>, vector<1x32xf32> -> vector<4x32xf32>
    %169 = tpu.concatenate %143, %158, %161, %164, %167 in 0 : vector<1x32xf32>, vector<1x32xf32>, vector<1x32xf32>, vector<1x32xf32>, vector<1x32xf32> -> vector<5x32xf32>
    %cst_69 = arith.constant dense<0.000000e+00> : vector<1x5xf32>
    %170 = tpu.matmul %141, %169, %cst_69 {dimension_numbers = #tpu.dot_dimension_numbers<[1], [1], [0], [0], [0, 0, 1, 0], [], []>} : vector<1x32xf32>, vector<5x32xf32>, vector<1x5xf32> -> vector<1x5xf32>
    %cst_70 = arith.constant 0.000000e+00 : f32
    %171 = vector.broadcast %cst_70 : f32 to vector<1x5xf32>
    %172 = arith.maximumf %170, %171 : vector<1x5xf32>
    %173 = math.absf %170 : vector<1x5xf32>
    %cst_71 = arith.constant 0.000000e+00 : f32
    %174 = vector.broadcast %cst_71 : f32 to vector<1x5xf32>
    %175 = arith.subf %174, %173 : vector<1x5xf32>
    %176 = math.exp %175 : vector<1x5xf32>
    %177 = math.log1p %176 : vector<1x5xf32>
    %178 = arith.addf %172, %177 : vector<1x5xf32>
    %cst_72 = arith.constant dense<0.000000e+00> : vector<1x4xf32>
    %179 = tpu.matmul %143, %168, %cst_72 {dimension_numbers = #tpu.dot_dimension_numbers<[1], [1], [0], [0], [0, 0, 1, 0], [], []>} : vector<1x32xf32>, vector<4x32xf32>, vector<1x4xf32> -> vector<1x4xf32>
    %cst_73 = arith.constant 0.000000e+00 : f32
    %180 = vector.broadcast %cst_73 : f32 to vector<1x4xf32>
    %181 = arith.maximumf %179, %180 : vector<1x4xf32>
    %182 = math.absf %179 : vector<1x4xf32>
    %cst_74 = arith.constant 0.000000e+00 : f32
    %183 = vector.broadcast %cst_74 : f32 to vector<1x4xf32>
    %184 = arith.subf %183, %182 : vector<1x4xf32>
    %185 = math.exp %184 : vector<1x4xf32>
    %186 = math.log1p %185 : vector<1x4xf32>
    %187 = arith.addf %181, %186 : vector<1x4xf32>
    %188 = vector.extract_strided_slice %178 {offsets = [0, 0], sizes = [1, 1], strides = [1, 1]} : vector<1x5xf32> to vector<1x1xf32>
    %cst_75 = arith.constant 9.99999968E-21 : f32
    %189 = vector.broadcast %cst_75 : f32 to vector<1x1xf32>
    %190 = arith.maximumf %188, %189 : vector<1x1xf32>
    %191 = vector.extract_strided_slice %178 {offsets = [0, 1], sizes = [1, 4], strides = [1, 1]} : vector<1x5xf32> to vector<1x4xf32>
    %c1_76 = arith.constant 1 : index
    %192 = memref.load %arg4[%c1_76] : memref<8xf32, #tpu.memory_space<smem>>
    %cst_77 = arith.constant 2.000000e+00 : f32
    %193 = vector.broadcast %cst_77 : f32 to vector<1x1xf32>
    %194 = arith.mulf %193, %190 : vector<1x1xf32>
    %cst_78 = arith.constant 3.14159274 : f32
    %195 = vector.broadcast %cst_78 : f32 to vector<1x1xf32>
    %196 = arith.divf %195, %194 : vector<1x1xf32>
    %197 = math.sqrt %196 : vector<1x1xf32>
    %198 = vector.broadcast %192 : f32 to vector<1x1xf32>
    %199 = arith.subf %197, %198 : vector<1x1xf32>
    %200 = math.absf %199 : vector<1x1xf32>
    %201 = arith.addf %70, %200 : vector<1x1xf32>
    %202 = arith.mulf %199, %199 : vector<1x1xf32>
    %203 = arith.addf %72, %202 : vector<1x1xf32>
    %c1_79 = arith.constant 1 : index
    %c0_80 = arith.constant 0 : index
    %204 = vector.load %arg5[%c1_79, %c0_80] : memref<8x4xf32, #tpu.memory_space<vmem>>, vector<1x4xf32>
    %205 = arith.mulf %187, %204 : vector<1x4xf32>
    %c1_81 = arith.constant 1 : index
    %c0_82 = arith.constant 0 : index
    %206 = vector.load %arg6[%c1_81, %c0_82] : memref<8x4xf32, #tpu.memory_space<vmem>>, vector<1x4xf32>
    %207 = arith.mulf %191, %206 : vector<1x4xf32>
    %208 = arith.addf %205, %207 : vector<1x4xf32>
    %cst_83 = arith.constant dense<0.000000e+00> : vector<1xf32>
    %209 = vector.multi_reduction <add>, %208, %cst_83 [1] : vector<1x4xf32> to vector<1xf32>
    %210 = vector.shape_cast %209 : vector<1xf32> to vector<1x1xf32>
    %211 = math.log %190 : vector<1x1xf32>
    %cst_84 = arith.constant 0.000000e+00 : f32
    %212 = vector.broadcast %cst_84 : f32 to vector<1x1xf32>
    %213 = arith.subf %212, %211 : vector<1x1xf32>
    %214 = arith.addf %213, %210 : vector<1x1xf32>
    %215 = arith.addf %84, %214 : vector<1x1xf32>
    %216 = tpu.concatenate %143, %141, %141, %143 in 1 : vector<1x32xf32>, vector<1x32xf32>, vector<1x32xf32>, vector<1x32xf32> -> vector<1x128xf32>
    %c0_85 = arith.constant 0 : index
    %c0_86 = arith.constant 0 : index
    %217 = vector.load %arg9[%c0_85, %c0_86] : memref<128x384xf32, #tpu.memory_space<vmem>>, vector<128x384xf32>
    %cst_87 = arith.constant dense<0.000000e+00> : vector<1x384xf32>
    %218 = tpu.matmul %216, %217, %cst_87 {dimension_numbers = #tpu.dot_dimension_numbers<[1], [0], [0], [1], [0, 0, 1, 1], [], []>} : vector<1x128xf32>, vector<128x384xf32>, vector<1x384xf32> -> vector<1x384xf32>
    %c0_88 = arith.constant 0 : index
    %c0_89 = arith.constant 0 : index
    %219 = vector.load %arg10[%c0_88, %c0_89] : memref<1x384xf32, #tpu.memory_space<vmem>>, vector<1x384xf32>
    %220 = arith.addf %218, %219 : vector<1x384xf32>
    %221 = vector.extract_strided_slice %220 {offsets = [0, 0], sizes = [1, 96], strides = [1, 1]} : vector<1x384xf32> to vector<1x96xf32>
    %222 = vector.extract_strided_slice %220 {offsets = [0, 96], sizes = [1, 96], strides = [1, 1]} : vector<1x384xf32> to vector<1x96xf32>
    %223 = vector.extract_strided_slice %221 {offsets = [0, 0], sizes = [1, 64], strides = [1, 1]} : vector<1x96xf32> to vector<1x64xf32>
    %224 = vector.extract_strided_slice %222 {offsets = [0, 0], sizes = [1, 64], strides = [1, 1]} : vector<1x96xf32> to vector<1x64xf32>
    %225 = arith.addf %223, %224 : vector<1x64xf32>
    %226 = arith.negf %225 : vector<1x64xf32>
    %227 = math.exp %226 : vector<1x64xf32>
    %cst_90 = arith.constant 1.000000e+00 : f32
    %228 = vector.broadcast %cst_90 : f32 to vector<1x64xf32>
    %229 = arith.addf %228, %227 : vector<1x64xf32>
    %230 = arith.divf %228, %229 : vector<1x64xf32>
    %231 = vector.extract_strided_slice %230 {offsets = [0, 0], sizes = [1, 32], strides = [1, 1]} : vector<1x64xf32> to vector<1x32xf32>
    %232 = vector.extract_strided_slice %230 {offsets = [0, 32], sizes = [1, 32], strides = [1, 1]} : vector<1x64xf32> to vector<1x32xf32>
    %233 = vector.extract_strided_slice %221 {offsets = [0, 64], sizes = [1, 32], strides = [1, 1]} : vector<1x96xf32> to vector<1x32xf32>
    %234 = vector.extract_strided_slice %222 {offsets = [0, 64], sizes = [1, 32], strides = [1, 1]} : vector<1x96xf32> to vector<1x32xf32>
    %235 = arith.mulf %231, %234 : vector<1x32xf32>
    %236 = arith.addf %233, %235 : vector<1x32xf32>
    %237 = math.tanh %236 : vector<1x32xf32>
    %cst_91 = arith.constant 1.000000e+00 : f32
    %238 = vector.broadcast %cst_91 : f32 to vector<1x32xf32>
    %239 = arith.subf %238, %232 : vector<1x32xf32>
    %240 = arith.mulf %239, %237 : vector<1x32xf32>
    %241 = arith.mulf %232, %141 : vector<1x32xf32>
    %242 = arith.addf %240, %241 : vector<1x32xf32>
    %243 = vector.extract_strided_slice %220 {offsets = [0, 192], sizes = [1, 96], strides = [1, 1]} : vector<1x384xf32> to vector<1x96xf32>
    %244 = vector.extract_strided_slice %220 {offsets = [0, 288], sizes = [1, 96], strides = [1, 1]} : vector<1x384xf32> to vector<1x96xf32>
    %245 = vector.extract_strided_slice %243 {offsets = [0, 0], sizes = [1, 64], strides = [1, 1]} : vector<1x96xf32> to vector<1x64xf32>
    %246 = vector.extract_strided_slice %244 {offsets = [0, 0], sizes = [1, 64], strides = [1, 1]} : vector<1x96xf32> to vector<1x64xf32>
    %247 = arith.addf %245, %246 : vector<1x64xf32>
    %248 = arith.negf %247 : vector<1x64xf32>
    %249 = math.exp %248 : vector<1x64xf32>
    %cst_92 = arith.constant 1.000000e+00 : f32
    %250 = vector.broadcast %cst_92 : f32 to vector<1x64xf32>
    %251 = arith.addf %250, %249 : vector<1x64xf32>
    %252 = arith.divf %250, %251 : vector<1x64xf32>
    %253 = vector.extract_strided_slice %252 {offsets = [0, 0], sizes = [1, 32], strides = [1, 1]} : vector<1x64xf32> to vector<1x32xf32>
    %254 = vector.extract_strided_slice %252 {offsets = [0, 32], sizes = [1, 32], strides = [1, 1]} : vector<1x64xf32> to vector<1x32xf32>
    %255 = vector.extract_strided_slice %243 {offsets = [0, 64], sizes = [1, 32], strides = [1, 1]} : vector<1x96xf32> to vector<1x32xf32>
    %256 = vector.extract_strided_slice %244 {offsets = [0, 64], sizes = [1, 32], strides = [1, 1]} : vector<1x96xf32> to vector<1x32xf32>
    %257 = arith.mulf %253, %256 : vector<1x32xf32>
    %258 = arith.addf %255, %257 : vector<1x32xf32>
    %259 = math.tanh %258 : vector<1x32xf32>
    %cst_93 = arith.constant 1.000000e+00 : f32
    %260 = vector.broadcast %cst_93 : f32 to vector<1x32xf32>
    %261 = arith.subf %260, %254 : vector<1x32xf32>
    %262 = arith.mulf %261, %259 : vector<1x32xf32>
    %263 = arith.mulf %254, %143 : vector<1x32xf32>
    %264 = arith.addf %262, %263 : vector<1x32xf32>
    %265 = arith.index_cast %138 : i32 to index
    %c0_94 = arith.constant 0 : index
    %266 = vector.load %arg12[%265, %c0_94] : memref<16x32xf32, #tpu.memory_space<vmem>>, vector<1x32xf32>
    tpu.vector_store %arg12[%265, %c0_94], %242 {strides = array<i32>} : memref<16x32xf32, #tpu.memory_space<vmem>>, vector<1x32xf32>,
    %267 = arith.index_cast %139 : i32 to index
    %c0_95 = arith.constant 0 : index
    %268 = vector.load %arg13[%267, %c0_95] : memref<32x32xf32, #tpu.memory_space<vmem>>, vector<1x32xf32>
    tpu.vector_store %arg13[%267, %c0_95], %264 {strides = array<i32>} : memref<32x32xf32, #tpu.memory_space<vmem>>, vector<1x32xf32>,
    %c2_96 = arith.constant 2 : index
    %269 = memref.load %arg0[%c2_96] : memref<8xi32, #tpu.memory_space<smem>>
    %c2_97 = arith.constant 2 : index
    %270 = memref.load %arg1[%c2_97] : memref<8xi32, #tpu.memory_space<smem>>
    %271 = arith.index_cast %269 : i32 to index
    %c0_98 = arith.constant 0 : index
    %272 = vector.load %arg12[%271, %c0_98] : memref<16x32xf32, #tpu.memory_space<vmem>>, vector<1x32xf32>
    %273 = arith.index_cast %270 : i32 to index
    %c0_99 = arith.constant 0 : index
    %274 = vector.load %arg13[%273, %c0_99] : memref<32x32xf32, #tpu.memory_space<vmem>>, vector<1x32xf32>
    %c8 = arith.constant 8 : index
    %275 = memref.load %arg2[%c8] : memref<32xi32, #tpu.memory_space<smem>>
    %276 = arith.index_cast %275 : i32 to index
    %c0_100 = arith.constant 0 : index
    %277 = vector.load %arg12[%276, %c0_100] : memref<16x32xf32, #tpu.memory_space<vmem>>, vector<1x32xf32>
    %c9 = arith.constant 9 : index
    %278 = memref.load %arg2[%c9] : memref<32xi32, #tpu.memory_space<smem>>
    %279 = arith.index_cast %278 : i32 to index
    %c0_101 = arith.constant 0 : index
    %280 = vector.load %arg12[%279, %c0_101] : memref<16x32xf32, #tpu.memory_space<vmem>>, vector<1x32xf32>
    %c10 = arith.constant 10 : index
    %281 = memref.load %arg2[%c10] : memref<32xi32, #tpu.memory_space<smem>>
    %282 = arith.index_cast %281 : i32 to index
    %c0_102 = arith.constant 0 : index
    %283 = vector.load %arg12[%282, %c0_102] : memref<16x32xf32, #tpu.memory_space<vmem>>, vector<1x32xf32>
    %c11 = arith.constant 11 : index
    %284 = memref.load %arg2[%c11] : memref<32xi32, #tpu.memory_space<smem>>
    %285 = arith.index_cast %284 : i32 to index
    %c0_103 = arith.constant 0 : index
    %286 = vector.load %arg12[%285, %c0_103] : memref<16x32xf32, #tpu.memory_space<vmem>>, vector<1x32xf32>
    %c8_104 = arith.constant 8 : index
    %287 = memref.load %arg3[%c8_104] : memref<32xi32, #tpu.memory_space<smem>>
    %288 = arith.index_cast %287 : i32 to index
    %c0_105 = arith.constant 0 : index
    %289 = vector.load %arg13[%288, %c0_105] : memref<32x32xf32, #tpu.memory_space<vmem>>, vector<1x32xf32>
    %c9_106 = arith.constant 9 : index
    %290 = memref.load %arg3[%c9_106] : memref<32xi32, #tpu.memory_space<smem>>
    %291 = arith.index_cast %290 : i32 to index
    %c0_107 = arith.constant 0 : index
    %292 = vector.load %arg13[%291, %c0_107] : memref<32x32xf32, #tpu.memory_space<vmem>>, vector<1x32xf32>
    %c10_108 = arith.constant 10 : index
    %293 = memref.load %arg3[%c10_108] : memref<32xi32, #tpu.memory_space<smem>>
    %294 = arith.index_cast %293 : i32 to index
    %c0_109 = arith.constant 0 : index
    %295 = vector.load %arg13[%294, %c0_109] : memref<32x32xf32, #tpu.memory_space<vmem>>, vector<1x32xf32>
    %c11_110 = arith.constant 11 : index
    %296 = memref.load %arg3[%c11_110] : memref<32xi32, #tpu.memory_space<smem>>
    %297 = arith.index_cast %296 : i32 to index
    %c0_111 = arith.constant 0 : index
    %298 = vector.load %arg13[%297, %c0_111] : memref<32x32xf32, #tpu.memory_space<vmem>>, vector<1x32xf32>
    %299 = tpu.concatenate %277, %280, %283, %286 in 0 : vector<1x32xf32>, vector<1x32xf32>, vector<1x32xf32>, vector<1x32xf32> -> vector<4x32xf32>
    %300 = tpu.concatenate %274, %289, %292, %295, %298 in 0 : vector<1x32xf32>, vector<1x32xf32>, vector<1x32xf32>, vector<1x32xf32>, vector<1x32xf32> -> vector<5x32xf32>
    %cst_112 = arith.constant dense<0.000000e+00> : vector<1x5xf32>
    %301 = tpu.matmul %272, %300, %cst_112 {dimension_numbers = #tpu.dot_dimension_numbers<[1], [1], [0], [0], [0, 0, 1, 0], [], []>} : vector<1x32xf32>, vector<5x32xf32>, vector<1x5xf32> -> vector<1x5xf32>
    %cst_113 = arith.constant 0.000000e+00 : f32
    %302 = vector.broadcast %cst_113 : f32 to vector<1x5xf32>
    %303 = arith.maximumf %301, %302 : vector<1x5xf32>
    %304 = math.absf %301 : vector<1x5xf32>
    %cst_114 = arith.constant 0.000000e+00 : f32
    %305 = vector.broadcast %cst_114 : f32 to vector<1x5xf32>
    %306 = arith.subf %305, %304 : vector<1x5xf32>
    %307 = math.exp %306 : vector<1x5xf32>
    %308 = math.log1p %307 : vector<1x5xf32>
    %309 = arith.addf %303, %308 : vector<1x5xf32>
    %cst_115 = arith.constant dense<0.000000e+00> : vector<1x4xf32>
    %310 = tpu.matmul %274, %299, %cst_115 {dimension_numbers = #tpu.dot_dimension_numbers<[1], [1], [0], [0], [0, 0, 1, 0], [], []>} : vector<1x32xf32>, vector<4x32xf32>, vector<1x4xf32> -> vector<1x4xf32>
    %cst_116 = arith.constant 0.000000e+00 : f32
    %311 = vector.broadcast %cst_116 : f32 to vector<1x4xf32>
    %312 = arith.maximumf %310, %311 : vector<1x4xf32>
    %313 = math.absf %310 : vector<1x4xf32>
    %cst_117 = arith.constant 0.000000e+00 : f32
    %314 = vector.broadcast %cst_117 : f32 to vector<1x4xf32>
    %315 = arith.subf %314, %313 : vector<1x4xf32>
    %316 = math.exp %315 : vector<1x4xf32>
    %317 = math.log1p %316 : vector<1x4xf32>
    %318 = arith.addf %312, %317 : vector<1x4xf32>
    %319 = vector.extract_strided_slice %309 {offsets = [0, 0], sizes = [1, 1], strides = [1, 1]} : vector<1x5xf32> to vector<1x1xf32>
    %cst_118 = arith.constant 9.99999968E-21 : f32
    %320 = vector.broadcast %cst_118 : f32 to vector<1x1xf32>
    %321 = arith.maximumf %319, %320 : vector<1x1xf32>
    %322 = vector.extract_strided_slice %309 {offsets = [0, 1], sizes = [1, 4], strides = [1, 1]} : vector<1x5xf32> to vector<1x4xf32>
    %c2_119 = arith.constant 2 : index
    %323 = memref.load %arg4[%c2_119] : memref<8xf32, #tpu.memory_space<smem>>
    %cst_120 = arith.constant 2.000000e+00 : f32
    %324 = vector.broadcast %cst_120 : f32 to vector<1x1xf32>
    %325 = arith.mulf %324, %321 : vector<1x1xf32>
    %cst_121 = arith.constant 3.14159274 : f32
    %326 = vector.broadcast %cst_121 : f32 to vector<1x1xf32>
    %327 = arith.divf %326, %325 : vector<1x1xf32>
    %328 = math.sqrt %327 : vector<1x1xf32>
    %329 = vector.broadcast %323 : f32 to vector<1x1xf32>
    %330 = arith.subf %328, %329 : vector<1x1xf32>
    %331 = math.absf %330 : vector<1x1xf32>
    %332 = arith.addf %201, %331 : vector<1x1xf32>
    %333 = arith.mulf %330, %330 : vector<1x1xf32>
    %334 = arith.addf %203, %333 : vector<1x1xf32>
    %c2_122 = arith.constant 2 : index
    %c0_123 = arith.constant 0 : index
    %335 = vector.load %arg5[%c2_122, %c0_123] : memref<8x4xf32, #tpu.memory_space<vmem>>, vector<1x4xf32>
    %336 = arith.mulf %318, %335 : vector<1x4xf32>
    %c2_124 = arith.constant 2 : index
    %c0_125 = arith.constant 0 : index
    %337 = vector.load %arg6[%c2_124, %c0_125] : memref<8x4xf32, #tpu.memory_space<vmem>>, vector<1x4xf32>
    %338 = arith.mulf %322, %337 : vector<1x4xf32>
    %339 = arith.addf %336, %338 : vector<1x4xf32>
    %cst_126 = arith.constant dense<0.000000e+00> : vector<1xf32>
    %340 = vector.multi_reduction <add>, %339, %cst_126 [1] : vector<1x4xf32> to vector<1xf32>
    %341 = vector.shape_cast %340 : vector<1xf32> to vector<1x1xf32>
    %342 = math.log %321 : vector<1x1xf32>
    %cst_127 = arith.constant 0.000000e+00 : f32
    %343 = vector.broadcast %cst_127 : f32 to vector<1x1xf32>
    %344 = arith.subf %343, %342 : vector<1x1xf32>
    %345 = arith.addf %344, %341 : vector<1x1xf32>
    %346 = arith.addf %215, %345 : vector<1x1xf32>
    %347 = tpu.concatenate %274, %272, %272, %274 in 1 : vector<1x32xf32>, vector<1x32xf32>, vector<1x32xf32>, vector<1x32xf32> -> vector<1x128xf32>
    %c0_128 = arith.constant 0 : index
    %c0_129 = arith.constant 0 : index
    %348 = vector.load %arg9[%c0_128, %c0_129] : memref<128x384xf32, #tpu.memory_space<vmem>>, vector<128x384xf32>
    %cst_130 = arith.constant dense<0.000000e+00> : vector<1x384xf32>
    %349 = tpu.matmul %347, %348, %cst_130 {dimension_numbers = #tpu.dot_dimension_numbers<[1], [0], [0], [1], [0, 0, 1, 1], [], []>} : vector<1x128xf32>, vector<128x384xf32>, vector<1x384xf32> -> vector<1x384xf32>
    %c0_131 = arith.constant 0 : index
    %c0_132 = arith.constant 0 : index
    %350 = vector.load %arg10[%c0_131, %c0_132] : memref<1x384xf32, #tpu.memory_space<vmem>>, vector<1x384xf32>
    %351 = arith.addf %349, %350 : vector<1x384xf32>
    %352 = vector.extract_strided_slice %351 {offsets = [0, 0], sizes = [1, 96], strides = [1, 1]} : vector<1x384xf32> to vector<1x96xf32>
    %353 = vector.extract_strided_slice %351 {offsets = [0, 96], sizes = [1, 96], strides = [1, 1]} : vector<1x384xf32> to vector<1x96xf32>
    %354 = vector.extract_strided_slice %352 {offsets = [0, 0], sizes = [1, 64], strides = [1, 1]} : vector<1x96xf32> to vector<1x64xf32>
    %355 = vector.extract_strided_slice %353 {offsets = [0, 0], sizes = [1, 64], strides = [1, 1]} : vector<1x96xf32> to vector<1x64xf32>
    %356 = arith.addf %354, %355 : vector<1x64xf32>
    %357 = arith.negf %356 : vector<1x64xf32>
    %358 = math.exp %357 : vector<1x64xf32>
    %cst_133 = arith.constant 1.000000e+00 : f32
    %359 = vector.broadcast %cst_133 : f32 to vector<1x64xf32>
    %360 = arith.addf %359, %358 : vector<1x64xf32>
    %361 = arith.divf %359, %360 : vector<1x64xf32>
    %362 = vector.extract_strided_slice %361 {offsets = [0, 0], sizes = [1, 32], strides = [1, 1]} : vector<1x64xf32> to vector<1x32xf32>
    %363 = vector.extract_strided_slice %361 {offsets = [0, 32], sizes = [1, 32], strides = [1, 1]} : vector<1x64xf32> to vector<1x32xf32>
    %364 = vector.extract_strided_slice %352 {offsets = [0, 64], sizes = [1, 32], strides = [1, 1]} : vector<1x96xf32> to vector<1x32xf32>
    %365 = vector.extract_strided_slice %353 {offsets = [0, 64], sizes = [1, 32], strides = [1, 1]} : vector<1x96xf32> to vector<1x32xf32>
    %366 = arith.mulf %362, %365 : vector<1x32xf32>
    %367 = arith.addf %364, %366 : vector<1x32xf32>
    %368 = math.tanh %367 : vector<1x32xf32>
    %cst_134 = arith.constant 1.000000e+00 : f32
    %369 = vector.broadcast %cst_134 : f32 to vector<1x32xf32>
    %370 = arith.subf %369, %363 : vector<1x32xf32>
    %371 = arith.mulf %370, %368 : vector<1x32xf32>
    %372 = arith.mulf %363, %272 : vector<1x32xf32>
    %373 = arith.addf %371, %372 : vector<1x32xf32>
    %374 = vector.extract_strided_slice %351 {offsets = [0, 192], sizes = [1, 96], strides = [1, 1]} : vector<1x384xf32> to vector<1x96xf32>
    %375 = vector.extract_strided_slice %351 {offsets = [0, 288], sizes = [1, 96], strides = [1, 1]} : vector<1x384xf32> to vector<1x96xf32>
    %376 = vector.extract_strided_slice %374 {offsets = [0, 0], sizes = [1, 64], strides = [1, 1]} : vector<1x96xf32> to vector<1x64xf32>
    %377 = vector.extract_strided_slice %375 {offsets = [0, 0], sizes = [1, 64], strides = [1, 1]} : vector<1x96xf32> to vector<1x64xf32>
    %378 = arith.addf %376, %377 : vector<1x64xf32>
    %379 = arith.negf %378 : vector<1x64xf32>
    %380 = math.exp %379 : vector<1x64xf32>
    %cst_135 = arith.constant 1.000000e+00 : f32
    %381 = vector.broadcast %cst_135 : f32 to vector<1x64xf32>
    %382 = arith.addf %381, %380 : vector<1x64xf32>
    %383 = arith.divf %381, %382 : vector<1x64xf32>
    %384 = vector.extract_strided_slice %383 {offsets = [0, 0], sizes = [1, 32], strides = [1, 1]} : vector<1x64xf32> to vector<1x32xf32>
    %385 = vector.extract_strided_slice %383 {offsets = [0, 32], sizes = [1, 32], strides = [1, 1]} : vector<1x64xf32> to vector<1x32xf32>
    %386 = vector.extract_strided_slice %374 {offsets = [0, 64], sizes = [1, 32], strides = [1, 1]} : vector<1x96xf32> to vector<1x32xf32>
    %387 = vector.extract_strided_slice %375 {offsets = [0, 64], sizes = [1, 32], strides = [1, 1]} : vector<1x96xf32> to vector<1x32xf32>
    %388 = arith.mulf %384, %387 : vector<1x32xf32>
    %389 = arith.addf %386, %388 : vector<1x32xf32>
    %390 = math.tanh %389 : vector<1x32xf32>
    %cst_136 = arith.constant 1.000000e+00 : f32
    %391 = vector.broadcast %cst_136 : f32 to vector<1x32xf32>
    %392 = arith.subf %391, %385 : vector<1x32xf32>
    %393 = arith.mulf %392, %390 : vector<1x32xf32>
    %394 = arith.mulf %385, %274 : vector<1x32xf32>
    %395 = arith.addf %393, %394 : vector<1x32xf32>
    %396 = arith.index_cast %269 : i32 to index
    %c0_137 = arith.constant 0 : index
    %397 = vector.load %arg12[%396, %c0_137] : memref<16x32xf32, #tpu.memory_space<vmem>>, vector<1x32xf32>
    tpu.vector_store %arg12[%396, %c0_137], %373 {strides = array<i32>} : memref<16x32xf32, #tpu.memory_space<vmem>>, vector<1x32xf32>,
    %398 = arith.index_cast %270 : i32 to index
    %c0_138 = arith.constant 0 : index
    %399 = vector.load %arg13[%398, %c0_138] : memref<32x32xf32, #tpu.memory_space<vmem>>, vector<1x32xf32>
    tpu.vector_store %arg13[%398, %c0_138], %395 {strides = array<i32>} : memref<32x32xf32, #tpu.memory_space<vmem>>, vector<1x32xf32>,
    %c3_139 = arith.constant 3 : index
    %400 = memref.load %arg0[%c3_139] : memref<8xi32, #tpu.memory_space<smem>>
    %c3_140 = arith.constant 3 : index
    %401 = memref.load %arg1[%c3_140] : memref<8xi32, #tpu.memory_space<smem>>
    %402 = arith.index_cast %400 : i32 to index
    %c0_141 = arith.constant 0 : index
    %403 = vector.load %arg12[%402, %c0_141] : memref<16x32xf32, #tpu.memory_space<vmem>>, vector<1x32xf32>
    %404 = arith.index_cast %401 : i32 to index
    %c0_142 = arith.constant 0 : index
    %405 = vector.load %arg13[%404, %c0_142] : memref<32x32xf32, #tpu.memory_space<vmem>>, vector<1x32xf32>
    %c12 = arith.constant 12 : index
    %406 = memref.load %arg2[%c12] : memref<32xi32, #tpu.memory_space<smem>>
    %407 = arith.index_cast %406 : i32 to index
    %c0_143 = arith.constant 0 : index
    %408 = vector.load %arg12[%407, %c0_143] : memref<16x32xf32, #tpu.memory_space<vmem>>, vector<1x32xf32>
    %c13 = arith.constant 13 : index
    %409 = memref.load %arg2[%c13] : memref<32xi32, #tpu.memory_space<smem>>
    %410 = arith.index_cast %409 : i32 to index
    %c0_144 = arith.constant 0 : index
    %411 = vector.load %arg12[%410, %c0_144] : memref<16x32xf32, #tpu.memory_space<vmem>>, vector<1x32xf32>
    %c14 = arith.constant 14 : index
    %412 = memref.load %arg2[%c14] : memref<32xi32, #tpu.memory_space<smem>>
    %413 = arith.index_cast %412 : i32 to index
    %c0_145 = arith.constant 0 : index
    %414 = vector.load %arg12[%413, %c0_145] : memref<16x32xf32, #tpu.memory_space<vmem>>, vector<1x32xf32>
    %c15 = arith.constant 15 : index
    %415 = memref.load %arg2[%c15] : memref<32xi32, #tpu.memory_space<smem>>
    %416 = arith.index_cast %415 : i32 to index
    %c0_146 = arith.constant 0 : index
    %417 = vector.load %arg12[%416, %c0_146] : memref<16x32xf32, #tpu.memory_space<vmem>>, vector<1x32xf32>
    %c12_147 = arith.constant 12 : index
    %418 = memref.load %arg3[%c12_147] : memref<32xi32, #tpu.memory_space<smem>>
    %419 = arith.index_cast %418 : i32 to index
    %c0_148 = arith.constant 0 : index
    %420 = vector.load %arg13[%419, %c0_148] : memref<32x32xf32, #tpu.memory_space<vmem>>, vector<1x32xf32>
    %c13_149 = arith.constant 13 : index
    %421 = memref.load %arg3[%c13_149] : memref<32xi32, #tpu.memory_space<smem>>
    %422 = arith.index_cast %421 : i32 to index
    %c0_150 = arith.constant 0 : index
    %423 = vector.load %arg13[%422, %c0_150] : memref<32x32xf32, #tpu.memory_space<vmem>>, vector<1x32xf32>
    %c14_151 = arith.constant 14 : index
    %424 = memref.load %arg3[%c14_151] : memref<32xi32, #tpu.memory_space<smem>>
    %425 = arith.index_cast %424 : i32 to index
    %c0_152 = arith.constant 0 : index
    %426 = vector.load %arg13[%425, %c0_152] : memref<32x32xf32, #tpu.memory_space<vmem>>, vector<1x32xf32>
    %c15_153 = arith.constant 15 : index
    %427 = memref.load %arg3[%c15_153] : memref<32xi32, #tpu.memory_space<smem>>
    %428 = arith.index_cast %427 : i32 to index
    %c0_154 = arith.constant 0 : index
    %429 = vector.load %arg13[%428, %c0_154] : memref<32x32xf32, #tpu.memory_space<vmem>>, vector<1x32xf32>
    %430 = tpu.concatenate %408, %411, %414, %417 in 0 : vector<1x32xf32>, vector<1x32xf32>, vector<1x32xf32>, vector<1x32xf32> -> vector<4x32xf32>
    %431 = tpu.concatenate %405, %420, %423, %426, %429 in 0 : vector<1x32xf32>, vector<1x32xf32>, vector<1x32xf32>, vector<1x32xf32>, vector<1x32xf32> -> vector<5x32xf32>
    %cst_155 = arith.constant dense<0.000000e+00> : vector<1x5xf32>
    %432 = tpu.matmul %403, %431, %cst_155 {dimension_numbers = #tpu.dot_dimension_numbers<[1], [1], [0], [0], [0, 0, 1, 0], [], []>} : vector<1x32xf32>, vector<5x32xf32>, vector<1x5xf32> -> vector<1x5xf32>
    %cst_156 = arith.constant 0.000000e+00 : f32
    %433 = vector.broadcast %cst_156 : f32 to vector<1x5xf32>
    %434 = arith.maximumf %432, %433 : vector<1x5xf32>
    %435 = math.absf %432 : vector<1x5xf32>
    %cst_157 = arith.constant 0.000000e+00 : f32
    %436 = vector.broadcast %cst_157 : f32 to vector<1x5xf32>
    %437 = arith.subf %436, %435 : vector<1x5xf32>
    %438 = math.exp %437 : vector<1x5xf32>
    %439 = math.log1p %438 : vector<1x5xf32>
    %440 = arith.addf %434, %439 : vector<1x5xf32>
    %cst_158 = arith.constant dense<0.000000e+00> : vector<1x4xf32>
    %441 = tpu.matmul %405, %430, %cst_158 {dimension_numbers = #tpu.dot_dimension_numbers<[1], [1], [0], [0], [0, 0, 1, 0], [], []>} : vector<1x32xf32>, vector<4x32xf32>, vector<1x4xf32> -> vector<1x4xf32>
    %cst_159 = arith.constant 0.000000e+00 : f32
    %442 = vector.broadcast %cst_159 : f32 to vector<1x4xf32>
    %443 = arith.maximumf %441, %442 : vector<1x4xf32>
    %444 = math.absf %441 : vector<1x4xf32>
    %cst_160 = arith.constant 0.000000e+00 : f32
    %445 = vector.broadcast %cst_160 : f32 to vector<1x4xf32>
    %446 = arith.subf %445, %444 : vector<1x4xf32>
    %447 = math.exp %446 : vector<1x4xf32>
    %448 = math.log1p %447 : vector<1x4xf32>
    %449 = arith.addf %443, %448 : vector<1x4xf32>
    %450 = vector.extract_strided_slice %440 {offsets = [0, 0], sizes = [1, 1], strides = [1, 1]} : vector<1x5xf32> to vector<1x1xf32>
    %cst_161 = arith.constant 9.99999968E-21 : f32
    %451 = vector.broadcast %cst_161 : f32 to vector<1x1xf32>
    %452 = arith.maximumf %450, %451 : vector<1x1xf32>
    %453 = vector.extract_strided_slice %440 {offsets = [0, 1], sizes = [1, 4], strides = [1, 1]} : vector<1x5xf32> to vector<1x4xf32>
    %c3_162 = arith.constant 3 : index
    %454 = memref.load %arg4[%c3_162] : memref<8xf32, #tpu.memory_space<smem>>
    %cst_163 = arith.constant 2.000000e+00 : f32
    %455 = vector.broadcast %cst_163 : f32 to vector<1x1xf32>
    %456 = arith.mulf %455, %452 : vector<1x1xf32>
    %cst_164 = arith.constant 3.14159274 : f32
    %457 = vector.broadcast %cst_164 : f32 to vector<1x1xf32>
    %458 = arith.divf %457, %456 : vector<1x1xf32>
    %459 = math.sqrt %458 : vector<1x1xf32>
    %460 = vector.broadcast %454 : f32 to vector<1x1xf32>
    %461 = arith.subf %459, %460 : vector<1x1xf32>
    %462 = math.absf %461 : vector<1x1xf32>
    %463 = arith.addf %332, %462 : vector<1x1xf32>
    %464 = arith.mulf %461, %461 : vector<1x1xf32>
    %465 = arith.addf %334, %464 : vector<1x1xf32>
    %c3_165 = arith.constant 3 : index
    %c0_166 = arith.constant 0 : index
    %466 = vector.load %arg5[%c3_165, %c0_166] : memref<8x4xf32, #tpu.memory_space<vmem>>, vector<1x4xf32>
    %467 = arith.mulf %449, %466 : vector<1x4xf32>
    %c3_167 = arith.constant 3 : index
    %c0_168 = arith.constant 0 : index
    %468 = vector.load %arg6[%c3_167, %c0_168] : memref<8x4xf32, #tpu.memory_space<vmem>>, vector<1x4xf32>
    %469 = arith.mulf %453, %468 : vector<1x4xf32>
    %470 = arith.addf %467, %469 : vector<1x4xf32>
    %cst_169 = arith.constant dense<0.000000e+00> : vector<1xf32>
    %471 = vector.multi_reduction <add>, %470, %cst_169 [1] : vector<1x4xf32> to vector<1xf32>
    %472 = vector.shape_cast %471 : vector<1xf32> to vector<1x1xf32>
    %473 = math.log %452 : vector<1x1xf32>
    %cst_170 = arith.constant 0.000000e+00 : f32
    %474 = vector.broadcast %cst_170 : f32 to vector<1x1xf32>
    %475 = arith.subf %474, %473 : vector<1x1xf32>
    %476 = arith.addf %475, %472 : vector<1x1xf32>
    %477 = arith.addf %346, %476 : vector<1x1xf32>
    %478 = tpu.concatenate %405, %403, %403, %405 in 1 : vector<1x32xf32>, vector<1x32xf32>, vector<1x32xf32>, vector<1x32xf32> -> vector<1x128xf32>
    %c0_171 = arith.constant 0 : index
    %c0_172 = arith.constant 0 : index
    %479 = vector.load %arg9[%c0_171, %c0_172] : memref<128x384xf32, #tpu.memory_space<vmem>>, vector<128x384xf32>
    %cst_173 = arith.constant dense<0.000000e+00> : vector<1x384xf32>
    %480 = tpu.matmul %478, %479, %cst_173 {dimension_numbers = #tpu.dot_dimension_numbers<[1], [0], [0], [1], [0, 0, 1, 1], [], []>} : vector<1x128xf32>, vector<128x384xf32>, vector<1x384xf32> -> vector<1x384xf32>
    %c0_174 = arith.constant 0 : index
    %c0_175 = arith.constant 0 : index
    %481 = vector.load %arg10[%c0_174, %c0_175] : memref<1x384xf32, #tpu.memory_space<vmem>>, vector<1x384xf32>
    %482 = arith.addf %480, %481 : vector<1x384xf32>
    %483 = vector.extract_strided_slice %482 {offsets = [0, 0], sizes = [1, 96], strides = [1, 1]} : vector<1x384xf32> to vector<1x96xf32>
    %484 = vector.extract_strided_slice %482 {offsets = [0, 96], sizes = [1, 96], strides = [1, 1]} : vector<1x384xf32> to vector<1x96xf32>
    %485 = vector.extract_strided_slice %483 {offsets = [0, 0], sizes = [1, 64], strides = [1, 1]} : vector<1x96xf32> to vector<1x64xf32>
    %486 = vector.extract_strided_slice %484 {offsets = [0, 0], sizes = [1, 64], strides = [1, 1]} : vector<1x96xf32> to vector<1x64xf32>
    %487 = arith.addf %485, %486 : vector<1x64xf32>
    %488 = arith.negf %487 : vector<1x64xf32>
    %489 = math.exp %488 : vector<1x64xf32>
    %cst_176 = arith.constant 1.000000e+00 : f32
    %490 = vector.broadcast %cst_176 : f32 to vector<1x64xf32>
    %491 = arith.addf %490, %489 : vector<1x64xf32>
    %492 = arith.divf %490, %491 : vector<1x64xf32>
    %493 = vector.extract_strided_slice %492 {offsets = [0, 0], sizes = [1, 32], strides = [1, 1]} : vector<1x64xf32> to vector<1x32xf32>
    %494 = vector.extract_strided_slice %492 {offsets = [0, 32], sizes = [1, 32], strides = [1, 1]} : vector<1x64xf32> to vector<1x32xf32>
    %495 = vector.extract_strided_slice %483 {offsets = [0, 64], sizes = [1, 32], strides = [1, 1]} : vector<1x96xf32> to vector<1x32xf32>
    %496 = vector.extract_strided_slice %484 {offsets = [0, 64], sizes = [1, 32], strides = [1, 1]} : vector<1x96xf32> to vector<1x32xf32>
    %497 = arith.mulf %493, %496 : vector<1x32xf32>
    %498 = arith.addf %495, %497 : vector<1x32xf32>
    %499 = math.tanh %498 : vector<1x32xf32>
    %cst_177 = arith.constant 1.000000e+00 : f32
    %500 = vector.broadcast %cst_177 : f32 to vector<1x32xf32>
    %501 = arith.subf %500, %494 : vector<1x32xf32>
    %502 = arith.mulf %501, %499 : vector<1x32xf32>
    %503 = arith.mulf %494, %403 : vector<1x32xf32>
    %504 = arith.addf %502, %503 : vector<1x32xf32>
    %505 = vector.extract_strided_slice %482 {offsets = [0, 192], sizes = [1, 96], strides = [1, 1]} : vector<1x384xf32> to vector<1x96xf32>
    %506 = vector.extract_strided_slice %482 {offsets = [0, 288], sizes = [1, 96], strides = [1, 1]} : vector<1x384xf32> to vector<1x96xf32>
    %507 = vector.extract_strided_slice %505 {offsets = [0, 0], sizes = [1, 64], strides = [1, 1]} : vector<1x96xf32> to vector<1x64xf32>
    %508 = vector.extract_strided_slice %506 {offsets = [0, 0], sizes = [1, 64], strides = [1, 1]} : vector<1x96xf32> to vector<1x64xf32>
    %509 = arith.addf %507, %508 : vector<1x64xf32>
    %510 = arith.negf %509 : vector<1x64xf32>
    %511 = math.exp %510 : vector<1x64xf32>
    %cst_178 = arith.constant 1.000000e+00 : f32
    %512 = vector.broadcast %cst_178 : f32 to vector<1x64xf32>
    %513 = arith.addf %512, %511 : vector<1x64xf32>
    %514 = arith.divf %512, %513 : vector<1x64xf32>
    %515 = vector.extract_strided_slice %514 {offsets = [0, 0], sizes = [1, 32], strides = [1, 1]} : vector<1x64xf32> to vector<1x32xf32>
    %516 = vector.extract_strided_slice %514 {offsets = [0, 32], sizes = [1, 32], strides = [1, 1]} : vector<1x64xf32> to vector<1x32xf32>
    %517 = vector.extract_strided_slice %505 {offsets = [0, 64], sizes = [1, 32], strides = [1, 1]} : vector<1x96xf32> to vector<1x32xf32>
    %518 = vector.extract_strided_slice %506 {offsets = [0, 64], sizes = [1, 32], strides = [1, 1]} : vector<1x96xf32> to vector<1x32xf32>
    %519 = arith.mulf %515, %518 : vector<1x32xf32>
    %520 = arith.addf %517, %519 : vector<1x32xf32>
    %521 = math.tanh %520 : vector<1x32xf32>
    %cst_179 = arith.constant 1.000000e+00 : f32
    %522 = vector.broadcast %cst_179 : f32 to vector<1x32xf32>
    %523 = arith.subf %522, %516 : vector<1x32xf32>
    %524 = arith.mulf %523, %521 : vector<1x32xf32>
    %525 = arith.mulf %516, %405 : vector<1x32xf32>
    %526 = arith.addf %524, %525 : vector<1x32xf32>
    %527 = arith.index_cast %400 : i32 to index
    %c0_180 = arith.constant 0 : index
    %528 = vector.load %arg12[%527, %c0_180] : memref<16x32xf32, #tpu.memory_space<vmem>>, vector<1x32xf32>
    tpu.vector_store %arg12[%527, %c0_180], %504 {strides = array<i32>} : memref<16x32xf32, #tpu.memory_space<vmem>>, vector<1x32xf32>,
    %529 = arith.index_cast %401 : i32 to index
    %c0_181 = arith.constant 0 : index
    %530 = vector.load %arg13[%529, %c0_181] : memref<32x32xf32, #tpu.memory_space<vmem>>, vector<1x32xf32>
    tpu.vector_store %arg13[%529, %c0_181], %526 {strides = array<i32>} : memref<32x32xf32, #tpu.memory_space<vmem>>, vector<1x32xf32>,
    %c4_182 = arith.constant 4 : index
    %531 = memref.load %arg0[%c4_182] : memref<8xi32, #tpu.memory_space<smem>>
    %c4_183 = arith.constant 4 : index
    %532 = memref.load %arg1[%c4_183] : memref<8xi32, #tpu.memory_space<smem>>
    %533 = arith.index_cast %531 : i32 to index
    %c0_184 = arith.constant 0 : index
    %534 = vector.load %arg12[%533, %c0_184] : memref<16x32xf32, #tpu.memory_space<vmem>>, vector<1x32xf32>
    %535 = arith.index_cast %532 : i32 to index
    %c0_185 = arith.constant 0 : index
    %536 = vector.load %arg13[%535, %c0_185] : memref<32x32xf32, #tpu.memory_space<vmem>>, vector<1x32xf32>
    %c16 = arith.constant 16 : index
    %537 = memref.load %arg2[%c16] : memref<32xi32, #tpu.memory_space<smem>>
    %538 = arith.index_cast %537 : i32 to index
    %c0_186 = arith.constant 0 : index
    %539 = vector.load %arg12[%538, %c0_186] : memref<16x32xf32, #tpu.memory_space<vmem>>, vector<1x32xf32>
    %c17 = arith.constant 17 : index
    %540 = memref.load %arg2[%c17] : memref<32xi32, #tpu.memory_space<smem>>
    %541 = arith.index_cast %540 : i32 to index
    %c0_187 = arith.constant 0 : index
    %542 = vector.load %arg12[%541, %c0_187] : memref<16x32xf32, #tpu.memory_space<vmem>>, vector<1x32xf32>
    %c18 = arith.constant 18 : index
    %543 = memref.load %arg2[%c18] : memref<32xi32, #tpu.memory_space<smem>>
    %544 = arith.index_cast %543 : i32 to index
    %c0_188 = arith.constant 0 : index
    %545 = vector.load %arg12[%544, %c0_188] : memref<16x32xf32, #tpu.memory_space<vmem>>, vector<1x32xf32>
    %c19 = arith.constant 19 : index
    %546 = memref.load %arg2[%c19] : memref<32xi32, #tpu.memory_space<smem>>
    %547 = arith.index_cast %546 : i32 to index
    %c0_189 = arith.constant 0 : index
    %548 = vector.load %arg12[%547, %c0_189] : memref<16x32xf32, #tpu.memory_space<vmem>>, vector<1x32xf32>
    %c16_190 = arith.constant 16 : index
    %549 = memref.load %arg3[%c16_190] : memref<32xi32, #tpu.memory_space<smem>>
    %550 = arith.index_cast %549 : i32 to index
    %c0_191 = arith.constant 0 : index
    %551 = vector.load %arg13[%550, %c0_191] : memref<32x32xf32, #tpu.memory_space<vmem>>, vector<1x32xf32>
    %c17_192 = arith.constant 17 : index
    %552 = memref.load %arg3[%c17_192] : memref<32xi32, #tpu.memory_space<smem>>
    %553 = arith.index_cast %552 : i32 to index
    %c0_193 = arith.constant 0 : index
    %554 = vector.load %arg13[%553, %c0_193] : memref<32x32xf32, #tpu.memory_space<vmem>>, vector<1x32xf32>
    %c18_194 = arith.constant 18 : index
    %555 = memref.load %arg3[%c18_194] : memref<32xi32, #tpu.memory_space<smem>>
    %556 = arith.index_cast %555 : i32 to index
    %c0_195 = arith.constant 0 : index
    %557 = vector.load %arg13[%556, %c0_195] : memref<32x32xf32, #tpu.memory_space<vmem>>, vector<1x32xf32>
    %c19_196 = arith.constant 19 : index
    %558 = memref.load %arg3[%c19_196] : memref<32xi32, #tpu.memory_space<smem>>
    %559 = arith.index_cast %558 : i32 to index
    %c0_197 = arith.constant 0 : index
    %560 = vector.load %arg13[%559, %c0_197] : memref<32x32xf32, #tpu.memory_space<vmem>>, vector<1x32xf32>
    %561 = tpu.concatenate %539, %542, %545, %548 in 0 : vector<1x32xf32>, vector<1x32xf32>, vector<1x32xf32>, vector<1x32xf32> -> vector<4x32xf32>
    %562 = tpu.concatenate %536, %551, %554, %557, %560 in 0 : vector<1x32xf32>, vector<1x32xf32>, vector<1x32xf32>, vector<1x32xf32>, vector<1x32xf32> -> vector<5x32xf32>
    %cst_198 = arith.constant dense<0.000000e+00> : vector<1x5xf32>
    %563 = tpu.matmul %534, %562, %cst_198 {dimension_numbers = #tpu.dot_dimension_numbers<[1], [1], [0], [0], [0, 0, 1, 0], [], []>} : vector<1x32xf32>, vector<5x32xf32>, vector<1x5xf32> -> vector<1x5xf32>
    %cst_199 = arith.constant 0.000000e+00 : f32
    %564 = vector.broadcast %cst_199 : f32 to vector<1x5xf32>
    %565 = arith.maximumf %563, %564 : vector<1x5xf32>
    %566 = math.absf %563 : vector<1x5xf32>
    %cst_200 = arith.constant 0.000000e+00 : f32
    %567 = vector.broadcast %cst_200 : f32 to vector<1x5xf32>
    %568 = arith.subf %567, %566 : vector<1x5xf32>
    %569 = math.exp %568 : vector<1x5xf32>
    %570 = math.log1p %569 : vector<1x5xf32>
    %571 = arith.addf %565, %570 : vector<1x5xf32>
    %cst_201 = arith.constant dense<0.000000e+00> : vector<1x4xf32>
    %572 = tpu.matmul %536, %561, %cst_201 {dimension_numbers = #tpu.dot_dimension_numbers<[1], [1], [0], [0], [0, 0, 1, 0], [], []>} : vector<1x32xf32>, vector<4x32xf32>, vector<1x4xf32> -> vector<1x4xf32>
    %cst_202 = arith.constant 0.000000e+00 : f32
    %573 = vector.broadcast %cst_202 : f32 to vector<1x4xf32>
    %574 = arith.maximumf %572, %573 : vector<1x4xf32>
    %575 = math.absf %572 : vector<1x4xf32>
    %cst_203 = arith.constant 0.000000e+00 : f32
    %576 = vector.broadcast %cst_203 : f32 to vector<1x4xf32>
    %577 = arith.subf %576, %575 : vector<1x4xf32>
    %578 = math.exp %577 : vector<1x4xf32>
    %579 = math.log1p %578 : vector<1x4xf32>
    %580 = arith.addf %574, %579 : vector<1x4xf32>
    %581 = vector.extract_strided_slice %571 {offsets = [0, 0], sizes = [1, 1], strides = [1, 1]} : vector<1x5xf32> to vector<1x1xf32>
    %cst_204 = arith.constant 9.99999968E-21 : f32
    %582 = vector.broadcast %cst_204 : f32 to vector<1x1xf32>
    %583 = arith.maximumf %581, %582 : vector<1x1xf32>
    %584 = vector.extract_strided_slice %571 {offsets = [0, 1], sizes = [1, 4], strides = [1, 1]} : vector<1x5xf32> to vector<1x4xf32>
    %c4_205 = arith.constant 4 : index
    %585 = memref.load %arg4[%c4_205] : memref<8xf32, #tpu.memory_space<smem>>
    %cst_206 = arith.constant 2.000000e+00 : f32
    %586 = vector.broadcast %cst_206 : f32 to vector<1x1xf32>
    %587 = arith.mulf %586, %583 : vector<1x1xf32>
    %cst_207 = arith.constant 3.14159274 : f32
    %588 = vector.broadcast %cst_207 : f32 to vector<1x1xf32>
    %589 = arith.divf %588, %587 : vector<1x1xf32>
    %590 = math.sqrt %589 : vector<1x1xf32>
    %591 = vector.broadcast %585 : f32 to vector<1x1xf32>
    %592 = arith.subf %590, %591 : vector<1x1xf32>
    %593 = math.absf %592 : vector<1x1xf32>
    %594 = arith.addf %463, %593 : vector<1x1xf32>
    %595 = arith.mulf %592, %592 : vector<1x1xf32>
    %596 = arith.addf %465, %595 : vector<1x1xf32>
    %c4_208 = arith.constant 4 : index
    %c0_209 = arith.constant 0 : index
    %597 = vector.load %arg5[%c4_208, %c0_209] : memref<8x4xf32, #tpu.memory_space<vmem>>, vector<1x4xf32>
    %598 = arith.mulf %580, %597 : vector<1x4xf32>
    %c4_210 = arith.constant 4 : index
    %c0_211 = arith.constant 0 : index
    %599 = vector.load %arg6[%c4_210, %c0_211] : memref<8x4xf32, #tpu.memory_space<vmem>>, vector<1x4xf32>
    %600 = arith.mulf %584, %599 : vector<1x4xf32>
    %601 = arith.addf %598, %600 : vector<1x4xf32>
    %cst_212 = arith.constant dense<0.000000e+00> : vector<1xf32>
    %602 = vector.multi_reduction <add>, %601, %cst_212 [1] : vector<1x4xf32> to vector<1xf32>
    %603 = vector.shape_cast %602 : vector<1xf32> to vector<1x1xf32>
    %604 = math.log %583 : vector<1x1xf32>
    %cst_213 = arith.constant 0.000000e+00 : f32
    %605 = vector.broadcast %cst_213 : f32 to vector<1x1xf32>
    %606 = arith.subf %605, %604 : vector<1x1xf32>
    %607 = arith.addf %606, %603 : vector<1x1xf32>
    %608 = arith.addf %477, %607 : vector<1x1xf32>
    %609 = tpu.concatenate %536, %534, %534, %536 in 1 : vector<1x32xf32>, vector<1x32xf32>, vector<1x32xf32>, vector<1x32xf32> -> vector<1x128xf32>
    %c0_214 = arith.constant 0 : index
    %c0_215 = arith.constant 0 : index
    %610 = vector.load %arg9[%c0_214, %c0_215] : memref<128x384xf32, #tpu.memory_space<vmem>>, vector<128x384xf32>
    %cst_216 = arith.constant dense<0.000000e+00> : vector<1x384xf32>
    %611 = tpu.matmul %609, %610, %cst_216 {dimension_numbers = #tpu.dot_dimension_numbers<[1], [0], [0], [1], [0, 0, 1, 1], [], []>} : vector<1x128xf32>, vector<128x384xf32>, vector<1x384xf32> -> vector<1x384xf32>
    %c0_217 = arith.constant 0 : index
    %c0_218 = arith.constant 0 : index
    %612 = vector.load %arg10[%c0_217, %c0_218] : memref<1x384xf32, #tpu.memory_space<vmem>>, vector<1x384xf32>
    %613 = arith.addf %611, %612 : vector<1x384xf32>
    %614 = vector.extract_strided_slice %613 {offsets = [0, 0], sizes = [1, 96], strides = [1, 1]} : vector<1x384xf32> to vector<1x96xf32>
    %615 = vector.extract_strided_slice %613 {offsets = [0, 96], sizes = [1, 96], strides = [1, 1]} : vector<1x384xf32> to vector<1x96xf32>
    %616 = vector.extract_strided_slice %614 {offsets = [0, 0], sizes = [1, 64], strides = [1, 1]} : vector<1x96xf32> to vector<1x64xf32>
    %617 = vector.extract_strided_slice %615 {offsets = [0, 0], sizes = [1, 64], strides = [1, 1]} : vector<1x96xf32> to vector<1x64xf32>
    %618 = arith.addf %616, %617 : vector<1x64xf32>
    %619 = arith.negf %618 : vector<1x64xf32>
    %620 = math.exp %619 : vector<1x64xf32>
    %cst_219 = arith.constant 1.000000e+00 : f32
    %621 = vector.broadcast %cst_219 : f32 to vector<1x64xf32>
    %622 = arith.addf %621, %620 : vector<1x64xf32>
    %623 = arith.divf %621, %622 : vector<1x64xf32>
    %624 = vector.extract_strided_slice %623 {offsets = [0, 0], sizes = [1, 32], strides = [1, 1]} : vector<1x64xf32> to vector<1x32xf32>
    %625 = vector.extract_strided_slice %623 {offsets = [0, 32], sizes = [1, 32], strides = [1, 1]} : vector<1x64xf32> to vector<1x32xf32>
    %626 = vector.extract_strided_slice %614 {offsets = [0, 64], sizes = [1, 32], strides = [1, 1]} : vector<1x96xf32> to vector<1x32xf32>
    %627 = vector.extract_strided_slice %615 {offsets = [0, 64], sizes = [1, 32], strides = [1, 1]} : vector<1x96xf32> to vector<1x32xf32>
    %628 = arith.mulf %624, %627 : vector<1x32xf32>
    %629 = arith.addf %626, %628 : vector<1x32xf32>
    %630 = math.tanh %629 : vector<1x32xf32>
    %cst_220 = arith.constant 1.000000e+00 : f32
    %631 = vector.broadcast %cst_220 : f32 to vector<1x32xf32>
    %632 = arith.subf %631, %625 : vector<1x32xf32>
    %633 = arith.mulf %632, %630 : vector<1x32xf32>
    %634 = arith.mulf %625, %534 : vector<1x32xf32>
    %635 = arith.addf %633, %634 : vector<1x32xf32>
    %636 = vector.extract_strided_slice %613 {offsets = [0, 192], sizes = [1, 96], strides = [1, 1]} : vector<1x384xf32> to vector<1x96xf32>
    %637 = vector.extract_strided_slice %613 {offsets = [0, 288], sizes = [1, 96], strides = [1, 1]} : vector<1x384xf32> to vector<1x96xf32>
    %638 = vector.extract_strided_slice %636 {offsets = [0, 0], sizes = [1, 64], strides = [1, 1]} : vector<1x96xf32> to vector<1x64xf32>
    %639 = vector.extract_strided_slice %637 {offsets = [0, 0], sizes = [1, 64], strides = [1, 1]} : vector<1x96xf32> to vector<1x64xf32>
    %640 = arith.addf %638, %639 : vector<1x64xf32>
    %641 = arith.negf %640 : vector<1x64xf32>
    %642 = math.exp %641 : vector<1x64xf32>
    %cst_221 = arith.constant 1.000000e+00 : f32
    %643 = vector.broadcast %cst_221 : f32 to vector<1x64xf32>
    %644 = arith.addf %643, %642 : vector<1x64xf32>
    %645 = arith.divf %643, %644 : vector<1x64xf32>
    %646 = vector.extract_strided_slice %645 {offsets = [0, 0], sizes = [1, 32], strides = [1, 1]} : vector<1x64xf32> to vector<1x32xf32>
    %647 = vector.extract_strided_slice %645 {offsets = [0, 32], sizes = [1, 32], strides = [1, 1]} : vector<1x64xf32> to vector<1x32xf32>
    %648 = vector.extract_strided_slice %636 {offsets = [0, 64], sizes = [1, 32], strides = [1, 1]} : vector<1x96xf32> to vector<1x32xf32>
    %649 = vector.extract_strided_slice %637 {offsets = [0, 64], sizes = [1, 32], strides = [1, 1]} : vector<1x96xf32> to vector<1x32xf32>
    %650 = arith.mulf %646, %649 : vector<1x32xf32>
    %651 = arith.addf %648, %650 : vector<1x32xf32>
    %652 = math.tanh %651 : vector<1x32xf32>
    %cst_222 = arith.constant 1.000000e+00 : f32
    %653 = vector.broadcast %cst_222 : f32 to vector<1x32xf32>
    %654 = arith.subf %653, %647 : vector<1x32xf32>
    %655 = arith.mulf %654, %652 : vector<1x32xf32>
    %656 = arith.mulf %647, %536 : vector<1x32xf32>
    %657 = arith.addf %655, %656 : vector<1x32xf32>
    %658 = arith.index_cast %531 : i32 to index
    %c0_223 = arith.constant 0 : index
    %659 = vector.load %arg12[%658, %c0_223] : memref<16x32xf32, #tpu.memory_space<vmem>>, vector<1x32xf32>
    tpu.vector_store %arg12[%658, %c0_223], %635 {strides = array<i32>} : memref<16x32xf32, #tpu.memory_space<vmem>>, vector<1x32xf32>,
    %660 = arith.index_cast %532 : i32 to index
    %c0_224 = arith.constant 0 : index
    %661 = vector.load %arg13[%660, %c0_224] : memref<32x32xf32, #tpu.memory_space<vmem>>, vector<1x32xf32>
    tpu.vector_store %arg13[%660, %c0_224], %657 {strides = array<i32>} : memref<32x32xf32, #tpu.memory_space<vmem>>, vector<1x32xf32>,
    %c5_225 = arith.constant 5 : index
    %662 = memref.load %arg0[%c5_225] : memref<8xi32, #tpu.memory_space<smem>>
    %c5_226 = arith.constant 5 : index
    %663 = memref.load %arg1[%c5_226] : memref<8xi32, #tpu.memory_space<smem>>
    %664 = arith.index_cast %662 : i32 to index
    %c0_227 = arith.constant 0 : index
    %665 = vector.load %arg12[%664, %c0_227] : memref<16x32xf32, #tpu.memory_space<vmem>>, vector<1x32xf32>
    %666 = arith.index_cast %663 : i32 to index
    %c0_228 = arith.constant 0 : index
    %667 = vector.load %arg13[%666, %c0_228] : memref<32x32xf32, #tpu.memory_space<vmem>>, vector<1x32xf32>
    %c20 = arith.constant 20 : index
    %668 = memref.load %arg2[%c20] : memref<32xi32, #tpu.memory_space<smem>>
    %669 = arith.index_cast %668 : i32 to index
    %c0_229 = arith.constant 0 : index
    %670 = vector.load %arg12[%669, %c0_229] : memref<16x32xf32, #tpu.memory_space<vmem>>, vector<1x32xf32>
    %c21 = arith.constant 21 : index
    %671 = memref.load %arg2[%c21] : memref<32xi32, #tpu.memory_space<smem>>
    %672 = arith.index_cast %671 : i32 to index
    %c0_230 = arith.constant 0 : index
    %673 = vector.load %arg12[%672, %c0_230] : memref<16x32xf32, #tpu.memory_space<vmem>>, vector<1x32xf32>
    %c22 = arith.constant 22 : index
    %674 = memref.load %arg2[%c22] : memref<32xi32, #tpu.memory_space<smem>>
    %675 = arith.index_cast %674 : i32 to index
    %c0_231 = arith.constant 0 : index
    %676 = vector.load %arg12[%675, %c0_231] : memref<16x32xf32, #tpu.memory_space<vmem>>, vector<1x32xf32>
    %c23 = arith.constant 23 : index
    %677 = memref.load %arg2[%c23] : memref<32xi32, #tpu.memory_space<smem>>
    %678 = arith.index_cast %677 : i32 to index
    %c0_232 = arith.constant 0 : index
    %679 = vector.load %arg12[%678, %c0_232] : memref<16x32xf32, #tpu.memory_space<vmem>>, vector<1x32xf32>
    %c20_233 = arith.constant 20 : index
    %680 = memref.load %arg3[%c20_233] : memref<32xi32, #tpu.memory_space<smem>>
    %681 = arith.index_cast %680 : i32 to index
    %c0_234 = arith.constant 0 : index
    %682 = vector.load %arg13[%681, %c0_234] : memref<32x32xf32, #tpu.memory_space<vmem>>, vector<1x32xf32>
    %c21_235 = arith.constant 21 : index
    %683 = memref.load %arg3[%c21_235] : memref<32xi32, #tpu.memory_space<smem>>
    %684 = arith.index_cast %683 : i32 to index
    %c0_236 = arith.constant 0 : index
    %685 = vector.load %arg13[%684, %c0_236] : memref<32x32xf32, #tpu.memory_space<vmem>>, vector<1x32xf32>
    %c22_237 = arith.constant 22 : index
    %686 = memref.load %arg3[%c22_237] : memref<32xi32, #tpu.memory_space<smem>>
    %687 = arith.index_cast %686 : i32 to index
    %c0_238 = arith.constant 0 : index
    %688 = vector.load %arg13[%687, %c0_238] : memref<32x32xf32, #tpu.memory_space<vmem>>, vector<1x32xf32>
    %c23_239 = arith.constant 23 : index
    %689 = memref.load %arg3[%c23_239] : memref<32xi32, #tpu.memory_space<smem>>
    %690 = arith.index_cast %689 : i32 to index
    %c0_240 = arith.constant 0 : index
    %691 = vector.load %arg13[%690, %c0_240] : memref<32x32xf32, #tpu.memory_space<vmem>>, vector<1x32xf32>
    %692 = tpu.concatenate %670, %673, %676, %679 in 0 : vector<1x32xf32>, vector<1x32xf32>, vector<1x32xf32>, vector<1x32xf32> -> vector<4x32xf32>
    %693 = tpu.concatenate %667, %682, %685, %688, %691 in 0 : vector<1x32xf32>, vector<1x32xf32>, vector<1x32xf32>, vector<1x32xf32>, vector<1x32xf32> -> vector<5x32xf32>
    %cst_241 = arith.constant dense<0.000000e+00> : vector<1x5xf32>
    %694 = tpu.matmul %665, %693, %cst_241 {dimension_numbers = #tpu.dot_dimension_numbers<[1], [1], [0], [0], [0, 0, 1, 0], [], []>} : vector<1x32xf32>, vector<5x32xf32>, vector<1x5xf32> -> vector<1x5xf32>
    %cst_242 = arith.constant 0.000000e+00 : f32
    %695 = vector.broadcast %cst_242 : f32 to vector<1x5xf32>
    %696 = arith.maximumf %694, %695 : vector<1x5xf32>
    %697 = math.absf %694 : vector<1x5xf32>
    %cst_243 = arith.constant 0.000000e+00 : f32
    %698 = vector.broadcast %cst_243 : f32 to vector<1x5xf32>
    %699 = arith.subf %698, %697 : vector<1x5xf32>
    %700 = math.exp %699 : vector<1x5xf32>
    %701 = math.log1p %700 : vector<1x5xf32>
    %702 = arith.addf %696, %701 : vector<1x5xf32>
    %cst_244 = arith.constant dense<0.000000e+00> : vector<1x4xf32>
    %703 = tpu.matmul %667, %692, %cst_244 {dimension_numbers = #tpu.dot_dimension_numbers<[1], [1], [0], [0], [0, 0, 1, 0], [], []>} : vector<1x32xf32>, vector<4x32xf32>, vector<1x4xf32> -> vector<1x4xf32>
    %cst_245 = arith.constant 0.000000e+00 : f32
    %704 = vector.broadcast %cst_245 : f32 to vector<1x4xf32>
    %705 = arith.maximumf %703, %704 : vector<1x4xf32>
    %706 = math.absf %703 : vector<1x4xf32>
    %cst_246 = arith.constant 0.000000e+00 : f32
    %707 = vector.broadcast %cst_246 : f32 to vector<1x4xf32>
    %708 = arith.subf %707, %706 : vector<1x4xf32>
    %709 = math.exp %708 : vector<1x4xf32>
    %710 = math.log1p %709 : vector<1x4xf32>
    %711 = arith.addf %705, %710 : vector<1x4xf32>
    %712 = vector.extract_strided_slice %702 {offsets = [0, 0], sizes = [1, 1], strides = [1, 1]} : vector<1x5xf32> to vector<1x1xf32>
    %cst_247 = arith.constant 9.99999968E-21 : f32
    %713 = vector.broadcast %cst_247 : f32 to vector<1x1xf32>
    %714 = arith.maximumf %712, %713 : vector<1x1xf32>
    %715 = vector.extract_strided_slice %702 {offsets = [0, 1], sizes = [1, 4], strides = [1, 1]} : vector<1x5xf32> to vector<1x4xf32>
    %c5_248 = arith.constant 5 : index
    %716 = memref.load %arg4[%c5_248] : memref<8xf32, #tpu.memory_space<smem>>
    %cst_249 = arith.constant 2.000000e+00 : f32
    %717 = vector.broadcast %cst_249 : f32 to vector<1x1xf32>
    %718 = arith.mulf %717, %714 : vector<1x1xf32>
    %cst_250 = arith.constant 3.14159274 : f32
    %719 = vector.broadcast %cst_250 : f32 to vector<1x1xf32>
    %720 = arith.divf %719, %718 : vector<1x1xf32>
    %721 = math.sqrt %720 : vector<1x1xf32>
    %722 = vector.broadcast %716 : f32 to vector<1x1xf32>
    %723 = arith.subf %721, %722 : vector<1x1xf32>
    %724 = math.absf %723 : vector<1x1xf32>
    %725 = arith.addf %594, %724 : vector<1x1xf32>
    %726 = arith.mulf %723, %723 : vector<1x1xf32>
    %727 = arith.addf %596, %726 : vector<1x1xf32>
    %c5_251 = arith.constant 5 : index
    %c0_252 = arith.constant 0 : index
    %728 = vector.load %arg5[%c5_251, %c0_252] : memref<8x4xf32, #tpu.memory_space<vmem>>, vector<1x4xf32>
    %729 = arith.mulf %711, %728 : vector<1x4xf32>
    %c5_253 = arith.constant 5 : index
    %c0_254 = arith.constant 0 : index
    %730 = vector.load %arg6[%c5_253, %c0_254] : memref<8x4xf32, #tpu.memory_space<vmem>>, vector<1x4xf32>
    %731 = arith.mulf %715, %730 : vector<1x4xf32>
    %732 = arith.addf %729, %731 : vector<1x4xf32>
    %cst_255 = arith.constant dense<0.000000e+00> : vector<1xf32>
    %733 = vector.multi_reduction <add>, %732, %cst_255 [1] : vector<1x4xf32> to vector<1xf32>
    %734 = vector.shape_cast %733 : vector<1xf32> to vector<1x1xf32>
    %735 = math.log %714 : vector<1x1xf32>
    %cst_256 = arith.constant 0.000000e+00 : f32
    %736 = vector.broadcast %cst_256 : f32 to vector<1x1xf32>
    %737 = arith.subf %736, %735 : vector<1x1xf32>
    %738 = arith.addf %737, %734 : vector<1x1xf32>
    %739 = arith.addf %608, %738 : vector<1x1xf32>
    %740 = tpu.concatenate %667, %665, %665, %667 in 1 : vector<1x32xf32>, vector<1x32xf32>, vector<1x32xf32>, vector<1x32xf32> -> vector<1x128xf32>
    %c0_257 = arith.constant 0 : index
    %c0_258 = arith.constant 0 : index
    %741 = vector.load %arg9[%c0_257, %c0_258] : memref<128x384xf32, #tpu.memory_space<vmem>>, vector<128x384xf32>
    %cst_259 = arith.constant dense<0.000000e+00> : vector<1x384xf32>
    %742 = tpu.matmul %740, %741, %cst_259 {dimension_numbers = #tpu.dot_dimension_numbers<[1], [0], [0], [1], [0, 0, 1, 1], [], []>} : vector<1x128xf32>, vector<128x384xf32>, vector<1x384xf32> -> vector<1x384xf32>
    %c0_260 = arith.constant 0 : index
    %c0_261 = arith.constant 0 : index
    %743 = vector.load %arg10[%c0_260, %c0_261] : memref<1x384xf32, #tpu.memory_space<vmem>>, vector<1x384xf32>
    %744 = arith.addf %742, %743 : vector<1x384xf32>
    %745 = vector.extract_strided_slice %744 {offsets = [0, 0], sizes = [1, 96], strides = [1, 1]} : vector<1x384xf32> to vector<1x96xf32>
    %746 = vector.extract_strided_slice %744 {offsets = [0, 96], sizes = [1, 96], strides = [1, 1]} : vector<1x384xf32> to vector<1x96xf32>
    %747 = vector.extract_strided_slice %745 {offsets = [0, 0], sizes = [1, 64], strides = [1, 1]} : vector<1x96xf32> to vector<1x64xf32>
    %748 = vector.extract_strided_slice %746 {offsets = [0, 0], sizes = [1, 64], strides = [1, 1]} : vector<1x96xf32> to vector<1x64xf32>
    %749 = arith.addf %747, %748 : vector<1x64xf32>
    %750 = arith.negf %749 : vector<1x64xf32>
    %751 = math.exp %750 : vector<1x64xf32>
    %cst_262 = arith.constant 1.000000e+00 : f32
    %752 = vector.broadcast %cst_262 : f32 to vector<1x64xf32>
    %753 = arith.addf %752, %751 : vector<1x64xf32>
    %754 = arith.divf %752, %753 : vector<1x64xf32>
    %755 = vector.extract_strided_slice %754 {offsets = [0, 0], sizes = [1, 32], strides = [1, 1]} : vector<1x64xf32> to vector<1x32xf32>
    %756 = vector.extract_strided_slice %754 {offsets = [0, 32], sizes = [1, 32], strides = [1, 1]} : vector<1x64xf32> to vector<1x32xf32>
    %757 = vector.extract_strided_slice %745 {offsets = [0, 64], sizes = [1, 32], strides = [1, 1]} : vector<1x96xf32> to vector<1x32xf32>
    %758 = vector.extract_strided_slice %746 {offsets = [0, 64], sizes = [1, 32], strides = [1, 1]} : vector<1x96xf32> to vector<1x32xf32>
    %759 = arith.mulf %755, %758 : vector<1x32xf32>
    %760 = arith.addf %757, %759 : vector<1x32xf32>
    %761 = math.tanh %760 : vector<1x32xf32>
    %cst_263 = arith.constant 1.000000e+00 : f32
    %762 = vector.broadcast %cst_263 : f32 to vector<1x32xf32>
    %763 = arith.subf %762, %756 : vector<1x32xf32>
    %764 = arith.mulf %763, %761 : vector<1x32xf32>
    %765 = arith.mulf %756, %665 : vector<1x32xf32>
    %766 = arith.addf %764, %765 : vector<1x32xf32>
    %767 = vector.extract_strided_slice %744 {offsets = [0, 192], sizes = [1, 96], strides = [1, 1]} : vector<1x384xf32> to vector<1x96xf32>
    %768 = vector.extract_strided_slice %744 {offsets = [0, 288], sizes = [1, 96], strides = [1, 1]} : vector<1x384xf32> to vector<1x96xf32>
    %769 = vector.extract_strided_slice %767 {offsets = [0, 0], sizes = [1, 64], strides = [1, 1]} : vector<1x96xf32> to vector<1x64xf32>
    %770 = vector.extract_strided_slice %768 {offsets = [0, 0], sizes = [1, 64], strides = [1, 1]} : vector<1x96xf32> to vector<1x64xf32>
    %771 = arith.addf %769, %770 : vector<1x64xf32>
    %772 = arith.negf %771 : vector<1x64xf32>
    %773 = math.exp %772 : vector<1x64xf32>
    %cst_264 = arith.constant 1.000000e+00 : f32
    %774 = vector.broadcast %cst_264 : f32 to vector<1x64xf32>
    %775 = arith.addf %774, %773 : vector<1x64xf32>
    %776 = arith.divf %774, %775 : vector<1x64xf32>
    %777 = vector.extract_strided_slice %776 {offsets = [0, 0], sizes = [1, 32], strides = [1, 1]} : vector<1x64xf32> to vector<1x32xf32>
    %778 = vector.extract_strided_slice %776 {offsets = [0, 32], sizes = [1, 32], strides = [1, 1]} : vector<1x64xf32> to vector<1x32xf32>
    %779 = vector.extract_strided_slice %767 {offsets = [0, 64], sizes = [1, 32], strides = [1, 1]} : vector<1x96xf32> to vector<1x32xf32>
    %780 = vector.extract_strided_slice %768 {offsets = [0, 64], sizes = [1, 32], strides = [1, 1]} : vector<1x96xf32> to vector<1x32xf32>
    %781 = arith.mulf %777, %780 : vector<1x32xf32>
    %782 = arith.addf %779, %781 : vector<1x32xf32>
    %783 = math.tanh %782 : vector<1x32xf32>
    %cst_265 = arith.constant 1.000000e+00 : f32
    %784 = vector.broadcast %cst_265 : f32 to vector<1x32xf32>
    %785 = arith.subf %784, %778 : vector<1x32xf32>
    %786 = arith.mulf %785, %783 : vector<1x32xf32>
    %787 = arith.mulf %778, %667 : vector<1x32xf32>
    %788 = arith.addf %786, %787 : vector<1x32xf32>
    %789 = arith.index_cast %662 : i32 to index
    %c0_266 = arith.constant 0 : index
    %790 = vector.load %arg12[%789, %c0_266] : memref<16x32xf32, #tpu.memory_space<vmem>>, vector<1x32xf32>
    tpu.vector_store %arg12[%789, %c0_266], %766 {strides = array<i32>} : memref<16x32xf32, #tpu.memory_space<vmem>>, vector<1x32xf32>,
    %791 = arith.index_cast %663 : i32 to index
    %c0_267 = arith.constant 0 : index
    %792 = vector.load %arg13[%791, %c0_267] : memref<32x32xf32, #tpu.memory_space<vmem>>, vector<1x32xf32>
    tpu.vector_store %arg13[%791, %c0_267], %788 {strides = array<i32>} : memref<32x32xf32, #tpu.memory_space<vmem>>, vector<1x32xf32>,
    %c6_268 = arith.constant 6 : index
    %793 = memref.load %arg0[%c6_268] : memref<8xi32, #tpu.memory_space<smem>>
    %c6_269 = arith.constant 6 : index
    %794 = memref.load %arg1[%c6_269] : memref<8xi32, #tpu.memory_space<smem>>
    %795 = arith.index_cast %793 : i32 to index
    %c0_270 = arith.constant 0 : index
    %796 = vector.load %arg12[%795, %c0_270] : memref<16x32xf32, #tpu.memory_space<vmem>>, vector<1x32xf32>
    %797 = arith.index_cast %794 : i32 to index
    %c0_271 = arith.constant 0 : index
    %798 = vector.load %arg13[%797, %c0_271] : memref<32x32xf32, #tpu.memory_space<vmem>>, vector<1x32xf32>
    %c24 = arith.constant 24 : index
    %799 = memref.load %arg2[%c24] : memref<32xi32, #tpu.memory_space<smem>>
    %800 = arith.index_cast %799 : i32 to index
    %c0_272 = arith.constant 0 : index
    %801 = vector.load %arg12[%800, %c0_272] : memref<16x32xf32, #tpu.memory_space<vmem>>, vector<1x32xf32>
    %c25 = arith.constant 25 : index
    %802 = memref.load %arg2[%c25] : memref<32xi32, #tpu.memory_space<smem>>
    %803 = arith.index_cast %802 : i32 to index
    %c0_273 = arith.constant 0 : index
    %804 = vector.load %arg12[%803, %c0_273] : memref<16x32xf32, #tpu.memory_space<vmem>>, vector<1x32xf32>
    %c26 = arith.constant 26 : index
    %805 = memref.load %arg2[%c26] : memref<32xi32, #tpu.memory_space<smem>>
    %806 = arith.index_cast %805 : i32 to index
    %c0_274 = arith.constant 0 : index
    %807 = vector.load %arg12[%806, %c0_274] : memref<16x32xf32, #tpu.memory_space<vmem>>, vector<1x32xf32>
    %c27 = arith.constant 27 : index
    %808 = memref.load %arg2[%c27] : memref<32xi32, #tpu.memory_space<smem>>
    %809 = arith.index_cast %808 : i32 to index
    %c0_275 = arith.constant 0 : index
    %810 = vector.load %arg12[%809, %c0_275] : memref<16x32xf32, #tpu.memory_space<vmem>>, vector<1x32xf32>
    %c24_276 = arith.constant 24 : index
    %811 = memref.load %arg3[%c24_276] : memref<32xi32, #tpu.memory_space<smem>>
    %812 = arith.index_cast %811 : i32 to index
    %c0_277 = arith.constant 0 : index
    %813 = vector.load %arg13[%812, %c0_277] : memref<32x32xf32, #tpu.memory_space<vmem>>, vector<1x32xf32>
    %c25_278 = arith.constant 25 : index
    %814 = memref.load %arg3[%c25_278] : memref<32xi32, #tpu.memory_space<smem>>
    %815 = arith.index_cast %814 : i32 to index
    %c0_279 = arith.constant 0 : index
    %816 = vector.load %arg13[%815, %c0_279] : memref<32x32xf32, #tpu.memory_space<vmem>>, vector<1x32xf32>
    %c26_280 = arith.constant 26 : index
    %817 = memref.load %arg3[%c26_280] : memref<32xi32, #tpu.memory_space<smem>>
    %818 = arith.index_cast %817 : i32 to index
    %c0_281 = arith.constant 0 : index
    %819 = vector.load %arg13[%818, %c0_281] : memref<32x32xf32, #tpu.memory_space<vmem>>, vector<1x32xf32>
    %c27_282 = arith.constant 27 : index
    %820 = memref.load %arg3[%c27_282] : memref<32xi32, #tpu.memory_space<smem>>
    %821 = arith.index_cast %820 : i32 to index
    %c0_283 = arith.constant 0 : index
    %822 = vector.load %arg13[%821, %c0_283] : memref<32x32xf32, #tpu.memory_space<vmem>>, vector<1x32xf32>
    %823 = tpu.concatenate %801, %804, %807, %810 in 0 : vector<1x32xf32>, vector<1x32xf32>, vector<1x32xf32>, vector<1x32xf32> -> vector<4x32xf32>
    %824 = tpu.concatenate %798, %813, %816, %819, %822 in 0 : vector<1x32xf32>, vector<1x32xf32>, vector<1x32xf32>, vector<1x32xf32>, vector<1x32xf32> -> vector<5x32xf32>
    %cst_284 = arith.constant dense<0.000000e+00> : vector<1x5xf32>
    %825 = tpu.matmul %796, %824, %cst_284 {dimension_numbers = #tpu.dot_dimension_numbers<[1], [1], [0], [0], [0, 0, 1, 0], [], []>} : vector<1x32xf32>, vector<5x32xf32>, vector<1x5xf32> -> vector<1x5xf32>
    %cst_285 = arith.constant 0.000000e+00 : f32
    %826 = vector.broadcast %cst_285 : f32 to vector<1x5xf32>
    %827 = arith.maximumf %825, %826 : vector<1x5xf32>
    %828 = math.absf %825 : vector<1x5xf32>
    %cst_286 = arith.constant 0.000000e+00 : f32
    %829 = vector.broadcast %cst_286 : f32 to vector<1x5xf32>
    %830 = arith.subf %829, %828 : vector<1x5xf32>
    %831 = math.exp %830 : vector<1x5xf32>
    %832 = math.log1p %831 : vector<1x5xf32>
    %833 = arith.addf %827, %832 : vector<1x5xf32>
    %cst_287 = arith.constant dense<0.000000e+00> : vector<1x4xf32>
    %834 = tpu.matmul %798, %823, %cst_287 {dimension_numbers = #tpu.dot_dimension_numbers<[1], [1], [0], [0], [0, 0, 1, 0], [], []>} : vector<1x32xf32>, vector<4x32xf32>, vector<1x4xf32> -> vector<1x4xf32>
    %cst_288 = arith.constant 0.000000e+00 : f32
    %835 = vector.broadcast %cst_288 : f32 to vector<1x4xf32>
    %836 = arith.maximumf %834, %835 : vector<1x4xf32>
    %837 = math.absf %834 : vector<1x4xf32>
    %cst_289 = arith.constant 0.000000e+00 : f32
    %838 = vector.broadcast %cst_289 : f32 to vector<1x4xf32>
    %839 = arith.subf %838, %837 : vector<1x4xf32>
    %840 = math.exp %839 : vector<1x4xf32>
    %841 = math.log1p %840 : vector<1x4xf32>
    %842 = arith.addf %836, %841 : vector<1x4xf32>
    %843 = vector.extract_strided_slice %833 {offsets = [0, 0], sizes = [1, 1], strides = [1, 1]} : vector<1x5xf32> to vector<1x1xf32>
    %cst_290 = arith.constant 9.99999968E-21 : f32
    %844 = vector.broadcast %cst_290 : f32 to vector<1x1xf32>
    %845 = arith.maximumf %843, %844 : vector<1x1xf32>
    %846 = vector.extract_strided_slice %833 {offsets = [0, 1], sizes = [1, 4], strides = [1, 1]} : vector<1x5xf32> to vector<1x4xf32>
    %c6_291 = arith.constant 6 : index
    %847 = memref.load %arg4[%c6_291] : memref<8xf32, #tpu.memory_space<smem>>
    %cst_292 = arith.constant 2.000000e+00 : f32
    %848 = vector.broadcast %cst_292 : f32 to vector<1x1xf32>
    %849 = arith.mulf %848, %845 : vector<1x1xf32>
    %cst_293 = arith.constant 3.14159274 : f32
    %850 = vector.broadcast %cst_293 : f32 to vector<1x1xf32>
    %851 = arith.divf %850, %849 : vector<1x1xf32>
    %852 = math.sqrt %851 : vector<1x1xf32>
    %853 = vector.broadcast %847 : f32 to vector<1x1xf32>
    %854 = arith.subf %852, %853 : vector<1x1xf32>
    %855 = math.absf %854 : vector<1x1xf32>
    %856 = arith.addf %725, %855 : vector<1x1xf32>
    %857 = arith.mulf %854, %854 : vector<1x1xf32>
    %858 = arith.addf %727, %857 : vector<1x1xf32>
    %c6_294 = arith.constant 6 : index
    %c0_295 = arith.constant 0 : index
    %859 = vector.load %arg5[%c6_294, %c0_295] : memref<8x4xf32, #tpu.memory_space<vmem>>, vector<1x4xf32>
    %860 = arith.mulf %842, %859 : vector<1x4xf32>
    %c6_296 = arith.constant 6 : index
    %c0_297 = arith.constant 0 : index
    %861 = vector.load %arg6[%c6_296, %c0_297] : memref<8x4xf32, #tpu.memory_space<vmem>>, vector<1x4xf32>
    %862 = arith.mulf %846, %861 : vector<1x4xf32>
    %863 = arith.addf %860, %862 : vector<1x4xf32>
    %cst_298 = arith.constant dense<0.000000e+00> : vector<1xf32>
    %864 = vector.multi_reduction <add>, %863, %cst_298 [1] : vector<1x4xf32> to vector<1xf32>
    %865 = vector.shape_cast %864 : vector<1xf32> to vector<1x1xf32>
    %866 = math.log %845 : vector<1x1xf32>
    %cst_299 = arith.constant 0.000000e+00 : f32
    %867 = vector.broadcast %cst_299 : f32 to vector<1x1xf32>
    %868 = arith.subf %867, %866 : vector<1x1xf32>
    %869 = arith.addf %868, %865 : vector<1x1xf32>
    %870 = arith.addf %739, %869 : vector<1x1xf32>
    %871 = tpu.concatenate %798, %796, %796, %798 in 1 : vector<1x32xf32>, vector<1x32xf32>, vector<1x32xf32>, vector<1x32xf32> -> vector<1x128xf32>
    %c0_300 = arith.constant 0 : index
    %c0_301 = arith.constant 0 : index
    %872 = vector.load %arg9[%c0_300, %c0_301] : memref<128x384xf32, #tpu.memory_space<vmem>>, vector<128x384xf32>
    %cst_302 = arith.constant dense<0.000000e+00> : vector<1x384xf32>
    %873 = tpu.matmul %871, %872, %cst_302 {dimension_numbers = #tpu.dot_dimension_numbers<[1], [0], [0], [1], [0, 0, 1, 1], [], []>} : vector<1x128xf32>, vector<128x384xf32>, vector<1x384xf32> -> vector<1x384xf32>
    %c0_303 = arith.constant 0 : index
    %c0_304 = arith.constant 0 : index
    %874 = vector.load %arg10[%c0_303, %c0_304] : memref<1x384xf32, #tpu.memory_space<vmem>>, vector<1x384xf32>
    %875 = arith.addf %873, %874 : vector<1x384xf32>
    %876 = vector.extract_strided_slice %875 {offsets = [0, 0], sizes = [1, 96], strides = [1, 1]} : vector<1x384xf32> to vector<1x96xf32>
    %877 = vector.extract_strided_slice %875 {offsets = [0, 96], sizes = [1, 96], strides = [1, 1]} : vector<1x384xf32> to vector<1x96xf32>
    %878 = vector.extract_strided_slice %876 {offsets = [0, 0], sizes = [1, 64], strides = [1, 1]} : vector<1x96xf32> to vector<1x64xf32>
    %879 = vector.extract_strided_slice %877 {offsets = [0, 0], sizes = [1, 64], strides = [1, 1]} : vector<1x96xf32> to vector<1x64xf32>
    %880 = arith.addf %878, %879 : vector<1x64xf32>
    %881 = arith.negf %880 : vector<1x64xf32>
    %882 = math.exp %881 : vector<1x64xf32>
    %cst_305 = arith.constant 1.000000e+00 : f32
    %883 = vector.broadcast %cst_305 : f32 to vector<1x64xf32>
    %884 = arith.addf %883, %882 : vector<1x64xf32>
    %885 = arith.divf %883, %884 : vector<1x64xf32>
    %886 = vector.extract_strided_slice %885 {offsets = [0, 0], sizes = [1, 32], strides = [1, 1]} : vector<1x64xf32> to vector<1x32xf32>
    %887 = vector.extract_strided_slice %885 {offsets = [0, 32], sizes = [1, 32], strides = [1, 1]} : vector<1x64xf32> to vector<1x32xf32>
    %888 = vector.extract_strided_slice %876 {offsets = [0, 64], sizes = [1, 32], strides = [1, 1]} : vector<1x96xf32> to vector<1x32xf32>
    %889 = vector.extract_strided_slice %877 {offsets = [0, 64], sizes = [1, 32], strides = [1, 1]} : vector<1x96xf32> to vector<1x32xf32>
    %890 = arith.mulf %886, %889 : vector<1x32xf32>
    %891 = arith.addf %888, %890 : vector<1x32xf32>
    %892 = math.tanh %891 : vector<1x32xf32>
    %cst_306 = arith.constant 1.000000e+00 : f32
    %893 = vector.broadcast %cst_306 : f32 to vector<1x32xf32>
    %894 = arith.subf %893, %887 : vector<1x32xf32>
    %895 = arith.mulf %894, %892 : vector<1x32xf32>
    %896 = arith.mulf %887, %796 : vector<1x32xf32>
    %897 = arith.addf %895, %896 : vector<1x32xf32>
    %898 = vector.extract_strided_slice %875 {offsets = [0, 192], sizes = [1, 96], strides = [1, 1]} : vector<1x384xf32> to vector<1x96xf32>
    %899 = vector.extract_strided_slice %875 {offsets = [0, 288], sizes = [1, 96], strides = [1, 1]} : vector<1x384xf32> to vector<1x96xf32>
    %900 = vector.extract_strided_slice %898 {offsets = [0, 0], sizes = [1, 64], strides = [1, 1]} : vector<1x96xf32> to vector<1x64xf32>
    %901 = vector.extract_strided_slice %899 {offsets = [0, 0], sizes = [1, 64], strides = [1, 1]} : vector<1x96xf32> to vector<1x64xf32>
    %902 = arith.addf %900, %901 : vector<1x64xf32>
    %903 = arith.negf %902 : vector<1x64xf32>
    %904 = math.exp %903 : vector<1x64xf32>
    %cst_307 = arith.constant 1.000000e+00 : f32
    %905 = vector.broadcast %cst_307 : f32 to vector<1x64xf32>
    %906 = arith.addf %905, %904 : vector<1x64xf32>
    %907 = arith.divf %905, %906 : vector<1x64xf32>
    %908 = vector.extract_strided_slice %907 {offsets = [0, 0], sizes = [1, 32], strides = [1, 1]} : vector<1x64xf32> to vector<1x32xf32>
    %909 = vector.extract_strided_slice %907 {offsets = [0, 32], sizes = [1, 32], strides = [1, 1]} : vector<1x64xf32> to vector<1x32xf32>
    %910 = vector.extract_strided_slice %898 {offsets = [0, 64], sizes = [1, 32], strides = [1, 1]} : vector<1x96xf32> to vector<1x32xf32>
    %911 = vector.extract_strided_slice %899 {offsets = [0, 64], sizes = [1, 32], strides = [1, 1]} : vector<1x96xf32> to vector<1x32xf32>
    %912 = arith.mulf %908, %911 : vector<1x32xf32>
    %913 = arith.addf %910, %912 : vector<1x32xf32>
    %914 = math.tanh %913 : vector<1x32xf32>
    %cst_308 = arith.constant 1.000000e+00 : f32
    %915 = vector.broadcast %cst_308 : f32 to vector<1x32xf32>
    %916 = arith.subf %915, %909 : vector<1x32xf32>
    %917 = arith.mulf %916, %914 : vector<1x32xf32>
    %918 = arith.mulf %909, %798 : vector<1x32xf32>
    %919 = arith.addf %917, %918 : vector<1x32xf32>
    %920 = arith.index_cast %793 : i32 to index
    %c0_309 = arith.constant 0 : index
    %921 = vector.load %arg12[%920, %c0_309] : memref<16x32xf32, #tpu.memory_space<vmem>>, vector<1x32xf32>
    tpu.vector_store %arg12[%920, %c0_309], %897 {strides = array<i32>} : memref<16x32xf32, #tpu.memory_space<vmem>>, vector<1x32xf32>,
    %922 = arith.index_cast %794 : i32 to index
    %c0_310 = arith.constant 0 : index
    %923 = vector.load %arg13[%922, %c0_310] : memref<32x32xf32, #tpu.memory_space<vmem>>, vector<1x32xf32>
    tpu.vector_store %arg13[%922, %c0_310], %919 {strides = array<i32>} : memref<32x32xf32, #tpu.memory_space<vmem>>, vector<1x32xf32>,
    %c7_311 = arith.constant 7 : index
    %924 = memref.load %arg0[%c7_311] : memref<8xi32, #tpu.memory_space<smem>>
    %c7_312 = arith.constant 7 : index
    %925 = memref.load %arg1[%c7_312] : memref<8xi32, #tpu.memory_space<smem>>
    %926 = arith.index_cast %924 : i32 to index
    %c0_313 = arith.constant 0 : index
    %927 = vector.load %arg12[%926, %c0_313] : memref<16x32xf32, #tpu.memory_space<vmem>>, vector<1x32xf32>
    %928 = arith.index_cast %925 : i32 to index
    %c0_314 = arith.constant 0 : index
    %929 = vector.load %arg13[%928, %c0_314] : memref<32x32xf32, #tpu.memory_space<vmem>>, vector<1x32xf32>
    %c28 = arith.constant 28 : index
    %930 = memref.load %arg2[%c28] : memref<32xi32, #tpu.memory_space<smem>>
    %931 = arith.index_cast %930 : i32 to index
    %c0_315 = arith.constant 0 : index
    %932 = vector.load %arg12[%931, %c0_315] : memref<16x32xf32, #tpu.memory_space<vmem>>, vector<1x32xf32>
    %c29 = arith.constant 29 : index
    %933 = memref.load %arg2[%c29] : memref<32xi32, #tpu.memory_space<smem>>
    %934 = arith.index_cast %933 : i32 to index
    %c0_316 = arith.constant 0 : index
    %935 = vector.load %arg12[%934, %c0_316] : memref<16x32xf32, #tpu.memory_space<vmem>>, vector<1x32xf32>
    %c30 = arith.constant 30 : index
    %936 = memref.load %arg2[%c30] : memref<32xi32, #tpu.memory_space<smem>>
    %937 = arith.index_cast %936 : i32 to index
    %c0_317 = arith.constant 0 : index
    %938 = vector.load %arg12[%937, %c0_317] : memref<16x32xf32, #tpu.memory_space<vmem>>, vector<1x32xf32>
    %c31 = arith.constant 31 : index
    %939 = memref.load %arg2[%c31] : memref<32xi32, #tpu.memory_space<smem>>
    %940 = arith.index_cast %939 : i32 to index
    %c0_318 = arith.constant 0 : index
    %941 = vector.load %arg12[%940, %c0_318] : memref<16x32xf32, #tpu.memory_space<vmem>>, vector<1x32xf32>
    %c28_319 = arith.constant 28 : index
    %942 = memref.load %arg3[%c28_319] : memref<32xi32, #tpu.memory_space<smem>>
    %943 = arith.index_cast %942 : i32 to index
    %c0_320 = arith.constant 0 : index
    %944 = vector.load %arg13[%943, %c0_320] : memref<32x32xf32, #tpu.memory_space<vmem>>, vector<1x32xf32>
    %c29_321 = arith.constant 29 : index
    %945 = memref.load %arg3[%c29_321] : memref<32xi32, #tpu.memory_space<smem>>
    %946 = arith.index_cast %945 : i32 to index
    %c0_322 = arith.constant 0 : index
    %947 = vector.load %arg13[%946, %c0_322] : memref<32x32xf32, #tpu.memory_space<vmem>>, vector<1x32xf32>
    %c30_323 = arith.constant 30 : index
    %948 = memref.load %arg3[%c30_323] : memref<32xi32, #tpu.memory_space<smem>>
    %949 = arith.index_cast %948 : i32 to index
    %c0_324 = arith.constant 0 : index
    %950 = vector.load %arg13[%949, %c0_324] : memref<32x32xf32, #tpu.memory_space<vmem>>, vector<1x32xf32>
    %c31_325 = arith.constant 31 : index
    %951 = memref.load %arg3[%c31_325] : memref<32xi32, #tpu.memory_space<smem>>
    %952 = arith.index_cast %951 : i32 to index
    %c0_326 = arith.constant 0 : index
    %953 = vector.load %arg13[%952, %c0_326] : memref<32x32xf32, #tpu.memory_space<vmem>>, vector<1x32xf32>
    %954 = tpu.concatenate %932, %935, %938, %941 in 0 : vector<1x32xf32>, vector<1x32xf32>, vector<1x32xf32>, vector<1x32xf32> -> vector<4x32xf32>
    %955 = tpu.concatenate %929, %944, %947, %950, %953 in 0 : vector<1x32xf32>, vector<1x32xf32>, vector<1x32xf32>, vector<1x32xf32>, vector<1x32xf32> -> vector<5x32xf32>
    %cst_327 = arith.constant dense<0.000000e+00> : vector<1x5xf32>
    %956 = tpu.matmul %927, %955, %cst_327 {dimension_numbers = #tpu.dot_dimension_numbers<[1], [1], [0], [0], [0, 0, 1, 0], [], []>} : vector<1x32xf32>, vector<5x32xf32>, vector<1x5xf32> -> vector<1x5xf32>
    %cst_328 = arith.constant 0.000000e+00 : f32
    %957 = vector.broadcast %cst_328 : f32 to vector<1x5xf32>
    %958 = arith.maximumf %956, %957 : vector<1x5xf32>
    %959 = math.absf %956 : vector<1x5xf32>
    %cst_329 = arith.constant 0.000000e+00 : f32
    %960 = vector.broadcast %cst_329 : f32 to vector<1x5xf32>
    %961 = arith.subf %960, %959 : vector<1x5xf32>
    %962 = math.exp %961 : vector<1x5xf32>
    %963 = math.log1p %962 : vector<1x5xf32>
    %964 = arith.addf %958, %963 : vector<1x5xf32>
    %cst_330 = arith.constant dense<0.000000e+00> : vector<1x4xf32>
    %965 = tpu.matmul %929, %954, %cst_330 {dimension_numbers = #tpu.dot_dimension_numbers<[1], [1], [0], [0], [0, 0, 1, 0], [], []>} : vector<1x32xf32>, vector<4x32xf32>, vector<1x4xf32> -> vector<1x4xf32>
    %cst_331 = arith.constant 0.000000e+00 : f32
    %966 = vector.broadcast %cst_331 : f32 to vector<1x4xf32>
    %967 = arith.maximumf %965, %966 : vector<1x4xf32>
    %968 = math.absf %965 : vector<1x4xf32>
    %cst_332 = arith.constant 0.000000e+00 : f32
    %969 = vector.broadcast %cst_332 : f32 to vector<1x4xf32>
    %970 = arith.subf %969, %968 : vector<1x4xf32>
    %971 = math.exp %970 : vector<1x4xf32>
    %972 = math.log1p %971 : vector<1x4xf32>
    %973 = arith.addf %967, %972 : vector<1x4xf32>
    %974 = vector.extract_strided_slice %964 {offsets = [0, 0], sizes = [1, 1], strides = [1, 1]} : vector<1x5xf32> to vector<1x1xf32>
    %cst_333 = arith.constant 9.99999968E-21 : f32
    %975 = vector.broadcast %cst_333 : f32 to vector<1x1xf32>
    %976 = arith.maximumf %974, %975 : vector<1x1xf32>
    %977 = vector.extract_strided_slice %964 {offsets = [0, 1], sizes = [1, 4], strides = [1, 1]} : vector<1x5xf32> to vector<1x4xf32>
    %c7_334 = arith.constant 7 : index
    %978 = memref.load %arg4[%c7_334] : memref<8xf32, #tpu.memory_space<smem>>
    %cst_335 = arith.constant 2.000000e+00 : f32
    %979 = vector.broadcast %cst_335 : f32 to vector<1x1xf32>
    %980 = arith.mulf %979, %976 : vector<1x1xf32>
    %cst_336 = arith.constant 3.14159274 : f32
    %981 = vector.broadcast %cst_336 : f32 to vector<1x1xf32>
    %982 = arith.divf %981, %980 : vector<1x1xf32>
    %983 = math.sqrt %982 : vector<1x1xf32>
    %984 = vector.broadcast %978 : f32 to vector<1x1xf32>
    %985 = arith.subf %983, %984 : vector<1x1xf32>
    %986 = math.absf %985 : vector<1x1xf32>
    %987 = arith.addf %856, %986 : vector<1x1xf32>
    %988 = arith.mulf %985, %985 : vector<1x1xf32>
    %989 = arith.addf %858, %988 : vector<1x1xf32>
    %c7_337 = arith.constant 7 : index
    %c0_338 = arith.constant 0 : index
    %990 = vector.load %arg5[%c7_337, %c0_338] : memref<8x4xf32, #tpu.memory_space<vmem>>, vector<1x4xf32>
    %991 = arith.mulf %973, %990 : vector<1x4xf32>
    %c7_339 = arith.constant 7 : index
    %c0_340 = arith.constant 0 : index
    %992 = vector.load %arg6[%c7_339, %c0_340] : memref<8x4xf32, #tpu.memory_space<vmem>>, vector<1x4xf32>
    %993 = arith.mulf %977, %992 : vector<1x4xf32>
    %994 = arith.addf %991, %993 : vector<1x4xf32>
    %cst_341 = arith.constant dense<0.000000e+00> : vector<1xf32>
    %995 = vector.multi_reduction <add>, %994, %cst_341 [1] : vector<1x4xf32> to vector<1xf32>
    %996 = vector.shape_cast %995 : vector<1xf32> to vector<1x1xf32>
    %997 = math.log %976 : vector<1x1xf32>
    %cst_342 = arith.constant 0.000000e+00 : f32
    %998 = vector.broadcast %cst_342 : f32 to vector<1x1xf32>
    %999 = arith.subf %998, %997 : vector<1x1xf32>
    %1000 = arith.addf %999, %996 : vector<1x1xf32>
    %1001 = arith.addf %870, %1000 : vector<1x1xf32>
    %1002 = tpu.iota {dimensions = array<i32: 1>} : vector<1x128xi32>
    %c0_i32 = arith.constant 0 : i32
    %1003 = vector.broadcast %c0_i32 : i32 to vector<1x128xi32>
    %1004 = arith.cmpi eq, %1002, %1003 : vector<1x128xi32>
    %cst_343 = arith.constant 0.000000e+00 : f32
    %1005 = vector.shape_cast %1001 : vector<1x1xf32> to vector<1x1xf32>
    %1006 = vector.broadcast %1005 : vector<1x1xf32> to vector<1x128xf32>
    %1007 = vector.broadcast %cst_343 : f32 to vector<1x128xf32>
    %1008 = arith.select %1004, %1006, %1007 : vector<1x128xi1>, vector<1x128xf32>
    %c1_i32 = arith.constant 1 : i32
    %1009 = vector.broadcast %c1_i32 : i32 to vector<1x128xi32>
    %1010 = arith.cmpi eq, %1002, %1009 : vector<1x128xi32>
    %cst_344 = arith.constant 0.000000e+00 : f32
    %1011 = vector.shape_cast %987 : vector<1x1xf32> to vector<1x1xf32>
    %1012 = vector.broadcast %1011 : vector<1x1xf32> to vector<1x128xf32>
    %1013 = vector.broadcast %cst_344 : f32 to vector<1x128xf32>
    %1014 = arith.select %1010, %1012, %1013 : vector<1x128xi1>, vector<1x128xf32>
    %1015 = arith.addf %1008, %1014 : vector<1x128xf32>
    %c2_i32 = arith.constant 2 : i32
    %1016 = vector.broadcast %c2_i32 : i32 to vector<1x128xi32>
    %1017 = arith.cmpi eq, %1002, %1016 : vector<1x128xi32>
    %cst_345 = arith.constant 0.000000e+00 : f32
    %1018 = vector.shape_cast %989 : vector<1x1xf32> to vector<1x1xf32>
    %1019 = vector.broadcast %1018 : vector<1x1xf32> to vector<1x128xf32>
    %1020 = vector.broadcast %cst_345 : f32 to vector<1x128xf32>
    %1021 = arith.select %1017, %1019, %1020 : vector<1x128xi1>, vector<1x128xf32>
    %1022 = arith.addf %1015, %1021 : vector<1x128xf32>
    %c0_346 = arith.constant 0 : index
    %c0_347 = arith.constant 0 : index
    %1023 = vector.load %arg11[%c0_346, %c0_347] : memref<1x128xf32, #tpu.memory_space<vmem>>, vector<1x128xf32>
    tpu.vector_store %arg11[%c0_346, %c0_347], %1022 {strides = array<i32>} : memref<1x128xf32, #tpu.memory_space<vmem>>, vector<1x128xf32>,
    return
  }
}

</mosaic_0001>

<llo_original>
// kernel: deepcoevolve_forward.1
$region0: #{deepcoevolve_forward.1}
  #allocation0 [shape = 'u32[]', space=smem, size = 0x4, offset = 0x4, fixed_abs, tag = 'smem constant byte address 0x4 - core index']
  #allocation1 [shape = 'u32[144,128]{1,0:T(1,128)}', space=vmem, size = 0x12000, scoped, tag = 'internal scratch']
  %s0 = inlined_call_operand.vmem [shape: s32[8], index: 0, kind: input, shape index: {}]
  %s1 = inlined_call_operand.vmem [shape: s32[8], index: 1, kind: input, shape index: {}]
  %s2 = inlined_call_operand.vmem [shape: s32[32], index: 2, kind: input, shape index: {}]
  %s3 = inlined_call_operand.vmem [shape: s32[32], index: 3, kind: input, shape index: {}]
  %s4 = inlined_call_operand.vmem [shape: f32[8], index: 4, kind: input, shape index: {}]
  %s5 = inlined_call_operand.vmem [shape: f32[8,4], index: 5, kind: input, shape index: {}]
  %s6 = inlined_call_operand.vmem [shape: f32[8,4], index: 6, kind: input, shape index: {}]
  %s7 = inlined_call_operand.vmem [shape: f32[16,32], index: 7, kind: input, shape index: {}]
  %s8 = inlined_call_operand.vmem [shape: f32[32,32], index: 8, kind: input, shape index: {}]
  %s9 = inlined_call_operand.vmem [shape: f32[128,384], index: 9, kind: input, shape index: {}]
  %s10 = inlined_call_operand.vmem [shape: f32[1,384], index: 10, kind: input, shape index: {}]
  %s11 = inlined_call_operand.vmem [shape: f32[1,128], index: 11, kind: output, shape index: {0}]
  %s12 = inlined_call_operand.hbm [shape: f32[16,32], index: 12, kind: output, shape index: {1}]
  %s13 = inlined_call_operand.hbm [shape: f32[32,32], index: 13, kind: output, shape index: {2}]
  %14 = xla_tuple %s11, %s12, %s13
  %s15 = sld [smem:[#allocation0]]
  $region90: #{deepcoevolve_forward.1} parent=0
    _
  %s17 = ssub.s32 1, %s15
  %s18 = scalar_select 0, %s17, %s15
  $region1: #{deepcoevolve_forward.1} parent=0
    #allocation2 [shape = 'u8[512]{0}', space=smem, size = 0x200, scoped, tag = 'input window, operand 0, single buffered']
    #allocation3 [shape = 's32[1]{0}', space=sflag, size = 0x4, scoped, tag = 'scoped memory for deepcoevolve_forward.1']
    #allocation4 [shape = 's32[1]{0}', space=sflag, size = 0x4, scoped, tag = 'scoped memory for deepcoevolve_forward.1']
    #allocation5 [shape = 'u8[512]{0}', space=smem, size = 0x200, scoped, tag = 'input window, operand 1, single buffered']
    #allocation6 [shape = 's32[1]{0}', space=sflag, size = 0x4, scoped, tag = 'scoped memory for deepcoevolve_forward.1']
    #allocation7 [shape = 'u8[512]{0}', space=smem, size = 0x200, scoped, tag = 'input window, operand 2, single buffered']
    #allocation8 [shape = 'u8[512]{0}', space=smem, size = 0x200, scoped, tag = 'input window, operand 3, single buffered']
    #allocation9 [shape = 's32[1]{0}', space=sflag, size = 0x4, scoped, tag = 'scoped memory for deepcoevolve_forward.1']
    #allocation10 [shape = 'u8[512]{0}', space=smem, size = 0x200, scoped, tag = 'input window, operand 4, single buffered']
    #allocation11 [shape = 'u8[8192]{0}', space=vmem, size = 0x2000, scoped, tag = 'output window, operand 1, single buffered']
    #allocation12 [shape = 'u8[16384]{0}', space=vmem, size = 0x4000, scoped, tag = 'output window, operand 2, single buffered']
    #allocation13 [shape = 's32[1]{0}', space=sflag, size = 0x4, scoped, tag = 'scoped memory for deepcoevolve_forward.1']
    %19 = vsyncpa [#allocation4], 0
    %20 = vsyncpa [#allocation6], 0
    %21 = vsyncpa [#allocation9], 0
    %22 = vsyncpa [#allocation3], 0
    %23 = vsyncpa [#allocation13], 0
    // Predicated region
    $region2: #{deepcoevolve_forward.1} parent=1 // pred_check
      _
    $region3: #{deepcoevolve_forward.1} parent=1 // pred_check_branch
      %25 = sbr.rel (0) target = $region5
    $region4: #{deepcoevolve_forward.1} parent=1 // pred_region
      %s27 = ssub.s32 16, 16
      %28 = vsyncadd [#allocation4], %s27
      %s30 = sshll.u32 %s0, 4
      %s31 = int_to_ptr.vmem [resolvable:$true] %s30
      %33 = dma.vmem_to_smem %s31, 16, [#allocation2], [#allocation4]
    $region5: #{deepcoevolve_forward.1} parent=1 // pred_fallthru
      _
    // Predicated region
    $region6: #{deepcoevolve_forward.1} parent=1 // pred_check
      _
    $region7: #{deepcoevolve_forward.1} parent=1 // pred_check_branch
      %35 = sbr.rel (0) target = $region9
    $region8: #{deepcoevolve_forward.1} parent=1 // pred_region
      %s37 = ssub.s32 16, 16
      %38 = vsyncadd [#allocation6], %s37
      %s40 = sshll.u32 %s1, 4
      %s41 = int_to_ptr.vmem [resolvable:$true] %s40
      %43 = dma.vmem_to_smem %s41, 16, [#allocation5], [#allocation6]
    $region9: #{deepcoevolve_forward.1} parent=1 // pred_fallthru
      _
    // Predicated region
    $region10: #{deepcoevolve_forward.1} parent=1 // pred_check
      _
    $region11: #{deepcoevolve_forward.1} parent=1 // pred_check_branch
      %45 = sbr.rel (0) target = $region13
    $region12: #{deepcoevolve_forward.1} parent=1 // pred_region
      %s47 = ssub.s32 16, 16
      %48 = vsyncadd [#allocation6], %s47
      %s50 = sshll.u32 %s2, 4
      %s51 = int_to_ptr.vmem [resolvable:$true] %s50
      %53 = dma.vmem_to_smem %s51, 16, [#allocation7], [#allocation6]
    $region13: #{deepcoevolve_forward.1} parent=1 // pred_fallthru
      _
    // Predicated region
    $region14: #{deepcoevolve_forward.1} parent=1 // pred_check
      _
    $region15: #{deepcoevolve_forward.1} parent=1 // pred_check_branch
      %55 = sbr.rel (0) target = $region17
    $region16: #{deepcoevolve_forward.1} parent=1 // pred_region
      %s57 = ssub.s32 16, 16
      %58 = vsyncadd [#allocation9], %s57
      %s60 = sshll.u32 %s3, 4
      %s61 = int_to_ptr.vmem [resolvable:$true] %s60
      %63 = dma.vmem_to_smem %s61, 16, [#allocation8], [#allocation9]
    $region17: #{deepcoevolve_forward.1} parent=1 // pred_fallthru
      _
    // Predicated region
    $region18: #{deepcoevolve_forward.1} parent=1 // pred_check
      _
    $region19: #{deepcoevolve_forward.1} parent=1 // pred_check_branch
      %65 = sbr.rel (0) target = $region21
    $region20: #{deepcoevolve_forward.1} parent=1 // pred_region
      %s67 = ssub.s32 16, 16
      %68 = vsyncadd [#allocation9], %s67
      %s70 = sshll.u32 %s4, 4
      %s71 = int_to_ptr.vmem [resolvable:$true] %s70
      %73 = dma.vmem_to_smem %s71, 16, [#allocation10], [#allocation9]
    $region21: #{deepcoevolve_forward.1} parent=1 // pred_fallthru
      _
    // Predicated region
    $region22: #{deepcoevolve_forward.1} parent=1 // pred_check
      _
    $region23: #{deepcoevolve_forward.1} parent=1 // pred_check_branch
      %75 = sbr.rel (0) target = $region25
    $region24: #{deepcoevolve_forward.1} parent=1 // pred_region
      _
    $region25: #{deepcoevolve_forward.1} parent=1 // pred_fallthru
      _
    // Predicated region
    $region26: #{deepcoevolve_forward.1} parent=1 // pred_check
      _
    $region27: #{deepcoevolve_forward.1} parent=1 // pred_check_branch
      %77 = sbr.rel (0) target = $region29
    $region28: #{deepcoevolve_forward.1} parent=1 // pred_region
      _
    $region29: #{deepcoevolve_forward.1} parent=1 // pred_fallthru
      _
    // Predicated region
    $region30: #{deepcoevolve_forward.1} parent=1 // pred_check
      _
    $region31: #{deepcoevolve_forward.1} parent=1 // pred_check_branch
      %79 = sbr.rel (0) target = $region33
    $region32: #{deepcoevolve_forward.1} parent=1 // pred_region
      _
    $region33: #{deepcoevolve_forward.1} parent=1 // pred_fallthru
      _
    // Predicated region
    $region34: #{deepcoevolve_forward.1} parent=1 // pred_check
      _
    $region35: #{deepcoevolve_forward.1} parent=1 // pred_check_branch
      %81 = sbr.rel (0) target = $region37
    $region36: #{deepcoevolve_forward.1} parent=1 // pred_region
      _
    $region37: #{deepcoevolve_forward.1} parent=1 // pred_fallthru
      _
    // Predicated region
    $region38: #{deepcoevolve_forward.1} parent=1 // pred_check
      _
    $region39: #{deepcoevolve_forward.1} parent=1 // pred_check_branch
      %83 = sbr.rel (0) target = $region41
    $region40: #{deepcoevolve_forward.1} parent=1 // pred_region
      _
    $region41: #{deepcoevolve_forward.1} parent=1 // pred_fallthru
      _
    // Predicated region
    $region42: #{deepcoevolve_forward.1} parent=1 // pred_check
      _
    $region43: #{deepcoevolve_forward.1} parent=1 // pred_check_branch
      %85 = sbr.rel (0) target = $region45
    $region44: #{deepcoevolve_forward.1} parent=1 // pred_region
      _
    $region45: #{deepcoevolve_forward.1} parent=1 // pred_fallthru
      _
    // Predicated region
    $region46: #{deepcoevolve_forward.1} parent=1 // pred_check
      _
    $region47: #{deepcoevolve_forward.1} parent=1 // pred_check_branch
      %87 = sbr.rel (0) target = $region49
    $region48: #{deepcoevolve_forward.1} parent=1 // pred_region
      %88 = dma.done [#allocation4], 16
    $region49: #{deepcoevolve_forward.1} parent=1 // pred_fallthru
      _
    // Predicated region
    $region50: #{deepcoevolve_forward.1} parent=1 // pred_check
      _
    $region51: #{deepcoevolve_forward.1} parent=1 // pred_check_branch
      %90 = sbr.rel (0) target = $region53
    $region52: #{deepcoevolve_forward.1} parent=1 // pred_region
      %91 = dma.done [#allocation6], 16
    $region53: #{deepcoevolve_forward.1} parent=1 // pred_fallthru
      _
    // Predicated region
    $region54: #{deepcoevolve_forward.1} parent=1 // pred_check
      _
    $region55: #{deepcoevolve_forward.1} parent=1 // pred_check_branch
      %93 = sbr.rel (0) target = $region57
    $region56: #{deepcoevolve_forward.1} parent=1 // pred_region
      %94 = dma.done [#allocation6], 16
    $region57: #{deepcoevolve_forward.1} parent=1 // pred_fallthru
      _
    // Predicated region
    $region58: #{deepcoevolve_forward.1} parent=1 // pred_check
      _
    $region59: #{deepcoevolve_forward.1} parent=1 // pred_check_branch
      %96 = sbr.rel (0) target = $region61
    $region60: #{deepcoevolve_forward.1} parent=1 // pred_region
      %97 = dma.done [#allocation9], 16
    $region61: #{deepcoevolve_forward.1} parent=1 // pred_fallthru
      _
    // Predicated region
    $region62: #{deepcoevolve_forward.1} parent=1 // pred_check
      _
    $region63: #{deepcoevolve_forward.1} parent=1 // pred_check_branch
      %99 = sbr.rel (0) target = $region65
    $region64: #{deepcoevolve_forward.1} parent=1 // pred_region
      %100 = dma.done [#allocation9], 16
    $region65: #{deepcoevolve_forward.1} parent=1 // pred_fallthru
      _
    %101 = sfence
    %v102 = vld [vmem:[%s7] sm:$0xff]
    %v103 = vld [vmem:[%s7 + $0x8] sm:$0xff]
    %vm104 = vcmask 261120
    %105 = vst.msk [vmem:[#allocation11] sm:$0xff] %vm104, %v102
    %106 = vst.msk [vmem:[#allocation11 + $0x8] sm:$0xff] %vm104, %v103
    %v107 = vld [vmem:[%s8] sm:$0xff]
    %v108 = vld [vmem:[%s8 + $0x8] sm:$0xff]
    %v109 = vld [vmem:[%s8 + $0x10] sm:$0xff]
    %v110 = vld [vmem:[%s8 + $0x18] sm:$0xff]
    %111 = vst.msk [vmem:[#allocation12] sm:$0xff] %vm104, %v107
    %112 = vst.msk [vmem:[#allocation12 + $0x8] sm:$0xff] %vm104, %v108
    %113 = vst.msk [vmem:[#allocation12 + $0x10] sm:$0xff] %vm104, %v109
    %114 = vst.msk [vmem:[#allocation12 + $0x18] sm:$0xff] %vm104, %v110
    %s115 = sld [smem:[#allocation2]]
    %s116 = sld [smem:[#allocation5]]
    %s117 = scalar_lea.vmem [#allocation11], %s115
    %v118 = vld [vmem:[%s117] sm:$0x1]
    %s119 = scalar_lea.vmem [#allocation12], %s116
    %v120 = vld [vmem:[%s119] sm:$0x1]
    %s121 = sld [smem:[#allocation7]]
    %s122 = scalar_lea.vmem [#allocation11], %s121
    %v123 = vld [vmem:[%s122] sm:$0x1]
    %s124 = sld [smem:[#allocation7 + $0x1]]
    %s125 = scalar_lea.vmem [#allocation11], %s124
    %v126 = vld [vmem:[%s125] sm:$0x1]
    %s127 = sld [smem:[#allocation7 + $0x2]]
    %s128 = scalar_lea.vmem [#allocation11], %s127
    %v129 = vld [vmem:[%s128] sm:$0x1]
    %s130 = sld [smem:[#allocation7 + $0x3]]
    %s131 = scalar_lea.vmem [#allocation11], %s130
    %v132 = vld [vmem:[%s131] sm:$0x1]
    %s133 = sld [smem:[#allocation8]]
    %s134 = scalar_lea.vmem [#allocation12], %s133
    %v135 = vld [vmem:[%s134] sm:$0x1]
    %s136 = sld [smem:[#allocation8 + $0x1]]
    %s137 = scalar_lea.vmem [#allocation12], %s136
    %v138 = vld [vmem:[%s137] sm:$0x1]
    %s139 = sld [smem:[#allocation8 + $0x2]]
    %s140 = scalar_lea.vmem [#allocation12], %s139
    %v141 = vld [vmem:[%s140] sm:$0x1]
    %s142 = sld [smem:[#allocation8 + $0x3]]
    %s143 = scalar_lea.vmem [#allocation12], %s142
    %v144 = vld [vmem:[%s143] sm:$0x1]
    %v146 = vrot.slane %v126, 7
    %v149 = vrot.slane %v129, 6
    %v152 = vrot.slane %v132, 5
    %vm154 = vcmask 1040384
    %v155 = vsel %vm154, %v123, %v146
    %vm156 = vcmask 1041408
    %v157 = vsel %vm156, %v155, %v149
    %vm158 = vcmask 1042432
    %v159 = vsel %vm158, %v157, %v152
    %v161 = vrot.slane %v135, 7
    %v164 = vrot.slane %v138, 6
    %v167 = vrot.slane %v141, 5
    %v170 = vrot.slane %v144, 4
    %v172 = vsel %vm154, %v120, %v161
    %v173 = vsel %vm156, %v172, %v164
    %v174 = vsel %vm158, %v173, %v167
    %vm175 = vcmask 1043456
    %v176 = vsel %vm175, %v174, %v170
    %v178 = vsel %vm104, %v118, 0
    %v181 = vsel %vm104, %v176, 0
    %183 = vmatprep.subr.mxu0 0.0
    %184 = vmatpush1.xpose.msra.mxu0 0.0
    %185 = vmatprep.subr.mxu0 0.0
    %186 = vmatpush1.xpose.msra.mxu0 0.0
    %187 = vmatprep.subr.mxu0 0.0
    %188 = vmatpush1.xpose.msra.mxu0 0.0
    %189 = vmatprep.subr.mxu0 0.0
    %190 = vmatpush1.xpose.msra.mxu0 0.0
    %191 = vmatprep.subr.mxu0 0.0
    %192 = vmatpush1.xpose.msra.mxu0 0.0
    %193 = vmatprep.subr.mxu0 0.0
    %194 = vmatpush1.xpose.msra.mxu0 0.0
    %195 = vmatprep.subr.mxu0 0.0
    %196 = vmatpush1.xpose.msra.mxu0 0.0
    %197 = vmatprep.subr.mxu0 0.0
    %198 = vmatpush1.xpose.msra.mxu0 0.0
    %199 = vmatprep.subr.mxu0 0.0
    %200 = vmatpush1.xpose.msra.mxu0 0.0
    %201 = vmatprep.subr.mxu0 0.0
    %202 = vmatpush1.xpose.msra.mxu0 0.0
    %203 = vmatprep.subr.mxu0 0.0
    %204 = vmatpush1.xpose.msra.mxu0 0.0
    %205 = vmatprep.subr.mxu0 0.0
    %206 = vmatpush1.xpose.msra.mxu0 0.0
    %207 = vmatprep.subr.mxu0 0.0
    %208 = vmatpush1.xpose.msra.mxu0 0.0
    %209 = vmatprep.subr.mxu0 0.0
    %210 = vmatpush1.xpose.msra.mxu0 0.0
    %211 = vmatprep.subr.mxu0 0.0
    %212 = vmatpush1.xpose.msra.mxu0 0.0
    %213 = vmatprep.subr.mxu0 0.0
    %214 = vmatpush1.xpose.msra.mxu0 %v181
    %215 = vmatprep.subr.mxu0 0.0
    %216 = vmatpush2.xpose.msra.mxu0 0.0
    %217 = vmatprep.subr.mxu0 0.0
    %218 = vmatpush2.xpose.msra.mxu0 0.0
    %219 = vmatprep.subr.mxu0 0.0
    %220 = vmatpush2.xpose.msra.mxu0 0.0
    %221 = vmatprep.subr.mxu0 0.0
    %222 = vmatpush2.xpose.msra.mxu0 0.0
    %223 = vmatprep.subr.mxu0 0.0
    %224 = vmatpush2.xpose.msra.mxu0 0.0
    %225 = vmatprep.subr.mxu0 0.0
    %226 = vmatpush2.xpose.msra.mxu0 0.0
    %227 = vmatprep.subr.mxu0 0.0
    %228 = vmatpush2.xpose.msra.mxu0 0.0
    %229 = vmatprep.subr.mxu0 0.0
    %230 = vmatpush2.xpose.msra.mxu0 0.0
    %231 = vmatprep.subr.mxu0 0.0
    %232 = vmatpush2.xpose.msra.mxu0 0.0
    %233 = vmatprep.subr.mxu0 0.0
    %234 = vmatpush2.xpose.msra.mxu0 0.0
    %235 = vmatprep.subr.mxu0 0.0
    %236 = vmatpush2.xpose.msra.mxu0 0.0
    %237 = vmatprep.subr.mxu0 0.0
    %238 = vmatpush2.xpose.msra.mxu0 0.0
    %239 = vmatprep.subr.mxu0 0.0
    %240 = vmatpush2.xpose.msra.mxu0 0.0
    %241 = vmatprep.subr.mxu0 0.0
    %242 = vmatpush2.xpose.msra.mxu0 0.0
    %243 = vmatprep.subr.mxu0 0.0
    %244 = vmatpush2.xpose.msra.mxu0 0.0
    %245 = vmatprep.subr.mxu0 0.0
    %246 = vmatpush2.xpose.msra.mxu0 0.0
    %247 = vmatprep.mubr.f32.mxu0 0.0
    %248 = vmatmul.mubr.f32.gmra.mxu0 %v178
    %v249 = vpop.f32.mrf.mxu0
    %v250 = vadd.f32 0.0, %v249
    %v251 = vpop.f32.mrf.mxu0
    %252 = vdwg.mxu0
    %v253 = vmax.f32 %v250, 0.0
    %v254 = vand.u32 2147483647, %v250
    %v255 = vsub.f32 0.0, %v254
    %v256 = vmul.f32 %v255, 1.442695
    %v257 = vpow.pop %v256
    %v258 = vadd.f32 %v257, 1.0
    %v259 = vlog2.pop %v258
    %v260 = vmul.f32 %v259, 0.6931472
    %v261 = vmul.f32 -0.5, %v257
    %v262 = vadd.f32 %v261, 1.0
    %v263 = vmul.f32 %v262, %v257
    %v264 = vand.u32 2147483647, %v257
    %vm265 = vcmp.lt.f32.partialorder %v264, 0.0004427343
    %v266 = vsel %vm265, %v263, %v260
    %v267 = vadd.f32 %v253, %v266
    %v269 = vsel %vm104, %v120, 0
    %v272 = vsel %vm104, %v159, 0
    %274 = vmatprep.subr.mxu0 0.0
    %275 = vmatpush1.xpose.msra.mxu0 0.0
    %276 = vmatprep.subr.mxu0 0.0
    %277 = vmatpush1.xpose.msra.mxu0 0.0
    %278 = vmatprep.subr.mxu0 0.0
    %279 = vmatpush1.xpose.msra.mxu0 0.0
    %280 = vmatprep.subr.mxu0 0.0
    %281 = vmatpush1.xpose.msra.mxu0 0.0
    %282 = vmatprep.subr.mxu0 0.0
    %283 = vmatpush1.xpose.msra.mxu0 0.0
    %284 = vmatprep.subr.mxu0 0.0
    %285 = vmatpush1.xpose.msra.mxu0 0.0
    %286 = vmatprep.subr.mxu0 0.0
    %287 = vmatpush1.xpose.msra.mxu0 0.0
    %288 = vmatprep.subr.mxu0 0.0
    %289 = vmatpush1.xpose.msra.mxu0 0.0
    %290 = vmatprep.subr.mxu0 0.0
    %291 = vmatpush1.xpose.msra.mxu0 0.0
    %292 = vmatprep.subr.mxu0 0.0
    %293 = vmatpush1.xpose.msra.mxu0 0.0
    %294 = vmatprep.subr.mxu0 0.0
    %295 = vmatpush1.xpose.msra.mxu0 0.0
    %296 = vmatprep.subr.mxu0 0.0
    %297 = vmatpush1.xpose.msra.mxu0 0.0
    %298 = vmatprep.subr.mxu0 0.0
    %299 = vmatpush1.xpose.msra.mxu0 0.0
    %300 = vmatprep.subr.mxu0 0.0
    %301 = vmatpush1.xpose.msra.mxu0 0.0
    %302 = vmatprep.subr.mxu0 0.0
    %303 = vmatpush1.xpose.msra.mxu0 0.0
    %304 = vmatprep.subr.mxu0 0.0
    %305 = vmatpush1.xpose.msra.mxu0 %v272
    %306 = vmatprep.subr.mxu0 0.0
    %307 = vmatpush2.xpose.msra.mxu0 0.0
    %308 = vmatprep.subr.mxu0 0.0
    %309 = vmatpush2.xpose.msra.mxu0 0.0
    %310 = vmatprep.subr.mxu0 0.0
    %311 = vmatpush2.xpose.msra.mxu0 0.0
    %312 = vmatprep.subr.mxu0 0.0
    %313 = vmatpush2.xpose.msra.mxu0 0.0
    %314 = vmatprep.subr.mxu0 0.0
    %315 = vmatpush2.xpose.msra.mxu0 0.0
    %316 = vmatprep.subr.mxu0 0.0
    %317 = vmatpush2.xpose.msra.mxu0 0.0
    %318 = vmatprep.subr.mxu0 0.0
    %319 = vmatpush2.xpose.msra.mxu0 0.0
    %320 = vmatprep.subr.mxu0 0.0
    %321 = vmatpush2.xpose.msra.mxu0 0.0
    %322 = vmatprep.subr.mxu0 0.0
    %323 = vmatpush2.xpose.msra.mxu0 0.0
    %324 = vmatprep.subr.mxu0 0.0
    %325 = vmatpush2.xpose.msra.mxu0 0.0
    %326 = vmatprep.subr.mxu0 0.0
    %327 = vmatpush2.xpose.msra.mxu0 0.0
    %328 = vmatprep.subr.mxu0 0.0
    %329 = vmatpush2.xpose.msra.mxu0 0.0
    %330 = vmatprep.subr.mxu0 0.0
    %331 = vmatpush2.xpose.msra.mxu0 0.0
    %332 = vmatprep.subr.mxu0 0.0
    %333 = vmatpush2.xpose.msra.mxu0 0.0
    %334 = vmatprep.subr.mxu0 0.0
    %335 = vmatpush2.xpose.msra.mxu0 0.0
    %336 = vmatprep.subr.mxu0 0.0
    %337 = vmatpush2.xpose.msra.mxu0 0.0
    %338 = vmatprep.mubr.f32.mxu0 0.0
    %339 = vmatmul.mubr.f32.gmra.mxu0 %v269
    %v340 = vpop.f32.mrf.mxu0
    %v341 = vadd.f32 0.0, %v340
    %v342 = vpop.f32.mrf.mxu0
    %343 = vdwg.mxu0
    %v344 = vmax.f32 %v341, 0.0
    %v345 = vand.u32 2147483647, %v341
    %v346 = vsub.f32 0.0, %v345
    %v347 = vmul.f32 %v346, 1.442695
    %v348 = vpow.pop %v347
    %v349 = vadd.f32 %v348, 1.0
    %v350 = vlog2.pop %v349
    %v351 = vmul.f32 %v350, 0.6931472
    %v352 = vmul.f32 -0.5, %v348
    %v353 = vadd.f32 %v352, 1.0
    %v354 = vmul.f32 %v353, %v348
    %v355 = vand.u32 2147483647, %v348
    %vm356 = vcmp.lt.f32.partialorder %v355, 0.0004427343
    %v357 = vsel %vm356, %v354, %v351
    %v358 = vadd.f32 %v344, %v357
    %v359 = vmax.f32 %v267, 1e-20
    %s360 = sld [smem:[#allocation10]]
    %v361 = vmul.f32 %v359, 2.0
    %v362 = vrcp.pop %v361
    %v363 = vmul.f32 3.1415927, %v362
    %v364 = vrsqrt.pop %v363
    %v365 = vmul.f32 %v363, %v364
    %vm366 = vcmp.eq.f32.partialorder %v363, inf
    %v367 = vsel %vm366, %v363, %v365
    %vm368 = vcmp.eq.f32.partialorder %v363, 0.0
    %v369 = vand.u32 %v363, 2147483648
    %v370 = vsel %vm368, %v369, %v367
    %v371 = vstv %s360
    %v372 = vsub.f32 %v370, %v371
    %v373 = vand.u32 2147483647, %v372
    %v374 = vadd.f32 %v373, 0.0
    %v375 = vmul.f32 %v372, %v372
    %v376 = vadd.f32 %v375, 0.0
    %v377 = vld [vmem:[%s5] sm:$0x1]
    %v378 = vmul.f32 %v358, %v377
    %v379 = vld [vmem:[%s6] sm:$0x1]
    %381 = vrot.lane.b32.xlu0 %v379, 1
    %v382 = vpop.permute.xlu0 %381
    %v384 = vmul.f32 %v267, %v382
    %386 = vrot.lane.b32.xlu0 %v384, 127
    %v387 = vpop.permute.xlu0 %386
    %v389 = vadd.f32 %v378, %v387
    %vm390 = vcmask 24576
    %v391 = vsel %vm390, %v389, 0.0
    %392 = vadd.xlane.f32.xlu0 %v391
    %v393 = vpop.xlane.xlu0 %392
    %v394 = vlog2.pop %v359
    %v395 = vmul.f32 %v394, 0.6931472
    %v396 = vsub.f32 0.0, %v395
    %v397 = vadd.f32 %v396, %v393
    %v398 = vadd.f32 %v397, 0.0
    %399 = vrot.lane.b32.xlu0 %v118, 32
    %v400 = vpop.permute.xlu0 %399
    %402 = vrot.lane.b32.xlu0 %v118, 64
    %v403 = vpop.permute.xlu0 %402
    %405 = vrot.lane.b32.xlu0 %v120, 96
    %v406 = vpop.permute.xlu0 %405
    %v408 = vsel %vm104, %v120, %v400
    %vm409 = vcmask 523264
    %v410 = vsel %vm409, %v408, %v403
    %vm411 = vcmask 785408
    %v412 = vsel %vm411, %v410, %v406
    %v413 = vld [vmem:[%s9] sm:$0xff]
    %v414 = vld [vmem:[%s9 + $0x8] sm:$0xff]
    %v415 = vld [vmem:[%s9 + $0x10] sm:$0xff]
    %v416 = vld [vmem:[%s9 + $0x18] sm:$0xff]
    %v417 = vld [vmem:[%s9 + $0x20] sm:$0xff]
    %v418 = vld [vmem:[%s9 + $0x28] sm:$0xff]
    %v419 = vld [vmem:[%s9 + $0x30] sm:$0xff]
    %v420 = vld [vmem:[%s9 + $0x38] sm:$0xff]
    %v421 = vld [vmem:[%s9 + $0x40] sm:$0xff]
    %v422 = vld [vmem:[%s9 + $0x48] sm:$0xff]
    %v423 = vld [vmem:[%s9 + $0x50] sm:$0xff]
    %v424 = vld [vmem:[%s9 + $0x58] sm:$0xff]
    %v425 = vld [vmem:[%s9 + $0x60] sm:$0xff]
    %v426 = vld [vmem:[%s9 + $0x68] sm:$0xff]
    %v427 = vld [vmem:[%s9 + $0x70] sm:$0xff]
    %v428 = vld [vmem:[%s9 + $0x78] sm:$0xff]
    %v429 = vld [vmem:[%s9 + $0x80] sm:$0xff]
    %v430 = vld [vmem:[%s9 + $0x88] sm:$0xff]
    %v431 = vld [vmem:[%s9 + $0x90] sm:$0xff]
    %v432 = vld [vmem:[%s9 + $0x98] sm:$0xff]
    %v433 = vld [vmem:[%s9 + $0xa0] sm:$0xff]
    %v434 = vld [vmem:[%s9 + $0xa8] sm:$0xff]
    %v435 = vld [vmem:[%s9 + $0xb0] sm:$0xff]
    %v436 = vld [vmem:[%s9 + $0xb8] sm:$0xff]
    %v437 = vld [vmem:[%s9 + $0xc0] sm:$0xff]
    %v438 = vld [vmem:[%s9 + $0xc8] sm:$0xff]
    %v439 = vld [vmem:[%s9 + $0xd0] sm:$0xff]
    %v440 = vld [vmem:[%s9 + $0xd8] sm:$0xff]
    %v441 = vld [vmem:[%s9 + $0xe0] sm:$0xff]
    %v442 = vld [vmem:[%s9 + $0xe8] sm:$0xff]
    %v443 = vld [vmem:[%s9 + $0xf0] sm:$0xff]
    %v444 = vld [vmem:[%s9 + $0xf8] sm:$0xff]
    %v445 = vld [vmem:[%s9 + $0x100] sm:$0xff]
    %v446 = vld [vmem:[%s9 + $0x108] sm:$0xff]
    %v447 = vld [vmem:[%s9 + $0x110] sm:$0xff]
    %v448 = vld [vmem:[%s9 + $0x118] sm:$0xff]
    %v449 = vld [vmem:[%s9 + $0x120] sm:$0xff]
    %v450 = vld [vmem:[%s9 + $0x128] sm:$0xff]
    %v451 = vld [vmem:[%s9 + $0x130] sm:$0xff]
    %v452 = vld [vmem:[%s9 + $0x138] sm:$0xff]
    %v453 = vld [vmem:[%s9 + $0x140] sm:$0xff]
    %v454 = vld [vmem:[%s9 + $0x148] sm:$0xff]
    %v455 = vld [vmem:[%s9 + $0x150] sm:$0xff]
    %v456 = vld [vmem:[%s9 + $0x158] sm:$0xff]
    %v457 = vld [vmem:[%s9 + $0x160] sm:$0xff]
    %v458 = vld [vmem:[%s9 + $0x168] sm:$0xff]
    %v459 = vld [vmem:[%s9 + $0x170] sm:$0xff]
    %v460 = vld [vmem:[%s9 + $0x178] sm:$0xff]
    %v461 = vld [vmem:[%s10] sm:$0x7]
    %v463 = vlaneseq
    %v464 = vshrl.u32 %v463, 7
    %v465 = vsub.s32 0, %v464
    %v466 = vrot.slane %v461, %v465
    %v467 = vlaneseq
    %v468 = vshrl.u32 %v467, 7
    %v469 = vsub.s32 1, %v468
    %v470 = vrot.slane %v461, %v469
    %v471 = vlaneseq
    %v472 = vshrl.u32 %v471, 7
    %v473 = vsub.s32 2, %v472
    %v474 = vrot.slane %v461, %v473
    %478 = vmatprep.subr.mxu0 %v459
    %479 = vmatpush1.msra.mxu0 %v458
    %480 = vmatprep.subr.mxu0 %v456
    %481 = vmatpush1.msra.mxu0 %v455
    %482 = vmatprep.subr.mxu0 %v453
    %483 = vmatpush1.msra.mxu0 %v452
    %484 = vmatprep.subr.mxu0 %v450
    %485 = vmatpush1.msra.mxu0 %v449
    %486 = vmatprep.subr.mxu0 %v447
    %487 = vmatpush1.msra.mxu0 %v446
    %488 = vmatprep.subr.mxu0 %v444
    %489 = vmatpush1.msra.mxu0 %v443
    %490 = vmatprep.subr.mxu0 %v441
    %491 = vmatpush1.msra.mxu0 %v440
    %492 = vmatprep.subr.mxu0 %v438
    %493 = vmatpush1.msra.mxu0 %v437
    %494 = vmatprep.subr.mxu0 %v435
    %495 = vmatpush1.msra.mxu0 %v434
    %496 = vmatprep.subr.mxu0 %v432
    %497 = vmatpush1.msra.mxu0 %v431
    %498 = vmatprep.subr.mxu0 %v429
    %499 = vmatpush1.msra.mxu0 %v428
    %500 = vmatprep.subr.mxu0 %v426
    %501 = vmatpush1.msra.mxu0 %v425
    %502 = vmatprep.subr.mxu0 %v423
    %503 = vmatpush1.msra.mxu0 %v422
    %504 = vmatprep.subr.mxu0 %v420
    %505 = vmatpush1.msra.mxu0 %v419
    %506 = vmatprep.subr.mxu0 %v417
    %507 = vmatpush1.msra.mxu0 %v416
    %508 = vmatprep.subr.mxu0 %v414
    %509 = vmatpush1.msra.mxu0 %v413
    %510 = vmatprep.subr.mxu0 0.0
    %511 = vmatpush2.msra.mxu0 0.0
    %512 = vmatprep.subr.mxu0 0.0
    %513 = vmatpush2.msra.mxu0 0.0
    %514 = vmatprep.subr.mxu0 0.0
    %515 = vmatpush2.msra.mxu0 0.0
    %516 = vmatprep.subr.mxu0 0.0
    %517 = vmatpush2.msra.mxu0 0.0
    %518 = vmatprep.subr.mxu0 0.0
    %519 = vmatpush2.msra.mxu0 0.0
    %520 = vmatprep.subr.mxu0 0.0
    %521 = vmatpush2.msra.mxu0 0.0
    %522 = vmatprep.subr.mxu0 0.0
    %523 = vmatpush2.msra.mxu0 0.0
    %524 = vmatprep.subr.mxu0 0.0
    %525 = vmatpush2.msra.mxu0 0.0
    %526 = vmatprep.subr.mxu0 0.0
    %527 = vmatpush2.msra.mxu0 0.0
    %528 = vmatprep.subr.mxu0 0.0
    %529 = vmatpush2.msra.mxu0 0.0
    %530 = vmatprep.subr.mxu0 0.0
    %531 = vmatpush2.msra.mxu0 0.0
    %532 = vmatprep.subr.mxu0 0.0
    %533 = vmatpush2.msra.mxu0 0.0
    %534 = vmatprep.subr.mxu0 0.0
    %535 = vmatpush2.msra.mxu0 0.0
    %536 = vmatprep.subr.mxu0 0.0
    %537 = vmatpush2.msra.mxu0 0.0
    %538 = vmatprep.subr.mxu0 0.0
    %539 = vmatpush2.msra.mxu0 0.0
    %540 = vmatprep.subr.mxu0 0.0
    %541 = vmatpush2.msra.mxu0 0.0
    %542 = vmatprep.mubr.f32.mxu0 0.0
    %543 = vmatmul.mubr.f32.gmra.mxu0 %v412
    %v544 = vpop.f32.mrf.mxu0
    %v545 = vadd.f32 %v466, %v544
    %v546 = vpop.f32.mrf.mxu0
    %v547 = vadd.f32 %v470, %v546
    %548 = vdwg.mxu0
    %549 = vmatprep.subr.mxu0 0.0
    %550 = vmatpush1.msra.mxu0 %v460
    %551 = vmatprep.subr.mxu0 0.0
    %552 = vmatpush1.msra.mxu0 %v457
    %553 = vmatprep.subr.mxu0 0.0
    %554 = vmatpush1.msra.mxu0 %v454
    %555 = vmatprep.subr.mxu0 0.0
    %556 = vmatpush1.msra.mxu0 %v451
    %557 = vmatprep.subr.mxu0 0.0
    %558 = vmatpush1.msra.mxu0 %v448
    %559 = vmatprep.subr.mxu0 0.0
    %560 = vmatpush1.msra.mxu0 %v445
    %561 = vmatprep.subr.mxu0 0.0
    %562 = vmatpush1.msra.mxu0 %v442
    %563 = vmatprep.subr.mxu0 0.0
    %564 = vmatpush1.msra.mxu0 %v439
    %565 = vmatprep.subr.mxu0 0.0
    %566 = vmatpush1.msra.mxu0 %v436
    %567 = vmatprep.subr.mxu0 0.0
    %568 = vmatpush1.msra.mxu0 %v433
    %569 = vmatprep.subr.mxu0 0.0
    %570 = vmatpush1.msra.mxu0 %v430
    %571 = vmatprep.subr.mxu0 0.0
    %572 = vmatpush1.msra.mxu0 %v427
    %573 = vmatprep.subr.mxu0 0.0
    %574 = vmatpush1.msra.mxu0 %v424
    %575 = vmatprep.subr.mxu0 0.0
    %576 = vmatpush1.msra.mxu0 %v421
    %577 = vmatprep.subr.mxu0 0.0
    %578 = vmatpush1.msra.mxu0 %v418
    %579 = vmatprep.subr.mxu0 0.0
    %580 = vmatpush1.msra.mxu0 %v415
    %581 = vmatprep.subr.mxu0 0.0
    %582 = vmatpush2.msra.mxu0 0.0
    %583 = vmatprep.subr.mxu0 0.0
    %584 = vmatpush2.msra.mxu0 0.0
    %585 = vmatprep.subr.mxu0 0.0
    %586 = vmatpush2.msra.mxu0 0.0
    %587 = vmatprep.subr.mxu0 0.0
    %588 = vmatpush2.msra.mxu0 0.0
    %589 = vmatprep.subr.mxu0 0.0
    %590 = vmatpush2.msra.mxu0 0.0
    %591 = vmatprep.subr.mxu0 0.0
    %592 = vmatpush2.msra.mxu0 0.0
    %593 = vmatprep.subr.mxu0 0.0
    %594 = vmatpush2.msra.mxu0 0.0
    %595 = vmatprep.subr.mxu0 0.0
    %596 = vmatpush2.msra.mxu0 0.0
    %597 = vmatprep.subr.mxu0 0.0
    %598 = vmatpush2.msra.mxu0 0.0
    %599 = vmatprep.subr.mxu0 0.0
    %600 = vmatpush2.msra.mxu0 0.0
    %601 = vmatprep.subr.mxu0 0.0
    %602 = vmatpush2.msra.mxu0 0.0
    %603 = vmatprep.subr.mxu0 0.0
    %604 = vmatpush2.msra.mxu0 0.0
    %605 = vmatprep.subr.mxu0 0.0
    %606 = vmatpush2.msra.mxu0 0.0
    %607 = vmatprep.subr.mxu0 0.0
    %608 = vmatpush2.msra.mxu0 0.0
    %609 = vmatprep.subr.mxu0 0.0
    %610 = vmatpush2.msra.mxu0 0.0
    %611 = vmatprep.subr.mxu0 0.0
    %612 = vmatpush2.msra.mxu0 0.0
    %613 = vmatprep.mubr.f32.mxu0 0.0
    %614 = vmatmul.mubr.f32.gmra.mxu0 %v412
    %v615 = vpop.f32.mrf.mxu0
    %v616 = vadd.f32 %v474, %v615
    %v617 = vpop.f32.mrf.mxu0
    %618 = vdwg.mxu0
    %621 = vrot.lane.b32.xlu0 %v545, 32
    %v622 = vpop.permute.xlu0 %621
    %623 = vrot.lane.b32.xlu0 %v547, 32
    %v624 = vpop.permute.xlu0 %623
    %v625 = vsel %vm104, %v622, %v624
    %v627 = vadd.f32 %v545, %v625
    %v628 = vxor.u32 %v627, 2147483648
    %v629 = vmul.f32 %v628, 1.442695
    %v630 = vpow.pop %v629
    %v631 = vadd.f32 %v630, 1.0
    %v632 = vrcp.pop %v631
    %v633 = vmul.f32 1.0, %v632
    %634 = vrot.lane.b32.xlu0 %v547, 96
    %v635 = vpop.permute.xlu0 %634
    %v637 = vmul.f32 %v633, %v635
    %639 = vrot.lane.b32.xlu0 %v637, 64
    %v640 = vpop.permute.xlu0 %639
    %v642 = vadd.f32 %v545, %v640
    %v643 = vtanh.pop %v642
    %v644 = vsub.f32 1.0, %v633
    %646 = vrot.lane.b32.xlu0 %v643, 96
    %v647 = vpop.permute.xlu0 %646
    %v649 = vmul.f32 %v644, %v647
    %v650 = vmul.f32 %v633, %v400
    %v651 = vadd.f32 %v649, %v650
    %653 = vrot.lane.b32.xlu0 %v616, 32
    %v654 = vpop.permute.xlu0 %653
    %v656 = vadd.f32 %v547, %v654
    %v657 = vxor.u32 %v656, 2147483648
    %v658 = vmul.f32 %v657, 1.442695
    %v659 = vpow.pop %v658
    %v660 = vadd.f32 %v659, 1.0
    %v661 = vrcp.pop %v660
    %v662 = vmul.f32 1.0, %v661
    %663 = vrot.lane.b32.xlu0 %v616, 96
    %v664 = vpop.permute.xlu0 %663
    %v666 = vmul.f32 %v662, %v664
    %668 = vrot.lane.b32.xlu0 %v666, 64
    %v669 = vpop.permute.xlu0 %668
    %v671 = vadd.f32 %v616, %v669
    %v672 = vtanh.pop %v671
    %v673 = vsub.f32 1.0, %v662
    %675 = vrot.lane.b32.xlu0 %v672, 96
    %v676 = vpop.permute.xlu0 %675
    %v678 = vmul.f32 %v673, %v676
    %v679 = vmul.f32 %v662, %v406
    %v680 = vadd.f32 %v678, %v679
    %682 = vrot.lane.b32.xlu0 %v651, 96
    %v683 = vpop.permute.xlu0 %682
    %vm685 = vcmask 253952
    %686 = vst.msk [vmem:[%s117] sm:$0x1] %vm685, %v683
    %688 = vrot.lane.b32.xlu0 %v680, 32
    %v689 = vpop.permute.xlu0 %688
    %691 = vst.msk [vmem:[%s119] sm:$0x1] %vm685, %v689
    %s692 = sld [smem:[#allocation2 + $0x1]]
    %s693 = sld [smem:[#allocation5 + $0x1]]
    %s694 = scalar_lea.vmem [#allocation11], %s692
    %v695 = vld [vmem:[%s694] sm:$0x1]
    %s696 = scalar_lea.vmem [#allocation12], %s693
    %v697 = vld [vmem:[%s696] sm:$0x1]
    %s698 = sld [smem:[#allocation7 + $0x4]]
    %s699 = scalar_lea.vmem [#allocation11], %s698
    %v700 = vld [vmem:[%s699] sm:$0x1]
    %s701 = sld [smem:[#allocation7 + $0x5]]
    %s702 = scalar_lea.vmem [#allocation11], %s701
    %v703 = vld [vmem:[%s702] sm:$0x1]
    %s704 = sld [smem:[#allocation7 + $0x6]]
    %s705 = scalar_lea.vmem [#allocation11], %s704
    %v706 = vld [vmem:[%s705] sm:$0x1]
    %s707 = sld [smem:[#allocation7 + $0x7]]
    %s708 = scalar_lea.vmem [#allocation11], %s707
    %v709 = vld [vmem:[%s708] sm:$0x1]
    %s710 = sld [smem:[#allocation8 + $0x4]]
    %s711 = scalar_lea.vmem [#allocation12], %s710
    %v712 = vld [vmem:[%s711] sm:$0x1]
    %s713 = sld [smem:[#allocation8 + $0x5]]
    %s714 = scalar_lea.vmem [#allocation12], %s713
    %v715 = vld [vmem:[%s714] sm:$0x1]
    %s716 = sld [smem:[#allocation8 + $0x6]]
    %s717 = scalar_lea.vmem [#allocation12], %s716
    %v718 = vld [vmem:[%s717] sm:$0x1]
    %s719 = sld [smem:[#allocation8 + $0x7]]
    %s720 = scalar_lea.vmem [#allocation12], %s719
    %v721 = vld [vmem:[%s720] sm:$0x1]
    %v723 = vrot.slane %v703, 7
    %v726 = vrot.slane %v706, 6
    %v729 = vrot.slane %v709, 5
    %v731 = vsel %vm154, %v700, %v723
    %v732 = vsel %vm156, %v731, %v726
    %v733 = vsel %vm158, %v732, %v729
    %v735 = vrot.slane %v712, 7
    %v738 = vrot.slane %v715, 6
    %v741 = vrot.slane %v718, 5
    %v744 = vrot.slane %v721, 4
    %v746 = vsel %vm154, %v697, %v735
    %v747 = vsel %vm156, %v746, %v738
    %v748 = vsel %vm158, %v747, %v741
    %v749 = vsel %vm175, %v748, %v744
    %v751 = vsel %vm104, %v695, 0
    %v754 = vsel %vm104, %v749, 0
    %756 = vmatprep.subr.mxu0 0.0
    %757 = vmatpush1.xpose.msra.mxu0 0.0
    %758 = vmatprep.subr.mxu0 0.0
    %759 = vmatpush1.xpose.msra.mxu0 0.0
    %760 = vmatprep.subr.mxu0 0.0
    %761 = vmatpush1.xpose.msra.mxu0 0.0
    %762 = vmatprep.subr.mxu0 0.0
    %763 = vmatpush1.xpose.msra.mxu0 0.0
    %764 = vmatprep.subr.mxu0 0.0
    %765 = vmatpush1.xpose.msra.mxu0 0.0
    %766 = vmatprep.subr.mxu0 0.0
    %767 = vmatpush1.xpose.msra.mxu0 0.0
    %768 = vmatprep.subr.mxu0 0.0
    %769 = vmatpush1.xpose.msra.mxu0 0.0
    %770 = vmatprep.subr.mxu0 0.0
    %771 = vmatpush1.xpose.msra.mxu0 0.0
    %772 = vmatprep.subr.mxu0 0.0
    %773 = vmatpush1.xpose.msra.mxu0 0.0
    %774 = vmatprep.subr.mxu0 0.0
    %775 = vmatpush1.xpose.msra.mxu0 0.0
    %776 = vmatprep.subr.mxu0 0.0
    %777 = vmatpush1.xpose.msra.mxu0 0.0
    %778 = vmatprep.subr.mxu0 0.0
    %779 = vmatpush1.xpose.msra.mxu0 0.0
    %780 = vmatprep.subr.mxu0 0.0
    %781 = vmatpush1.xpose.msra.mxu0 0.0
    %782 = vmatprep.subr.mxu0 0.0
    %783 = vmatpush1.xpose.msra.mxu0 0.0
    %784 = vmatprep.subr.mxu0 0.0
    %785 = vmatpush1.xpose.msra.mxu0 0.0
    %786 = vmatprep.subr.mxu0 0.0
    %787 = vmatpush1.xpose.msra.mxu0 %v754
    %788 = vmatprep.subr.mxu0 0.0
    %789 = vmatpush2.xpose.msra.mxu0 0.0
    %790 = vmatprep.subr.mxu0 0.0
    %791 = vmatpush2.xpose.msra.mxu0 0.0
    %792 = vmatprep.subr.mxu0 0.0
    %793 = vmatpush2.xpose.msra.mxu0 0.0
    %794 = vmatprep.subr.mxu0 0.0
    %795 = vmatpush2.xpose.msra.mxu0 0.0
    %796 = vmatprep.subr.mxu0 0.0
    %797 = vmatpush2.xpose.msra.mxu0 0.0
    %798 = vmatprep.subr.mxu0 0.0
    %799 = vmatpush2.xpose.msra.mxu0 0.0
    %800 = vmatprep.subr.mxu0 0.0
    %801 = vmatpush2.xpose.msra.mxu0 0.0
    %802 = vmatprep.subr.mxu0 0.0
    %803 = vmatpush2.xpose.msra.mxu0 0.0
    %804 = vmatprep.subr.mxu0 0.0
    %805 = vmatpush2.xpose.msra.mxu0 0.0
    %806 = vmatprep.subr.mxu0 0.0
    %807 = vmatpush2.xpose.msra.mxu0 0.0
    %808 = vmatprep.subr.mxu0 0.0
    %809 = vmatpush2.xpose.msra.mxu0 0.0
    %810 = vmatprep.subr.mxu0 0.0
    %811 = vmatpush2.xpose.msra.mxu0 0.0
    %812 = vmatprep.subr.mxu0 0.0
    %813 = vmatpush2.xpose.msra.mxu0 0.0
    %814 = vmatprep.subr.mxu0 0.0
    %815 = vmatpush2.xpose.msra.mxu0 0.0
    %816 = vmatprep.subr.mxu0 0.0
    %817 = vmatpush2.xpose.msra.mxu0 0.0
    %818 = vmatprep.subr.mxu0 0.0
    %819 = vmatpush2.xpose.msra.mxu0 0.0
    %820 = vmatprep.mubr.f32.mxu0 0.0
    %821 = vmatmul.mubr.f32.gmra.mxu0 %v751
    %v822 = vpop.f32.mrf.mxu0
    %v823 = vadd.f32 0.0, %v822
    %v824 = vpop.f32.mrf.mxu0
    %825 = vdwg.mxu0
    %v826 = vmax.f32 %v823, 0.0
    %v827 = vand.u32 2147483647, %v823
    %v828 = vsub.f32 0.0, %v827
    %v829 = vmul.f32 %v828, 1.442695
    %v830 = vpow.pop %v829
    %v831 = vadd.f32 %v830, 1.0
    %v832 = vlog2.pop %v831
    %v833 = vmul.f32 %v832, 0.6931472
    %v834 = vmul.f32 -0.5, %v830
    %v835 = vadd.f32 %v834, 1.0
    %v836 = vmul.f32 %v835, %v830
    %v837 = vand.u32 2147483647, %v830
    %vm838 = vcmp.lt.f32.partialorder %v837, 0.0004427343
    %v839 = vsel %vm838, %v836, %v833
    %v840 = vadd.f32 %v826, %v839
    %v842 = vsel %vm104, %v697, 0
    %v845 = vsel %vm104, %v733, 0
    %847 = vmatprep.subr.mxu0 0.0
    %848 = vmatpush1.xpose.msra.mxu0 0.0
    %849 = vmatprep.subr.mxu0 0.0
    %850 = vmatpush1.xpose.msra.mxu0 0.0
    %851 = vmatprep.subr.mxu0 0.0
    %852 = vmatpush1.xpose.msra.mxu0 0.0
    %853 = vmatprep.subr.mxu0 0.0
    %854 = vmatpush1.xpose.msra.mxu0 0.0
    %855 = vmatprep.subr.mxu0 0.0
    %856 = vmatpush1.xpose.msra.mxu0 0.0
    %857 = vmatprep.subr.mxu0 0.0
    %858 = vmatpush1.xpose.msra.mxu0 0.0
    %859 = vmatprep.subr.mxu0 0.0
    %860 = vmatpush1.xpose.msra.mxu0 0.0
    %861 = vmatprep.subr.mxu0 0.0
    %862 = vmatpush1.xpose.msra.mxu0 0.0
    %863 = vmatprep.subr.mxu0 0.0
    %864 = vmatpush1.xpose.msra.mxu0 0.0
    %865 = vmatprep.subr.mxu0 0.0
    %866 = vmatpush1.xpose.msra.mxu0 0.0
    %867 = vmatprep.subr.mxu0 0.0
    %868 = vmatpush1.xpose.msra.mxu0 0.0
    %869 = vmatprep.subr.mxu0 0.0
    %870 = vmatpush1.xpose.msra.mxu0 0.0
    %871 = vmatprep.subr.mxu0 0.0
    %872 = vmatpush1.xpose.msra.mxu0 0.0
    %873 = vmatprep.subr.mxu0 0.0
    %874 = vmatpush1.xpose.msra.mxu0 0.0
    %875 = vmatprep.subr.mxu0 0.0
    %876 = vmatpush1.xpose.msra.mxu0 0.0
    %877 = vmatprep.subr.mxu0 0.0
    %878 = vmatpush1.xpose.msra.mxu0 %v845
    %879 = vmatprep.subr.mxu0 0.0
    %880 = vmatpush2.xpose.msra.mxu0 0.0
    %881 = vmatprep.subr.mxu0 0.0
    %882 = vmatpush2.xpose.msra.mxu0 0.0
    %883 = vmatprep.subr.mxu0 0.0
    %884 = vmatpush2.xpose.msra.mxu0 0.0
    %885 = vmatprep.subr.mxu0 0.0
    %886 = vmatpush2.xpose.msra.mxu0 0.0
    %887 = vmatprep.subr.mxu0 0.0
    %888 = vmatpush2.xpose.msra.mxu0 0.0
    %889 = vmatprep.subr.mxu0 0.0
    %890 = vmatpush2.xpose.msra.mxu0 0.0
    %891 = vmatprep.subr.mxu0 0.0
    %892 = vmatpush2.xpose.msra.mxu0 0.0
    %893 = vmatprep.subr.mxu0 0.0
    %894 = vmatpush2.xpose.msra.mxu0 0.0
    %895 = vmatprep.subr.mxu0 0.0
    %896 = vmatpush2.xpose.msra.mxu0 0.0
    %897 = vmatprep.subr.mxu0 0.0
    %898 = vmatpush2.xpose.msra.mxu0 0.0
    %899 = vmatprep.subr.mxu0 0.0
    %900 = vmatpush2.xpose.msra.mxu0 0.0
    %901 = vmatprep.subr.mxu0 0.0
    %902 = vmatpush2.xpose.msra.mxu0 0.0
    %903 = vmatprep.subr.mxu0 0.0
    %904 = vmatpush2.xpose.msra.mxu0 0.0
    %905 = vmatprep.subr.mxu0 0.0
    %906 = vmatpush2.xpose.msra.mxu0 0.0
    %907 = vmatprep.subr.mxu0 0.0
    %908 = vmatpush2.xpose.msra.mxu0 0.0
    %909 = vmatprep.subr.mxu0 0.0
    %910 = vmatpush2.xpose.msra.mxu0 0.0
    %911 = vmatprep.mubr.f32.mxu0 0.0
    %912 = vmatmul.mubr.f32.gmra.mxu0 %v842
    %v913 = vpop.f32.mrf.mxu0
    %v914 = vadd.f32 0.0, %v913
    %v915 = vpop.f32.mrf.mxu0
    %916 = vdwg.mxu0
    %v917 = vmax.f32 %v914, 0.0
    %v918 = vand.u32 2147483647, %v914
    %v919 = vsub.f32 0.0, %v918
    %v920 = vmul.f32 %v919, 1.442695
    %v921 = vpow.pop %v920
    %v922 = vadd.f32 %v921, 1.0
    %v923 = vlog2.pop %v922
    %v924 = vmul.f32 %v923, 0.6931472
    %v925 = vmul.f32 -0.5, %v921
    %v926 = vadd.f32 %v925, 1.0
    %v927 = vmul.f32 %v926, %v921
    %v928 = vand.u32 2147483647, %v921
    %vm929 = vcmp.lt.f32.partialorder %v928, 0.0004427343
    %v930 = vsel %vm929, %v927, %v924
    %v931 = vadd.f32 %v917, %v930
    %v932 = vmax.f32 %v840, 1e-20
    %s933 = sld [smem:[#allocation10 + $0x1]]
    %v934 = vmul.f32 %v932, 2.0
    %v935 = vrcp.pop %v934
    %v936 = vmul.f32 3.1415927, %v935
    %v937 = vrsqrt.pop %v936
    %v938 = vmul.f32 %v936, %v937
    %vm939 = vcmp.eq.f32.partialorder %v936, inf
    %v940 = vsel %vm939, %v936, %v938
    %vm941 = vcmp.eq.f32.partialorder %v936, 0.0
    %v942 = vand.u32 %v936, 2147483648
    %v943 = vsel %vm941, %v942, %v940
    %v944 = vstv %s933
    %v945 = vsub.f32 %v943, %v944
    %v946 = vand.u32 2147483647, %v945
    %v947 = vadd.f32 %v374, %v946
    %v948 = vmul.f32 %v945, %v945
    %v949 = vadd.f32 %v376, %v948
    %v950 = vld [vmem:[%s5 + $0x1] sm:$0x1]
    %v951 = vmul.f32 %v931, %v950
    %v952 = vld [vmem:[%s6 + $0x1] sm:$0x1]
    %954 = vrot.lane.b32.xlu0 %v952, 1
    %v955 = vpop.permute.xlu0 %954
    %v957 = vmul.f32 %v840, %v955
    %959 = vrot.lane.b32.xlu0 %v957, 127
    %v960 = vpop.permute.xlu0 %959
    %v962 = vadd.f32 %v951, %v960
    %v963 = vsel %vm390, %v962, 0.0
    %964 = vadd.xlane.f32.xlu0 %v963
    %v965 = vpop.xlane.xlu0 %964
    %v966 = vlog2.pop %v932
    %v967 = vmul.f32 %v966, 0.6931472
    %v968 = vsub.f32 0.0, %v967
    %v969 = vadd.f32 %v968, %v965
    %v970 = vadd.f32 %v398, %v969
    %971 = vrot.lane.b32.xlu0 %v695, 32
    %v972 = vpop.permute.xlu0 %971
    %974 = vrot.lane.b32.xlu0 %v695, 64
    %v975 = vpop.permute.xlu0 %974
    %977 = vrot.lane.b32.xlu0 %v697, 96
    %v978 = vpop.permute.xlu0 %977
    %v980 = vsel %vm104, %v697, %v972
    %v981 = vsel %vm409, %v980, %v975
    %v982 = vsel %vm411, %v981, %v978
    %v983 = vld [vmem:[%s9] sm:$0xff]
    %v984 = vld [vmem:[%s9 + $0x8] sm:$0xff]
    %v985 = vld [vmem:[%s9 + $0x10] sm:$0xff]
    %v986 = vld [vmem:[%s9 + $0x18] sm:$0xff]
    %v987 = vld [vmem:[%s9 + $0x20] sm:$0xff]
    %v988 = vld [vmem:[%s9 + $0x28] sm:$0xff]
    %v989 = vld [vmem:[%s9 + $0x30] sm:$0xff]
    %v990 = vld [vmem:[%s9 + $0x38] sm:$0xff]
    %v991 = vld [vmem:[%s9 + $0x40] sm:$0xff]
    %v992 = vld [vmem:[%s9 + $0x48] sm:$0xff]
    %v993 = vld [vmem:[%s9 + $0x50] sm:$0xff]
    %v994 = vld [vmem:[%s9 + $0x58] sm:$0xff]
    %v995 = vld [vmem:[%s9 + $0x60] sm:$0xff]
    %v996 = vld [vmem:[%s9 + $0x68] sm:$0xff]
    %v997 = vld [vmem:[%s9 + $0x70] sm:$0xff]
    %v998 = vld [vmem:[%s9 + $0x78] sm:$0xff]
    %v999 = vld [vmem:[%s9 + $0x80] sm:$0xff]
    %v1000 = vld [vmem:[%s9 + $0x88] sm:$0xff]
    %v1001 = vld [vmem:[%s9 + $0x90] sm:$0xff]
    %v1002 = vld [vmem:[%s9 + $0x98] sm:$0xff]
    %v1003 = vld [vmem:[%s9 + $0xa0] sm:$0xff]
    %v1004 = vld [vmem:[%s9 + $0xa8] sm:$0xff]
    %v1005 = vld [vmem:[%s9 + $0xb0] sm:$0xff]
    %v1006 = vld [vmem:[%s9 + $0xb8] sm:$0xff]
    %v1007 = vld [vmem:[%s9 + $0xc0] sm:$0xff]
    %v1008 = vld [vmem:[%s9 + $0xc8] sm:$0xff]
    %v1009 = vld [vmem:[%s9 + $0xd0] sm:$0xff]
    %v1010 = vld [vmem:[%s9 + $0xd8] sm:$0xff]
    %v1011 = vld [vmem:[%s9 + $0xe0] sm:$0xff]
    %v1012 = vld [vmem:[%s9 + $0xe8] sm:$0xff]
    %v1013 = vld [vmem:[%s9 + $0xf0] sm:$0xff]
    %v1014 = vld [vmem:[%s9 + $0xf8] sm:$0xff]
    %v1015 = vld [vmem:[%s9 + $0x100] sm:$0xff]
    %v1016 = vld [vmem:[%s9 + $0x108] sm:$0xff]
    %v1017 = vld [vmem:[%s9 + $0x110] sm:$0xff]
    %v1018 = vld [vmem:[%s9 + $0x118] sm:$0xff]
    %v1019 = vld [vmem:[%s9 + $0x120] sm:$0xff]
    %v1020 = vld [vmem:[%s9 + $0x128] sm:$0xff]
    %v1021 = vld [vmem:[%s9 + $0x130] sm:$0xff]
    %v1022 = vld [vmem:[%s9 + $0x138] sm:$0xff]
    %v1023 = vld [vmem:[%s9 + $0x140] sm:$0xff]
    %v1024 = vld [vmem:[%s9 + $0x148] sm:$0xff]
    %v1025 = vld [vmem:[%s9 + $0x150] sm:$0xff]
    %v1026 = vld [vmem:[%s9 + $0x158] sm:$0xff]
    %v1027 = vld [vmem:[%s9 + $0x160] sm:$0xff]
    %v1028 = vld [vmem:[%s9 + $0x168] sm:$0xff]
    %v1029 = vld [vmem:[%s9 + $0x170] sm:$0xff]
    %v1030 = vld [vmem:[%s9 + $0x178] sm:$0xff]
    %v1031 = vld [vmem:[%s10] sm:$0x7]
    %v1033 = vlaneseq
    %v1034 = vshrl.u32 %v1033, 7
    %v1035 = vsub.s32 0, %v1034
    %v1036 = vrot.slane %v1031, %v1035
    %v1037 = vlaneseq
    %v1038 = vshrl.u32 %v1037, 7
    %v1039 = vsub.s32 1, %v1038
    %v1040 = vrot.slane %v1031, %v1039
    %v1041 = vlaneseq
    %v1042 = vshrl.u32 %v1041, 7
    %v1043 = vsub.s32 2, %v1042
    %v1044 = vrot.slane %v1031, %v1043
    %1048 = vmatprep.subr.mxu0 %v1029
    %1049 = vmatpush1.msra.mxu0 %v1028
    %1050 = vmatprep.subr.mxu0 %v1026
    %1051 = vmatpush1.msra.mxu0 %v1025
    %1052 = vmatprep.subr.mxu0 %v1023
    %1053 = vmatpush1.msra.mxu0 %v1022
    %1054 = vmatprep.subr.mxu0 %v1020
    %1055 = vmatpush1.msra.mxu0 %v1019
    %1056 = vmatprep.subr.mxu0 %v1017
    %1057 = vmatpush1.msra.mxu0 %v1016
    %1058 = vmatprep.subr.mxu0 %v1014
    %1059 = vmatpush1.msra.mxu0 %v1013
    %1060 = vmatprep.subr.mxu0 %v1011
    %1061 = vmatpush1.msra.mxu0 %v1010
    %1062 = vmatprep.subr.mxu0 %v1008
    %1063 = vmatpush1.msra.mxu0 %v1007
    %1064 = vmatprep.subr.mxu0 %v1005
    %1065 = vmatpush1.msra.mxu0 %v1004
    %1066 = vmatprep.subr.mxu0 %v1002
    %1067 = vmatpush1.msra.mxu0 %v1001
    %1068 = vmatprep.subr.mxu0 %v999
    %1069 = vmatpush1.msra.mxu0 %v998
    %1070 = vmatprep.subr.mxu0 %v996
    %1071 = vmatpush1.msra.mxu0 %v995
    %1072 = vmatprep.subr.mxu0 %v993
    %1073 = vmatpush1.msra.mxu0 %v992
    %1074 = vmatprep.subr.mxu0 %v990
    %1075 = vmatpush1.msra.mxu0 %v989
    %1076 = vmatprep.subr.mxu0 %v987
    %1077 = vmatpush1.msra.mxu0 %v986
    %1078 = vmatprep.subr.mxu0 %v984
    %1079 = vmatpush1.msra.mxu0 %v983
    %1080 = vmatprep.subr.mxu0 0.0
    %1081 = vmatpush2.msra.mxu0 0.0
    %1082 = vmatprep.subr.mxu0 0.0
    %1083 = vmatpush2.msra.mxu0 0.0
    %1084 = vmatprep.subr.mxu0 0.0
    %1085 = vmatpush2.msra.mxu0 0.0
    %1086 = vmatprep.subr.mxu0 0.0
    %1087 = vmatpush2.msra.mxu0 0.0
    %1088 = vmatprep.subr.mxu0 0.0
    %1089 = vmatpush2.msra.mxu0 0.0
    %1090 = vmatprep.subr.mxu0 0.0
    %1091 = vmatpush2.msra.mxu0 0.0
    %1092 = vmatprep.subr.mxu0 0.0
    %1093 = vmatpush2.msra.mxu0 0.0
    %1094 = vmatprep.subr.mxu0 0.0
    %1095 = vmatpush2.msra.mxu0 0.0
    %1096 = vmatprep.subr.mxu0 0.0
    %1097 = vmatpush2.msra.mxu0 0.0
    %1098 = vmatprep.subr.mxu0 0.0
    %1099 = vmatpush2.msra.mxu0 0.0
    %1100 = vmatprep.subr.mxu0 0.0
    %1101 = vmatpush2.msra.mxu0 0.0
    %1102 = vmatprep.subr.mxu0 0.0
    %1103 = vmatpush2.msra.mxu0 0.0
    %1104 = vmatprep.subr.mxu0 0.0
    %1105 = vmatpush2.msra.mxu0 0.0
    %1106 = vmatprep.subr.mxu0 0.0
    %1107 = vmatpush2.msra.mxu0 0.0
    %1108 = vmatprep.subr.mxu0 0.0
    %1109 = vmatpush2.msra.mxu0 0.0
    %1110 = vmatprep.subr.mxu0 0.0
    %1111 = vmatpush2.msra.mxu0 0.0
    %1112 = vmatprep.mubr.f32.mxu0 0.0
    %1113 = vmatmul.mubr.f32.gmra.mxu0 %v982
    %v1114 = vpop.f32.mrf.mxu0
    %v1115 = vadd.f32 %v1036, %v1114
    %v1116 = vpop.f32.mrf.mxu0
    %v1117 = vadd.f32 %v1040, %v1116
    %1118 = vdwg.mxu0
    %1119 = vmatprep.subr.mxu0 0.0
    %1120 = vmatpush1.msra.mxu0 %v1030
    %1121 = vmatprep.subr.mxu0 0.0
    %1122 = vmatpush1.msra.mxu0 %v1027
    %1123 = vmatprep.subr.mxu0 0.0
    %1124 = vmatpush1.msra.mxu0 %v1024
    %1125 = vmatprep.subr.mxu0 0.0
    %1126 = vmatpush1.msra.mxu0 %v1021
    %1127 = vmatprep.subr.mxu0 0.0
    %1128 = vmatpush1.msra.mxu0 %v1018
    %1129 = vmatprep.subr.mxu0 0.0
    %1130 = vmatpush1.msra.mxu0 %v1015
    %1131 = vmatprep.subr.mxu0 0.0
    %1132 = vmatpush1.msra.mxu0 %v1012
    %1133 = vmatprep.subr.mxu0 0.0
    %1134 = vmatpush1.msra.mxu0 %v1009
    %1135 = vmatprep.subr.mxu0 0.0
    %1136 = vmatpush1.msra.mxu0 %v1006
    %1137 = vmatprep.subr.mxu0 0.0
    %1138 = vmatpush1.msra.mxu0 %v1003
    %1139 = vmatprep.subr.mxu0 0.0
    %1140 = vmatpush1.msra.mxu0 %v1000
    %1141 = vmatprep.subr.mxu0 0.0
    %1142 = vmatpush1.msra.mxu0 %v997
    %1143 = vmatprep.subr.mxu0 0.0
    %1144 = vmatpush1.msra.mxu0 %v994
    %1145 = vmatprep.subr.mxu0 0.0
    %1146 = vmatpush1.msra.mxu0 %v991
    %1147 = vmatprep.subr.mxu0 0.0
    %1148 = vmatpush1.msra.mxu0 %v988
    %1149 = vmatprep.subr.mxu0 0.0
    %1150 = vmatpush1.msra.mxu0 %v985
    %1151 = vmatprep.subr.mxu0 0.0
    %1152 = vmatpush2.msra.mxu0 0.0
    %1153 = vmatprep.subr.mxu0 0.0
    %1154 = vmatpush2.msra.mxu0 0.0
    %1155 = vmatprep.subr.mxu0 0.0
    %1156 = vmatpush2.msra.mxu0 0.0
    %1157 = vmatprep.subr.mxu0 0.0
    %1158 = vmatpush2.msra.mxu0 0.0
    %1159 = vmatprep.subr.mxu0 0.0
    %1160 = vmatpush2.msra.mxu0 0.0
    %1161 = vmatprep.subr.mxu0 0.0
    %1162 = vmatpush2.msra.mxu0 0.0
    %1163 = vmatprep.subr.mxu0 0.0
    %1164 = vmatpush2.msra.mxu0 0.0
    %1165 = vmatprep.subr.mxu0 0.0
    %1166 = vmatpush2.msra.mxu0 0.0
    %1167 = vmatprep.subr.mxu0 0.0
    %1168 = vmatpush2.msra.mxu0 0.0
    %1169 = vmatprep.subr.mxu0 0.0
    %1170 = vmatpush2.msra.mxu0 0.0
    %1171 = vmatprep.subr.mxu0 0.0
    %1172 = vmatpush2.msra.mxu0 0.0
    %1173 = vmatprep.subr.mxu0 0.0
    %1174 = vmatpush2.msra.mxu0 0.0
    %1175 = vmatprep.subr.mxu0 0.0
    %1176 = vmatpush2.msra.mxu0 0.0
    %1177 = vmatprep.subr.mxu0 0.0
    %1178 = vmatpush2.msra.mxu0 0.0
    %1179 = vmatprep.subr.mxu0 0.0
    %1180 = vmatpush2.msra.mxu0 0.0
    %1181 = vmatprep.subr.mxu0 0.0
    %1182 = vmatpush2.msra.mxu0 0.0
    %1183 = vmatprep.mubr.f32.mxu0 0.0
    %1184 = vmatmul.mubr.f32.gmra.mxu0 %v982
    %v1185 = vpop.f32.mrf.mxu0
    %v1186 = vadd.f32 %v1044, %v1185
    %v1187 = vpop.f32.mrf.mxu0
    %1188 = vdwg.mxu0
    %1191 = vrot.lane.b32.xlu0 %v1115, 32
    %v1192 = vpop.permute.xlu0 %1191
    %1193 = vrot.lane.b32.xlu0 %v1117, 32
    %v1194 = vpop.permute.xlu0 %1193
    %v1195 = vsel %vm104, %v1192, %v1194
    %v1197 = vadd.f32 %v1115, %v1195
    %v1198 = vxor.u32 %v1197, 2147483648
    %v1199 = vmul.f32 %v1198, 1.442695
    %v1200 = vpow.pop %v1199
    %v1201 = vadd.f32 %v1200, 1.0
    %v1202 = vrcp.pop %v1201
    %v1203 = vmul.f32 1.0, %v1202
    %1204 = vrot.lane.b32.xlu0 %v1117, 96
    %v1205 = vpop.permute.xlu0 %1204
    %v1207 = vmul.f32 %v1203, %v1205
    %1209 = vrot.lane.b32.xlu0 %v1207, 64
    %v1210 = vpop.permute.xlu0 %1209
    %v1212 = vadd.f32 %v1115, %v1210
    %v1213 = vtanh.pop %v1212
    %v1214 = vsub.f32 1.0, %v1203
    %1216 = vrot.lane.b32.xlu0 %v1213, 96
    %v1217 = vpop.permute.xlu0 %1216
    %v1219 = vmul.f32 %v1214, %v1217
    %v1220 = vmul.f32 %v1203, %v972
    %v1221 = vadd.f32 %v1219, %v1220
    %1223 = vrot.lane.b32.xlu0 %v1186, 32
    %v1224 = vpop.permute.xlu0 %1223
    %v1226 = vadd.f32 %v1117, %v1224
    %v1227 = vxor.u32 %v1226, 2147483648
    %v1228 = vmul.f32 %v1227, 1.442695
    %v1229 = vpow.pop %v1228
    %v1230 = vadd.f32 %v1229, 1.0
    %v1231 = vrcp.pop %v1230
    %v1232 = vmul.f32 1.0, %v1231
    %1233 = vrot.lane.b32.xlu0 %v1186, 96
    %v1234 = vpop.permute.xlu0 %1233
    %v1236 = vmul.f32 %v1232, %v1234
    %1238 = vrot.lane.b32.xlu0 %v1236, 64
    %v1239 = vpop.permute.xlu0 %1238
    %v1241 = vadd.f32 %v1186, %v1239
    %v1242 = vtanh.pop %v1241
    %v1243 = vsub.f32 1.0, %v1232
    %1245 = vrot.lane.b32.xlu0 %v1242, 96
    %v1246 = vpop.permute.xlu0 %1245
    %v1248 = vmul.f32 %v1243, %v1246
    %v1249 = vmul.f32 %v1232, %v978
    %v1250 = vadd.f32 %v1248, %v1249
    %1252 = vrot.lane.b32.xlu0 %v1221, 96
    %v1253 = vpop.permute.xlu0 %1252
    %1255 = vst.msk [vmem:[%s694] sm:$0x1] %vm685, %v1253
    %1257 = vrot.lane.b32.xlu0 %v1250, 32
    %v1258 = vpop.permute.xlu0 %1257
    %1260 = vst.msk [vmem:[%s696] sm:$0x1] %vm685, %v1258
    %s1261 = sld [smem:[#allocation2 + $0x2]]
    %s1262 = sld [smem:[#allocation5 + $0x2]]
    %s1263 = scalar_lea.vmem [#allocation11], %s1261
    %v1264 = vld [vmem:[%s1263] sm:$0x1]
    %s1265 = scalar_lea.vmem [#allocation12], %s1262
    %v1266 = vld [vmem:[%s1265] sm:$0x1]
    %s1267 = sld [smem:[#allocation7 + $0x8]]
    %s1268 = scalar_lea.vmem [#allocation11], %s1267
    %v1269 = vld [vmem:[%s1268] sm:$0x1]
    %s1270 = sld [smem:[#allocation7 + $0x9]]
    %s1271 = scalar_lea.vmem [#allocation11], %s1270
    %v1272 = vld [vmem:[%s1271] sm:$0x1]
    %s1273 = sld [smem:[#allocation7 + $0xa]]
    %s1274 = scalar_lea.vmem [#allocation11], %s1273
    %v1275 = vld [vmem:[%s1274] sm:$0x1]
    %s1276 = sld [smem:[#allocation7 + $0xb]]
    %s1277 = scalar_lea.vmem [#allocation11], %s1276
    %v1278 = vld [vmem:[%s1277] sm:$0x1]
    %s1279 = sld [smem:[#allocation8 + $0x8]]
    %s1280 = scalar_lea.vmem [#allocation12], %s1279
    %v1281 = vld [vmem:[%s1280] sm:$0x1]
    %s1282 = sld [smem:[#allocation8 + $0x9]]
    %s1283 = scalar_lea.vmem [#allocation12], %s1282
    %v1284 = vld [vmem:[%s1283] sm:$0x1]
    %s1285 = sld [smem:[#allocation8 + $0xa]]
    %s1286 = scalar_lea.vmem [#allocation12], %s1285
    %v1287 = vld [vmem:[%s1286] sm:$0x1]
    %s1288 = sld [smem:[#allocation8 + $0xb]]
    %s1289 = scalar_lea.vmem [#allocation12], %s1288
    %v1290 = vld [vmem:[%s1289] sm:$0x1]
    %v1292 = vrot.slane %v1272, 7
    %v1295 = vrot.slane %v1275, 6
    %v1298 = vrot.slane %v1278, 5
    %v1300 = vsel %vm154, %v1269, %v1292
    %v1301 = vsel %vm156, %v1300, %v1295
    %v1302 = vsel %vm158, %v1301, %v1298
    %v1304 = vrot.slane %v1281, 7
    %v1307 = vrot.slane %v1284, 6
    %v1310 = vrot.slane %v1287, 5
    %v1313 = vrot.slane %v1290, 4
    %v1315 = vsel %vm154, %v1266, %v1304
    %v1316 = vsel %vm156, %v1315, %v1307
    %v1317 = vsel %vm158, %v1316, %v1310
    %v1318 = vsel %vm175, %v1317, %v1313
    %v1320 = vsel %vm104, %v1264, 0
    %v1323 = vsel %vm104, %v1318, 0
    %1325 = vmatprep.subr.mxu0 0.0
    %1326 = vmatpush1.xpose.msra.mxu0 0.0
    %1327 = vmatprep.subr.mxu0 0.0
    %1328 = vmatpush1.xpose.msra.mxu0 0.0
    %1329 = vmatprep.subr.mxu0 0.0
    %1330 = vmatpush1.xpose.msra.mxu0 0.0
    %1331 = vmatprep.subr.mxu0 0.0
    %1332 = vmatpush1.xpose.msra.mxu0 0.0
    %1333 = vmatprep.subr.mxu0 0.0
    %1334 = vmatpush1.xpose.msra.mxu0 0.0
    %1335 = vmatprep.subr.mxu0 0.0
    %1336 = vmatpush1.xpose.msra.mxu0 0.0
    %1337 = vmatprep.subr.mxu0 0.0
    %1338 = vmatpush1.xpose.msra.mxu0 0.0
    %1339 = vmatprep.subr.mxu0 0.0
    %1340 = vmatpush1.xpose.msra.mxu0 0.0
    %1341 = vmatprep.subr.mxu0 0.0
    %1342 = vmatpush1.xpose.msra.mxu0 0.0
    %1343 = vmatprep.subr.mxu0 0.0
    %1344 = vmatpush1.xpose.msra.mxu0 0.0
    %1345 = vmatprep.subr.mxu0 0.0
    %1346 = vmatpush1.xpose.msra.mxu0 0.0
    %1347 = vmatprep.subr.mxu0 0.0
    %1348 = vmatpush1.xpose.msra.mxu0 0.0
    %1349 = vmatprep.subr.mxu0 0.0
    %1350 = vmatpush1.xpose.msra.mxu0 0.0
    %1351 = vmatprep.subr.mxu0 0.0
    %1352 = vmatpush1.xpose.msra.mxu0 0.0
    %1353 = vmatprep.subr.mxu0 0.0
    %1354 = vmatpush1.xpose.msra.mxu0 0.0
    %1355 = vmatprep.subr.mxu0 0.0
    %1356 = vmatpush1.xpose.msra.mxu0 %v1323
    %1357 = vmatprep.subr.mxu0 0.0
    %1358 = vmatpush2.xpose.msra.mxu0 0.0
    %1359 = vmatprep.subr.mxu0 0.0
    %1360 = vmatpush2.xpose.msra.mxu0 0.0
    %1361 = vmatprep.subr.mxu0 0.0
    %1362 = vmatpush2.xpose.msra.mxu0 0.0
    %1363 = vmatprep.subr.mxu0 0.0
    %1364 = vmatpush2.xpose.msra.mxu0 0.0
    %1365 = vmatprep.subr.mxu0 0.0
    %1366 = vmatpush2.xpose.msra.mxu0 0.0
    %1367 = vmatprep.subr.mxu0 0.0
    %1368 = vmatpush2.xpose.msra.mxu0 0.0
    %1369 = vmatprep.subr.mxu0 0.0
    %1370 = vmatpush2.xpose.msra.mxu0 0.0
    %1371 = vmatprep.subr.mxu0 0.0
    %1372 = vmatpush2.xpose.msra.mxu0 0.0
    %1373 = vmatprep.subr.mxu0 0.0
    %1374 = vmatpush2.xpose.msra.mxu0 0.0
    %1375 = vmatprep.subr.mxu0 0.0
    %1376 = vmatpush2.xpose.msra.mxu0 0.0
    %1377 = vmatprep.subr.mxu0 0.0
    %1378 = vmatpush2.xpose.msra.mxu0 0.0
    %1379 = vmatprep.subr.mxu0 0.0
    %1380 = vmatpush2.xpose.msra.mxu0 0.0
    %1381 = vmatprep.subr.mxu0 0.0
    %1382 = vmatpush2.xpose.msra.mxu0 0.0
    %1383 = vmatprep.subr.mxu0 0.0
    %1384 = vmatpush2.xpose.msra.mxu0 0.0
    %1385 = vmatprep.subr.mxu0 0.0
    %1386 = vmatpush2.xpose.msra.mxu0 0.0
    %1387 = vmatprep.subr.mxu0 0.0
    %1388 = vmatpush2.xpose.msra.mxu0 0.0
    %1389 = vmatprep.mubr.f32.mxu0 0.0
    %1390 = vmatmul.mubr.f32.gmra.mxu0 %v1320
    %v1391 = vpop.f32.mrf.mxu0
    %v1392 = vadd.f32 0.0, %v1391
    %v1393 = vpop.f32.mrf.mxu0
    %1394 = vdwg.mxu0
    %v1395 = vmax.f32 %v1392, 0.0
    %v1396 = vand.u32 2147483647, %v1392
    %v1397 = vsub.f32 0.0, %v1396
    %v1398 = vmul.f32 %v1397, 1.442695
    %v1399 = vpow.pop %v1398
    %v1400 = vadd.f32 %v1399, 1.0
    %v1401 = vlog2.pop %v1400
    %v1402 = vmul.f32 %v1401, 0.6931472
    %v1403 = vmul.f32 -0.5, %v1399
    %v1404 = vadd.f32 %v1403, 1.0
    %v1405 = vmul.f32 %v1404, %v1399
    %v1406 = vand.u32 2147483647, %v1399
    %vm1407 = vcmp.lt.f32.partialorder %v1406, 0.0004427343
    %v1408 = vsel %vm1407, %v1405, %v1402
    %v1409 = vadd.f32 %v1395, %v1408
    %v1411 = vsel %vm104, %v1266, 0
    %v1414 = vsel %vm104, %v1302, 0
    %1416 = vmatprep.subr.mxu0 0.0
    %1417 = vmatpush1.xpose.msra.mxu0 0.0
    %1418 = vmatprep.subr.mxu0 0.0
    %1419 = vmatpush1.xpose.msra.mxu0 0.0
    %1420 = vmatprep.subr.mxu0 0.0
    %1421 = vmatpush1.xpose.msra.mxu0 0.0
    %1422 = vmatprep.subr.mxu0 0.0
    %1423 = vmatpush1.xpose.msra.mxu0 0.0
    %1424 = vmatprep.subr.mxu0 0.0
    %1425 = vmatpush1.xpose.msra.mxu0 0.0
    %1426 = vmatprep.subr.mxu0 0.0
    %1427 = vmatpush1.xpose.msra.mxu0 0.0
    %1428 = vmatprep.subr.mxu0 0.0
    %1429 = vmatpush1.xpose.msra.mxu0 0.0
    %1430 = vmatprep.subr.mxu0 0.0
    %1431 = vmatpush1.xpose.msra.mxu0 0.0
    %1432 = vmatprep.subr.mxu0 0.0
    %1433 = vmatpush1.xpose.msra.mxu0 0.0
    %1434 = vmatprep.subr.mxu0 0.0
    %1435 = vmatpush1.xpose.msra.mxu0 0.0
    %1436 = vmatprep.subr.mxu0 0.0
    %1437 = vmatpush1.xpose.msra.mxu0 0.0
    %1438 = vmatprep.subr.mxu0 0.0
    %1439 = vmatpush1.xpose.msra.mxu0 0.0
    %1440 = vmatprep.subr.mxu0 0.0
    %1441 = vmatpush1.xpose.msra.mxu0 0.0
    %1442 = vmatprep.subr.mxu0 0.0
    %1443 = vmatpush1.xpose.msra.mxu0 0.0
    %1444 = vmatprep.subr.mxu0 0.0
    %1445 = vmatpush1.xpose.msra.mxu0 0.0
    %1446 = vmatprep.subr.mxu0 0.0
    %1447 = vmatpush1.xpose.msra.mxu0 %v1414
    %1448 = vmatprep.subr.mxu0 0.0
    %1449 = vmatpush2.xpose.msra.mxu0 0.0
    %1450 = vmatprep.subr.mxu0 0.0
    %1451 = vmatpush2.xpose.msra.mxu0 0.0
    %1452 = vmatprep.subr.mxu0 0.0
    %1453 = vmatpush2.xpose.msra.mxu0 0.0
    %1454 = vmatprep.subr.mxu0 0.0
    %1455 = vmatpush2.xpose.msra.mxu0 0.0
    %1456 = vmatprep.subr.mxu0 0.0
    %1457 = vmatpush2.xpose.msra.mxu0 0.0
    %1458 = vmatprep.subr.mxu0 0.0
    %1459 = vmatpush2.xpose.msra.mxu0 0.0
    %1460 = vmatprep.subr.mxu0 0.0
    %1461 = vmatpush2.xpose.msra.mxu0 0.0
    %1462 = vmatprep.subr.mxu0 0.0
    %1463 = vmatpush2.xpose.msra.mxu0 0.0
    %1464 = vmatprep.subr.mxu0 0.0
    %1465 = vmatpush2.xpose.msra.mxu0 0.0
    %1466 = vmatprep.subr.mxu0 0.0
    %1467 = vmatpush2.xpose.msra.mxu0 0.0
    %1468 = vmatprep.subr.mxu0 0.0
    %1469 = vmatpush2.xpose.msra.mxu0 0.0
    %1470 = vmatprep.subr.mxu0 0.0
    %1471 = vmatpush2.xpose.msra.mxu0 0.0
    %1472 = vmatprep.subr.mxu0 0.0
    %1473 = vmatpush2.xpose.msra.mxu0 0.0
    %1474 = vmatprep.subr.mxu0 0.0
    %1475 = vmatpush2.xpose.msra.mxu0 0.0
    %1476 = vmatprep.subr.mxu0 0.0
    %1477 = vmatpush2.xpose.msra.mxu0 0.0
    %1478 = vmatprep.subr.mxu0 0.0
    %1479 = vmatpush2.xpose.msra.mxu0 0.0
    %1480 = vmatprep.mubr.f32.mxu0 0.0
    %1481 = vmatmul.mubr.f32.gmra.mxu0 %v1411
    %v1482 = vpop.f32.mrf.mxu0
    %v1483 = vadd.f32 0.0, %v1482
    %v1484 = vpop.f32.mrf.mxu0
    %1485 = vdwg.mxu0
    %v1486 = vmax.f32 %v1483, 0.0
    %v1487 = vand.u32 2147483647, %v1483
    %v1488 = vsub.f32 0.0, %v1487
    %v1489 = vmul.f32 %v1488, 1.442695
    %v1490 = vpow.pop %v1489
    %v1491 = vadd.f32 %v1490, 1.0
    %v1492 = vlog2.pop %v1491
    %v1493 = vmul.f32 %v1492, 0.6931472
    %v1494 = vmul.f32 -0.5, %v1490
    %v1495 = vadd.f32 %v1494, 1.0
    %v1496 = vmul.f32 %v1495, %v1490
    %v1497 = vand.u32 2147483647, %v1490
    %vm1498 = vcmp.lt.f32.partialorder %v1497, 0.0004427343
    %v1499 = vsel %vm1498, %v1496, %v1493
    %v1500 = vadd.f32 %v1486, %v1499
    %v1501 = vmax.f32 %v1409, 1e-20
    %s1502 = sld [smem:[#allocation10 + $0x2]]
    %v1503 = vmul.f32 %v1501, 2.0
    %v1504 = vrcp.pop %v1503
    %v1505 = vmul.f32 3.1415927, %v1504
    %v1506 = vrsqrt.pop %v1505
    %v1507 = vmul.f32 %v1505, %v1506
    %vm1508 = vcmp.eq.f32.partialorder %v1505, inf
    %v1509 = vsel %vm1508, %v1505, %v1507
    %vm1510 = vcmp.eq.f32.partialorder %v1505, 0.0
    %v1511 = vand.u32 %v1505, 2147483648
    %v1512 = vsel %vm1510, %v1511, %v1509
    %v1513 = vstv %s1502
    %v1514 = vsub.f32 %v1512, %v1513
    %v1515 = vand.u32 2147483647, %v1514
    %v1516 = vadd.f32 %v947, %v1515
    %v1517 = vmul.f32 %v1514, %v1514
    %v1518 = vadd.f32 %v949, %v1517
    %v1519 = vld [vmem:[%s5 + $0x2] sm:$0x1]
    %v1520 = vmul.f32 %v1500, %v1519
    %v1521 = vld [vmem:[%s6 + $0x2] sm:$0x1]
    %1523 = vrot.lane.b32.xlu0 %v1521, 1
    %v1524 = vpop.permute.xlu0 %1523
    %v1526 = vmul.f32 %v1409, %v1524
    %1528 = vrot.lane.b32.xlu0 %v1526, 127
    %v1529 = vpop.permute.xlu0 %1528
    %v1531 = vadd.f32 %v1520, %v1529
    %v1532 = vsel %vm390, %v1531, 0.0
    %1533 = vadd.xlane.f32.xlu0 %v1532
    %v1534 = vpop.xlane.xlu0 %1533
    %v1535 = vlog2.pop %v1501
    %v1536 = vmul.f32 %v1535, 0.6931472
    %v1537 = vsub.f32 0.0, %v1536
    %v1538 = vadd.f32 %v1537, %v1534
    %v1539 = vadd.f32 %v970, %v1538
    %1540 = vrot.lane.b32.xlu0 %v1264, 32
    %v1541 = vpop.permute.xlu0 %1540
    %1543 = vrot.lane.b32.xlu0 %v1264, 64
    %v1544 = vpop.permute.xlu0 %1543
    %1546 = vrot.lane.b32.xlu0 %v1266, 96
    %v1547 = vpop.permute.xlu0 %1546
    %v1549 = vsel %vm104, %v1266, %v1541
    %v1550 = vsel %vm409, %v1549, %v1544
    %v1551 = vsel %vm411, %v1550, %v1547
    %v1552 = vld [vmem:[%s9] sm:$0xff]
    %v1553 = vld [vmem:[%s9 + $0x8] sm:$0xff]
    %v1554 = vld [vmem:[%s9 + $0x10] sm:$0xff]
    %v1555 = vld [vmem:[%s9 + $0x18] sm:$0xff]
    %v1556 = vld [vmem:[%s9 + $0x20] sm:$0xff]
    %v1557 = vld [vmem:[%s9 + $0x28] sm:$0xff]
    %v1558 = vld [vmem:[%s9 + $0x30] sm:$0xff]
    %v1559 = vld [vmem:[%s9 + $0x38] sm:$0xff]
    %v1560 = vld [vmem:[%s9 + $0x40] sm:$0xff]
    %v1561 = vld [vmem:[%s9 + $0x48] sm:$0xff]
    %v1562 = vld [vmem:[%s9 + $0x50] sm:$0xff]
    %v1563 = vld [vmem:[%s9 + $0x58] sm:$0xff]
    %v1564 = vld [vmem:[%s9 + $0x60] sm:$0xff]
    %v1565 = vld [vmem:[%s9 + $0x68] sm:$0xff]
    %v1566 = vld [vmem:[%s9 + $0x70] sm:$0xff]
    %v1567 = vld [vmem:[%s9 + $0x78] sm:$0xff]
    %v1568 = vld [vmem:[%s9 + $0x80] sm:$0xff]
    %v1569 = vld [vmem:[%s9 + $0x88] sm:$0xff]
    %v1570 = vld [vmem:[%s9 + $0x90] sm:$0xff]
    %v1571 = vld [vmem:[%s9 + $0x98] sm:$0xff]
    %v1572 = vld [vmem:[%s9 + $0xa0] sm:$0xff]
    %v1573 = vld [vmem:[%s9 + $0xa8] sm:$0xff]
    %v1574 = vld [vmem:[%s9 + $0xb0] sm:$0xff]
    %v1575 = vld [vmem:[%s9 + $0xb8] sm:$0xff]
    %v1576 = vld [vmem:[%s9 + $0xc0] sm:$0xff]
    %v1577 = vld [vmem:[%s9 + $0xc8] sm:$0xff]
    %v1578 = vld [vmem:[%s9 + $0xd0] sm:$0xff]
    %v1579 = vld [vmem:[%s9 + $0xd8] sm:$0xff]
    %v1580 = vld [vmem:[%s9 + $0xe0] sm:$0xff]
    %v1581 = vld [vmem:[%s9 + $0xe8] sm:$0xff]
    %v1582 = vld [vmem:[%s9 + $0xf0] sm:$0xff]
    %v1583 = vld [vmem:[%s9 + $0xf8] sm:$0xff]
    %v1584 = vld [vmem:[%s9 + $0x100] sm:$0xff]
    %v1585 = vld [vmem:[%s9 + $0x108] sm:$0xff]
    %v1586 = vld [vmem:[%s9 + $0x110] sm:$0xff]
    %v1587 = vld [vmem:[%s9 + $0x118] sm:$0xff]
    %v1588 = vld [vmem:[%s9 + $0x120] sm:$0xff]
    %v1589 = vld [vmem:[%s9 + $0x128] sm:$0xff]
    %v1590 = vld [vmem:[%s9 + $0x130] sm:$0xff]
    %v1591 = vld [vmem:[%s9 + $0x138] sm:$0xff]
    %v1592 = vld [vmem:[%s9 + $0x140] sm:$0xff]
    %v1593 = vld [vmem:[%s9 + $0x148] sm:$0xff]
    %v1594 = vld [vmem:[%s9 + $0x150] sm:$0xff]
    %v1595 = vld [vmem:[%s9 + $0x158] sm:$0xff]
    %v1596 = vld [vmem:[%s9 + $0x160] sm:$0xff]
    %v1597 = vld [vmem:[%s9 + $0x168] sm:$0xff]
    %v1598 = vld [vmem:[%s9 + $0x170] sm:$0xff]
    %v1599 = vld [vmem:[%s9 + $0x178] sm:$0xff]
    %v1600 = vld [vmem:[%s10] sm:$0x7]
    %v1602 = vlaneseq
    %v1603 = vshrl.u32 %v1602, 7
    %v1604 = vsub.s32 0, %v1603
    %v1605 = vrot.slane %v1600, %v1604
    %v1606 = vlaneseq
    %v1607 = vshrl.u32 %v1606, 7
    %v1608 = vsub.s32 1, %v1607
    %v1609 = vrot.slane %v1600, %v1608
    %v1610 = vlaneseq
    %v1611 = vshrl.u32 %v1610, 7
    %v1612 = vsub.s32 2, %v1611
    %v1613 = vrot.slane %v1600, %v1612
    %1617 = vmatprep.subr.mxu0 %v1598
    %1618 = vmatpush1.msra.mxu0 %v1597
    %1619 = vmatprep.subr.mxu0 %v1595
    %1620 = vmatpush1.msra.mxu0 %v1594
    %1621 = vmatprep.subr.mxu0 %v1592
    %1622 = vmatpush1.msra.mxu0 %v1591
    %1623 = vmatprep.subr.mxu0 %v1589
    %1624 = vmatpush1.msra.mxu0 %v1588
    %1625 = vmatprep.subr.mxu0 %v1586
    %1626 = vmatpush1.msra.mxu0 %v1585
    %1627 = vmatprep.subr.mxu0 %v1583
    %1628 = vmatpush1.msra.mxu0 %v1582
    %1629 = vmatprep.subr.mxu0 %v1580
    %1630 = vmatpush1.msra.mxu0 %v1579
    %1631 = vmatprep.subr.mxu0 %v1577
    %1632 = vmatpush1.msra.mxu0 %v1576
    %1633 = vmatprep.subr.mxu0 %v1574
    %1634 = vmatpush1.msra.mxu0 %v1573
    %1635 = vmatprep.subr.mxu0 %v1571
    %1636 = vmatpush1.msra.mxu0 %v1570
    %1637 = vmatprep.subr.mxu0 %v1568
    %1638 = vmatpush1.msra.mxu0 %v1567
    %1639 = vmatprep.subr.mxu0 %v1565
    %1640 = vmatpush1.msra.mxu0 %v1564
    %1641 = vmatprep.subr.mxu0 %v1562
    %1642 = vmatpush1.msra.mxu0 %v1561
    %1643 = vmatprep.subr.mxu0 %v1559
    %1644 = vmatpush1.msra.mxu0 %v1558
    %1645 = vmatprep.subr.mxu0 %v1556
    %1646 = vmatpush1.msra.mxu0 %v1555
    %1647 = vmatprep.subr.mxu0 %v1553
    %1648 = vmatpush1.msra.mxu0 %v1552
    %1649 = vmatprep.subr.mxu0 0.0
    %1650 = vmatpush2.msra.mxu0 0.0
    %1651 = vmatprep.subr.mxu0 0.0
    %1652 = vmatpush2.msra.mxu0 0.0
    %1653 = vmatprep.subr.mxu0 0.0
    %1654 = vmatpush2.msra.mxu0 0.0
    %1655 = vmatprep.subr.mxu0 0.0
    %1656 = vmatpush2.msra.mxu0 0.0
    %1657 = vmatprep.subr.mxu0 0.0
    %1658 = vmatpush2.msra.mxu0 0.0
    %1659 = vmatprep.subr.mxu0 0.0
    %1660 = vmatpush2.msra.mxu0 0.0
    %1661 = vmatprep.subr.mxu0 0.0
    %1662 = vmatpush2.msra.mxu0 0.0
    %1663 = vmatprep.subr.mxu0 0.0
    %1664 = vmatpush2.msra.mxu0 0.0
    %1665 = vmatprep.subr.mxu0 0.0
    %1666 = vmatpush2.msra.mxu0 0.0
    %1667 = vmatprep.subr.mxu0 0.0
    %1668 = vmatpush2.msra.mxu0 0.0
    %1669 = vmatprep.subr.mxu0 0.0
    %1670 = vmatpush2.msra.mxu0 0.0
    %1671 = vmatprep.subr.mxu0 0.0
    %1672 = vmatpush2.msra.mxu0 0.0
    %1673 = vmatprep.subr.mxu0 0.0
    %1674 = vmatpush2.msra.mxu0 0.0
    %1675 = vmatprep.subr.mxu0 0.0
    %1676 = vmatpush2.msra.mxu0 0.0
    %1677 = vmatprep.subr.mxu0 0.0
    %1678 = vmatpush2.msra.mxu0 0.0
    %1679 = vmatprep.subr.mxu0 0.0
    %1680 = vmatpush2.msra.mxu0 0.0
    %1681 = vmatprep.mubr.f32.mxu0 0.0
    %1682 = vmatmul.mubr.f32.gmra.mxu0 %v1551
    %v1683 = vpop.f32.mrf.mxu0
    %v1684 = vadd.f32 %v1605, %v1683
    %v1685 = vpop.f32.mrf.mxu0
    %v1686 = vadd.f32 %v1609, %v1685
    %1687 = vdwg.mxu0
    %1688 = vmatprep.subr.mxu0 0.0
    %1689 = vmatpush1.msra.mxu0 %v1599
    %1690 = vmatprep.subr.mxu0 0.0
    %1691 = vmatpush1.msra.mxu0 %v1596
    %1692 = vmatprep.subr.mxu0 0.0
    %1693 = vmatpush1.msra.mxu0 %v1593
    %1694 = vmatprep.subr.mxu0 0.0
    %1695 = vmatpush1.msra.mxu0 %v1590
    %1696 = vmatprep.subr.mxu0 0.0
    %1697 = vmatpush1.msra.mxu0 %v1587
    %1698 = vmatprep.subr.mxu0 0.0
    %1699 = vmatpush1.msra.mxu0 %v1584
    %1700 = vmatprep.subr.mxu0 0.0
    %1701 = vmatpush1.msra.mxu0 %v1581
    %1702 = vmatprep.subr.mxu0 0.0
    %1703 = vmatpush1.msra.mxu0 %v1578
    %1704 = vmatprep.subr.mxu0 0.0
    %1705 = vmatpush1.msra.mxu0 %v1575
    %1706 = vmatprep.subr.mxu0 0.0
    %1707 = vmatpush1.msra.mxu0 %v1572
    %1708 = vmatprep.subr.mxu0 0.0
    %1709 = vmatpush1.msra.mxu0 %v1569
    %1710 = vmatprep.subr.mxu0 0.0
    %1711 = vmatpush1.msra.mxu0 %v1566
    %1712 = vmatprep.subr.mxu0 0.0
    %1713 = vmatpush1.msra.mxu0 %v1563
    %1714 = vmatprep.subr.mxu0 0.0
    %1715 = vmatpush1.msra.mxu0 %v1560
    %1716 = vmatprep.subr.mxu0 0.0
    %1717 = vmatpush1.msra.mxu0 %v1557
    %1718 = vmatprep.subr.mxu0 0.0
    %1719 = vmatpush1.msra.mxu0 %v1554
    %1720 = vmatprep.subr.mxu0 0.0
    %1721 = vmatpush2.msra.mxu0 0.0
    %1722 = vmatprep.subr.mxu0 0.0
    %1723 = vmatpush2.msra.mxu0 0.0
    %1724 = vmatprep.subr.mxu0 0.0
    %1725 = vmatpush2.msra.mxu0 0.0
    %1726 = vmatprep.subr.mxu0 0.0
    %1727 = vmatpush2.msra.mxu0 0.0
    %1728 = vmatprep.subr.mxu0 0.0
    %1729 = vmatpush2.msra.mxu0 0.0
    %1730 = vmatprep.subr.mxu0 0.0
    %1731 = vmatpush2.msra.mxu0 0.0
    %1732 = vmatprep.subr.mxu0 0.0
    %1733 = vmatpush2.msra.mxu0 0.0
    %1734 = vmatprep.subr.mxu0 0.0
    %1735 = vmatpush2.msra.mxu0 0.0
    %1736 = vmatprep.subr.mxu0 0.0
    %1737 = vmatpush2.msra.mxu0 0.0
    %1738 = vmatprep.subr.mxu0 0.0
    %1739 = vmatpush2.msra.mxu0 0.0
    %1740 = vmatprep.subr.mxu0 0.0
    %1741 = vmatpush2.msra.mxu0 0.0
    %1742 = vmatprep.subr.mxu0 0.0
    %1743 = vmatpush2.msra.mxu0 0.0
    %1744 = vmatprep.subr.mxu0 0.0
    %1745 = vmatpush2.msra.mxu0 0.0
    %1746 = vmatprep.subr.mxu0 0.0
    %1747 = vmatpush2.msra.mxu0 0.0
    %1748 = vmatprep.subr.mxu0 0.0
    %1749 = vmatpush2.msra.mxu0 0.0
    %1750 = vmatprep.subr.mxu0 0.0
    %1751 = vmatpush2.msra.mxu0 0.0
    %1752 = vmatprep.mubr.f32.mxu0 0.0
    %1753 = vmatmul.mubr.f32.gmra.mxu0 %v1551
    %v1754 = vpop.f32.mrf.mxu0
    %v1755 = vadd.f32 %v1613, %v1754
    %v1756 = vpop.f32.mrf.mxu0
    %1757 = vdwg.mxu0
    %1760 = vrot.lane.b32.xlu0 %v1684, 32
    %v1761 = vpop.permute.xlu0 %1760
    %1762 = vrot.lane.b32.xlu0 %v1686, 32
    %v1763 = vpop.permute.xlu0 %1762
    %v1764 = vsel %vm104, %v1761, %v1763
    %v1766 = vadd.f32 %v1684, %v1764
    %v1767 = vxor.u32 %v1766, 2147483648
    %v1768 = vmul.f32 %v1767, 1.442695
    %v1769 = vpow.pop %v1768
    %v1770 = vadd.f32 %v1769, 1.0
    %v1771 = vrcp.pop %v1770
    %v1772 = vmul.f32 1.0, %v1771
    %1773 = vrot.lane.b32.xlu0 %v1686, 96
    %v1774 = vpop.permute.xlu0 %1773
    %v1776 = vmul.f32 %v1772, %v1774
    %1778 = vrot.lane.b32.xlu0 %v1776, 64
    %v1779 = vpop.permute.xlu0 %1778
    %v1781 = vadd.f32 %v1684, %v1779
    %v1782 = vtanh.pop %v1781
    %v1783 = vsub.f32 1.0, %v1772
    %1785 = vrot.lane.b32.xlu0 %v1782, 96
    %v1786 = vpop.permute.xlu0 %1785
    %v1788 = vmul.f32 %v1783, %v1786
    %v1789 = vmul.f32 %v1772, %v1541
    %v1790 = vadd.f32 %v1788, %v1789
    %1792 = vrot.lane.b32.xlu0 %v1755, 32
    %v1793 = vpop.permute.xlu0 %1792
    %v1795 = vadd.f32 %v1686, %v1793
    %v1796 = vxor.u32 %v1795, 2147483648
    %v1797 = vmul.f32 %v1796, 1.442695
    %v1798 = vpow.pop %v1797
    %v1799 = vadd.f32 %v1798, 1.0
    %v1800 = vrcp.pop %v1799
    %v1801 = vmul.f32 1.0, %v1800
    %1802 = vrot.lane.b32.xlu0 %v1755, 96
    %v1803 = vpop.permute.xlu0 %1802
    %v1805 = vmul.f32 %v1801, %v1803
    %1807 = vrot.lane.b32.xlu0 %v1805, 64
    %v1808 = vpop.permute.xlu0 %1807
    %v1810 = vadd.f32 %v1755, %v1808
    %v1811 = vtanh.pop %v1810
    %v1812 = vsub.f32 1.0, %v1801
    %1814 = vrot.lane.b32.xlu0 %v1811, 96
    %v1815 = vpop.permute.xlu0 %1814
    %v1817 = vmul.f32 %v1812, %v1815
    %v1818 = vmul.f32 %v1801, %v1547
    %v1819 = vadd.f32 %v1817, %v1818
    %1821 = vrot.lane.b32.xlu0 %v1790, 96
    %v1822 = vpop.permute.xlu0 %1821
    %1824 = vst.msk [vmem:[%s1263] sm:$0x1] %vm685, %v1822
    %1826 = vrot.lane.b32.xlu0 %v1819, 32
    %v1827 = vpop.permute.xlu0 %1826
    %1829 = vst.msk [vmem:[%s1265] sm:$0x1] %vm685, %v1827
    %s1830 = sld [smem:[#allocation2 + $0x3]]
    %s1831 = sld [smem:[#allocation5 + $0x3]]
    %s1832 = scalar_lea.vmem [#allocation11], %s1830
    %v1833 = vld [vmem:[%s1832] sm:$0x1]
    %s1834 = scalar_lea.vmem [#allocation12], %s1831
    %v1835 = vld [vmem:[%s1834] sm:$0x1]
    %s1836 = sld [smem:[#allocation7 + $0xc]]
    %s1837 = scalar_lea.vmem [#allocation11], %s1836
    %v1838 = vld [vmem:[%s1837] sm:$0x1]
    %s1839 = sld [smem:[#allocation7 + $0xd]]
    %s1840 = scalar_lea.vmem [#allocation11], %s1839
    %v1841 = vld [vmem:[%s1840] sm:$0x1]
    %s1842 = sld [smem:[#allocation7 + $0xe]]
    %s1843 = scalar_lea.vmem [#allocation11], %s1842
    %v1844 = vld [vmem:[%s1843] sm:$0x1]
    %s1845 = sld [smem:[#allocation7 + $0xf]]
    %s1846 = scalar_lea.vmem [#allocation11], %s1845
    %v1847 = vld [vmem:[%s1846] sm:$0x1]
    %s1848 = sld [smem:[#allocation8 + $0xc]]
    %s1849 = scalar_lea.vmem [#allocation12], %s1848
    %v1850 = vld [vmem:[%s1849] sm:$0x1]
    %s1851 = sld [smem:[#allocation8 + $0xd]]
    %s1852 = scalar_lea.vmem [#allocation12], %s1851
    %v1853 = vld [vmem:[%s1852] sm:$0x1]
    %s1854 = sld [smem:[#allocation8 + $0xe]]
    %s1855 = scalar_lea.vmem [#allocation12], %s1854
    %v1856 = vld [vmem:[%s1855] sm:$0x1]
    %s1857 = sld [smem:[#allocation8 + $0xf]]
    %s1858 = scalar_lea.vmem [#allocation12], %s1857
    %v1859 = vld [vmem:[%s1858] sm:$0x1]
    %v1861 = vrot.slane %v1841, 7
    %v1864 = vrot.slane %v1844, 6
    %v1867 = vrot.slane %v1847, 5
    %v1869 = vsel %vm154, %v1838, %v1861
    %v1870 = vsel %vm156, %v1869, %v1864
    %v1871 = vsel %vm158, %v1870, %v1867
    %v1873 = vrot.slane %v1850, 7
    %v1876 = vrot.slane %v1853, 6
    %v1879 = vrot.slane %v1856, 5
    %v1882 = vrot.slane %v1859, 4
    %v1884 = vsel %vm154, %v1835, %v1873
    %v1885 = vsel %vm156, %v1884, %v1876
    %v1886 = vsel %vm158, %v1885, %v1879
    %v1887 = vsel %vm175, %v1886, %v1882
    %v1889 = vsel %vm104, %v1833, 0
    %v1892 = vsel %vm104, %v1887, 0
    %1894 = vmatprep.subr.mxu0 0.0
    %1895 = vmatpush1.xpose.msra.mxu0 0.0
    %1896 = vmatprep.subr.mxu0 0.0
    %1897 = vmatpush1.xpose.msra.mxu0 0.0
    %1898 = vmatprep.subr.mxu0 0.0
    %1899 = vmatpush1.xpose.msra.mxu0 0.0
    %1900 = vmatprep.subr.mxu0 0.0
    %1901 = vmatpush1.xpose.msra.mxu0 0.0
    %1902 = vmatprep.subr.mxu0 0.0
    %1903 = vmatpush1.xpose.msra.mxu0 0.0
    %1904 = vmatprep.subr.mxu0 0.0
    %1905 = vmatpush1.xpose.msra.mxu0 0.0
    %1906 = vmatprep.subr.mxu0 0.0
    %1907 = vmatpush1.xpose.msra.mxu0 0.0
    %1908 = vmatprep.subr.mxu0 0.0
    %1909 = vmatpush1.xpose.msra.mxu0 0.0
    %1910 = vmatprep.subr.mxu0 0.0
    %1911 = vmatpush1.xpose.msra.mxu0 0.0
    %1912 = vmatprep.subr.mxu0 0.0
    %1913 = vmatpush1.xpose.msra.mxu0 0.0
    %1914 = vmatprep.subr.mxu0 0.0
    %1915 = vmatpush1.xpose.msra.mxu0 0.0
    %1916 = vmatprep.subr.mxu0 0.0
    %1917 = vmatpush1.xpose.msra.mxu0 0.0
    %1918 = vmatprep.subr.mxu0 0.0
    %1919 = vmatpush1.xpose.msra.mxu0 0.0
    %1920 = vmatprep.subr.mxu0 0.0
    %1921 = vmatpush1.xpose.msra.mxu0 0.0
    %1922 = vmatprep.subr.mxu0 0.0
    %1923 = vmatpush1.xpose.msra.mxu0 0.0
    %1924 = vmatprep.subr.mxu0 0.0
    %1925 = vmatpush1.xpose.msra.mxu0 %v1892
    %1926 = vmatprep.subr.mxu0 0.0
    %1927 = vmatpush2.xpose.msra.mxu0 0.0
    %1928 = vmatprep.subr.mxu0 0.0
    %1929 = vmatpush2.xpose.msra.mxu0 0.0
    %1930 = vmatprep.subr.mxu0 0.0
    %1931 = vmatpush2.xpose.msra.mxu0 0.0
    %1932 = vmatprep.subr.mxu0 0.0
    %1933 = vmatpush2.xpose.msra.mxu0 0.0
    %1934 = vmatprep.subr.mxu0 0.0
    %1935 = vmatpush2.xpose.msra.mxu0 0.0
    %1936 = vmatprep.subr.mxu0 0.0
    %1937 = vmatpush2.xpose.msra.mxu0 0.0
    %1938 = vmatprep.subr.mxu0 0.0
    %1939 = vmatpush2.xpose.msra.mxu0 0.0
    %1940 = vmatprep.subr.mxu0 0.0
    %1941 = vmatpush2.xpose.msra.mxu0 0.0
    %1942 = vmatprep.subr.mxu0 0.0
    %1943 = vmatpush2.xpose.msra.mxu0 0.0
    %1944 = vmatprep.subr.mxu0 0.0
    %1945 = vmatpush2.xpose.msra.mxu0 0.0
    %1946 = vmatprep.subr.mxu0 0.0
    %1947 = vmatpush2.xpose.msra.mxu0 0.0
    %1948 = vmatprep.subr.mxu0 0.0
    %1949 = vmatpush2.xpose.msra.mxu0 0.0
    %1950 = vmatprep.subr.mxu0 0.0
    %1951 = vmatpush2.xpose.msra.mxu0 0.0
    %1952 = vmatprep.subr.mxu0 0.0
    %1953 = vmatpush2.xpose.msra.mxu0 0.0
    %1954 = vmatprep.subr.mxu0 0.0
    %1955 = vmatpush2.xpose.msra.mxu0 0.0
    %1956 = vmatprep.subr.mxu0 0.0
    %1957 = vmatpush2.xpose.msra.mxu0 0.0
    %1958 = vmatprep.mubr.f32.mxu0 0.0
    %1959 = vmatmul.mubr.f32.gmra.mxu0 %v1889
    %v1960 = vpop.f32.mrf.mxu0
    %v1961 = vadd.f32 0.0, %v1960
    %v1962 = vpop.f32.mrf.mxu0
    %1963 = vdwg.mxu0
    %v1964 = vmax.f32 %v1961, 0.0
    %v1965 = vand.u32 2147483647, %v1961
    %v1966 = vsub.f32 0.0, %v1965
    %v1967 = vmul.f32 %v1966, 1.442695
    %v1968 = vpow.pop %v1967
    %v1969 = vadd.f32 %v1968, 1.0
    %v1970 = vlog2.pop %v1969
    %v1971 = vmul.f32 %v1970, 0.6931472
    %v1972 = vmul.f32 -0.5, %v1968
    %v1973 = vadd.f32 %v1972, 1.0
    %v1974 = vmul.f32 %v1973, %v1968
    %v1975 = vand.u32 2147483647, %v1968
    %vm1976 = vcmp.lt.f32.partialorder %v1975, 0.0004427343
    %v1977 = vsel %vm1976, %v1974, %v1971
    %v1978 = vadd.f32 %v1964, %v1977
    %v1980 = vsel %vm104, %v1835, 0
    %v1983 = vsel %vm104, %v1871, 0
    %1985 = vmatprep.subr.mxu0 0.0
    %1986 = vmatpush1.xpose.msra.mxu0 0.0
    %1987 = vmatprep.subr.mxu0 0.0
    %1988 = vmatpush1.xpose.msra.mxu0 0.0
    %1989 = vmatprep.subr.mxu0 0.0
    %1990 = vmatpush1.xpose.msra.mxu0 0.0
    %1991 = vmatprep.subr.mxu0 0.0
    %1992 = vmatpush1.xpose.msra.mxu0 0.0
    %1993 = vmatprep.subr.mxu0 0.0
    %1994 = vmatpush1.xpose.msra.mxu0 0.0
    %1995 = vmatprep.subr.mxu0 0.0
    %1996 = vmatpush1.xpose.msra.mxu0 0.0
    %1997 = vmatprep.subr.mxu0 0.0
    %1998 = vmatpush1.xpose.msra.mxu0 0.0
    %1999 = vmatprep.subr.mxu0 0.0
    %2000 = vmatpush1.xpose.msra.mxu0 0.0
    %2001 = vmatprep.subr.mxu0 0.0
    %2002 = vmatpush1.xpose.msra.mxu0 0.0
    %2003 = vmatprep.subr.mxu0 0.0
    %2004 = vmatpush1.xpose.msra.mxu0 0.0
    %2005 = vmatprep.subr.mxu0 0.0
    %2006 = vmatpush1.xpose.msra.mxu0 0.0
    %2007 = vmatprep.subr.mxu0 0.0
    %2008 = vmatpush1.xpose.msra.mxu0 0.0
    %2009 = vmatprep.subr.mxu0 0.0
    %2010 = vmatpush1.xpose.msra.mxu0 0.0
    %2011 = vmatprep.subr.mxu0 0.0
    %2012 = vmatpush1.xpose.msra.mxu0 0.0
    %2013 = vmatprep.subr.mxu0 0.0
    %2014 = vmatpush1.xpose.msra.mxu0 0.0
    %2015 = vmatprep.subr.mxu0 0.0
    %2016 = vmatpush1.xpose.msra.mxu0 %v1983
    %2017 = vmatprep.subr.mxu0 0.0
    %2018 = vmatpush2.xpose.msra.mxu0 0.0
    %2019 = vmatprep.subr.mxu0 0.0
    %2020 = vmatpush2.xpose.msra.mxu0 0.0
    %2021 = vmatprep.subr.mxu0 0.0
    %2022 = vmatpush2.xpose.msra.mxu0 0.0
    %2023 = vmatprep.subr.mxu0 0.0
    %2024 = vmatpush2.xpose.msra.mxu0 0.0
    %2025 = vmatprep.subr.mxu0 0.0
    %2026 = vmatpush2.xpose.msra.mxu0 0.0
    %2027 = vmatprep.subr.mxu0 0.0
    %2028 = vmatpush2.xpose.msra.mxu0 0.0
    %2029 = vmatprep.subr.mxu0 0.0
    %2030 = vmatpush2.xpose.msra.mxu0 0.0
    %2031 = vmatprep.subr.mxu0 0.0
    %2032 = vmatpush2.xpose.msra.mxu0 0.0
    %2033 = vmatprep.subr.mxu0 0.0
    %2034 = vmatpush2.xpose.msra.mxu0 0.0
    %2035 = vmatprep.subr.mxu0 0.0
    %2036 = vmatpush2.xpose.msra.mxu0 0.0
    %2037 = vmatprep.subr.mxu0 0.0
    %2038 = vmatpush2.xpose.msra.mxu0 0.0
    %2039 = vmatprep.subr.mxu0 0.0
    %2040 = vmatpush2.xpose.msra.mxu0 0.0
    %2041 = vmatprep.subr.mxu0 0.0
    %2042 = vmatpush2.xpose.msra.mxu0 0.0
    %2043 = vmatprep.subr.mxu0 0.0
    %2044 = vmatpush2.xpose.msra.mxu0 0.0
    %2045 = vmatprep.subr.mxu0 0.0
    %2046 = vmatpush2.xpose.msra.mxu0 0.0
    %2047 = vmatprep.subr.mxu0 0.0
    %2048 = vmatpush2.xpose.msra.mxu0 0.0
    %2049 = vmatprep.mubr.f32.mxu0 0.0
    %2050 = vmatmul.mubr.f32.gmra.mxu0 %v1980
    %v2051 = vpop.f32.mrf.mxu0
    %v2052 = vadd.f32 0.0, %v2051
    %v2053 = vpop.f32.mrf.mxu0
    %2054 = vdwg.mxu0
    %v2055 = vmax.f32 %v2052, 0.0
    %v2056 = vand.u32 2147483647, %v2052
    %v2057 = vsub.f32 0.0, %v2056
    %v2058 = vmul.f32 %v2057, 1.442695
    %v2059 = vpow.pop %v2058
    %v2060 = vadd.f32 %v2059, 1.0
    %v2061 = vlog2.pop %v2060
    %v2062 = vmul.f32 %v2061, 0.6931472
    %v2063 = vmul.f32 -0.5, %v2059
    %v2064 = vadd.f32 %v2063, 1.0
    %v2065 = vmul.f32 %v2064, %v2059
    %v2066 = vand.u32 2147483647, %v2059
    %vm2067 = vcmp.lt.f32.partialorder %v2066, 0.0004427343
    %v2068 = vsel %vm2067, %v2065, %v2062
    %v2069 = vadd.f32 %v2055, %v2068
    %v2070 = vmax.f32 %v1978, 1e-20
    %s2071 = sld [smem:[#allocation10 + $0x3]]
    %v2072 = vmul.f32 %v2070, 2.0
    %v2073 = vrcp.pop %v2072
    %v2074 = vmul.f32 3.1415927, %v2073
    %v2075 = vrsqrt.pop %v2074
    %v2076 = vmul.f32 %v2074, %v2075
    %vm2077 = vcmp.eq.f32.partialorder %v2074, inf
    %v2078 = vsel %vm2077, %v2074, %v2076
    %vm2079 = vcmp.eq.f32.partialorder %v2074, 0.0
    %v2080 = vand.u32 %v2074, 2147483648
    %v2081 = vsel %vm2079, %v2080, %v2078
    %v2082 = vstv %s2071
    %v2083 = vsub.f32 %v2081, %v2082
    %v2084 = vand.u32 2147483647, %v2083
    %v2085 = vadd.f32 %v1516, %v2084
    %v2086 = vmul.f32 %v2083, %v2083
    %v2087 = vadd.f32 %v1518, %v2086
    %v2088 = vld [vmem:[%s5 + $0x3] sm:$0x1]
    %v2089 = vmul.f32 %v2069, %v2088
    %v2090 = vld [vmem:[%s6 + $0x3] sm:$0x1]
    %2092 = vrot.lane.b32.xlu0 %v2090, 1
    %v2093 = vpop.permute.xlu0 %2092
    %v2095 = vmul.f32 %v1978, %v2093
    %2097 = vrot.lane.b32.xlu0 %v2095, 127
    %v2098 = vpop.permute.xlu0 %2097
    %v2100 = vadd.f32 %v2089, %v2098
    %v2101 = vsel %vm390, %v2100, 0.0
    %2102 = vadd.xlane.f32.xlu0 %v2101
    %v2103 = vpop.xlane.xlu0 %2102
    %v2104 = vlog2.pop %v2070
    %v2105 = vmul.f32 %v2104, 0.6931472
    %v2106 = vsub.f32 0.0, %v2105
    %v2107 = vadd.f32 %v2106, %v2103
    %v2108 = vadd.f32 %v1539, %v2107
    %2109 = vrot.lane.b32.xlu0 %v1833, 32
    %v2110 = vpop.permute.xlu0 %2109
    %2112 = vrot.lane.b32.xlu0 %v1833, 64
    %v2113 = vpop.permute.xlu0 %2112
    %2115 = vrot.lane.b32.xlu0 %v1835, 96
    %v2116 = vpop.permute.xlu0 %2115
    %v2118 = vsel %vm104, %v1835, %v2110
    %v2119 = vsel %vm409, %v2118, %v2113
    %v2120 = vsel %vm411, %v2119, %v2116
    %v2121 = vld [vmem:[%s9] sm:$0xff]
    %v2122 = vld [vmem:[%s9 + $0x8] sm:$0xff]
    %v2123 = vld [vmem:[%s9 + $0x10] sm:$0xff]
    %v2124 = vld [vmem:[%s9 + $0x18] sm:$0xff]
    %v2125 = vld [vmem:[%s9 + $0x20] sm:$0xff]
    %v2126 = vld [vmem:[%s9 + $0x28] sm:$0xff]
    %v2127 = vld [vmem:[%s9 + $0x30] sm:$0xff]
    %v2128 = vld [vmem:[%s9 + $0x38] sm:$0xff]
    %v2129 = vld [vmem:[%s9 + $0x40] sm:$0xff]
    %v2130 = vld [vmem:[%s9 + $0x48] sm:$0xff]
    %v2131 = vld [vmem:[%s9 + $0x50] sm:$0xff]
    %v2132 = vld [vmem:[%s9 + $0x58] sm:$0xff]
    %v2133 = vld [vmem:[%s9 + $0x60] sm:$0xff]
    %v2134 = vld [vmem:[%s9 + $0x68] sm:$0xff]
    %v2135 = vld [vmem:[%s9 + $0x70] sm:$0xff]
    %v2136 = vld [vmem:[%s9 + $0x78] sm:$0xff]
    %v2137 = vld [vmem:[%s9 + $0x80] sm:$0xff]
    %v2138 = vld [vmem:[%s9 + $0x88] sm:$0xff]
    %v2139 = vld [vmem:[%s9 + $0x90] sm:$0xff]
    %v2140 = vld [vmem:[%s9 + $0x98] sm:$0xff]
    %v2141 = vld [vmem:[%s9 + $0xa0] sm:$0xff]
    %v2142 = vld [vmem:[%s9 + $0xa8] sm:$0xff]
    %v2143 = vld [vmem:[%s9 + $0xb0] sm:$0xff]
    %v2144 = vld [vmem:[%s9 + $0xb8] sm:$0xff]
    %v2145 = vld [vmem:[%s9 + $0xc0] sm:$0xff]
    %v2146 = vld [vmem:[%s9 + $0xc8] sm:$0xff]
    %v2147 = vld [vmem:[%s9 + $0xd0] sm:$0xff]
    %v2148 = vld [vmem:[%s9 + $0xd8] sm:$0xff]
    %v2149 = vld [vmem:[%s9 + $0xe0] sm:$0xff]
    %v2150 = vld [vmem:[%s9 + $0xe8] sm:$0xff]
    %v2151 = vld [vmem:[%s9 + $0xf0] sm:$0xff]
    %v2152 = vld [vmem:[%s9 + $0xf8] sm:$0xff]
    %v2153 = vld [vmem:[%s9 + $0x100] sm:$0xff]
    %v2154 = vld [vmem:[%s9 + $0x108] sm:$0xff]
    %v2155 = vld [vmem:[%s9 + $0x110] sm:$0xff]
    %v2156 = vld [vmem:[%s9 + $0x118] sm:$0xff]
    %v2157 = vld [vmem:[%s9 + $0x120] sm:$0xff]
    %v2158 = vld [vmem:[%s9 + $0x128] sm:$0xff]
    %v2159 = vld [vmem:[%s9 + $0x130] sm:$0xff]
    %v2160 = vld [vmem:[%s9 + $0x138] sm:$0xff]
    %v2161 = vld [vmem:[%s9 + $0x140] sm:$0xff]
    %v2162 = vld [vmem:[%s9 + $0x148] sm:$0xff]
    %v2163 = vld [vmem:[%s9 + $0x150] sm:$0xff]
    %v2164 = vld [vmem:[%s9 + $0x158] sm:$0xff]
    %v2165 = vld [vmem:[%s9 + $0x160] sm:$0xff]
    %v2166 = vld [vmem:[%s9 + $0x168] sm:$0xff]
    %v2167 = vld [vmem:[%s9 + $0x170] sm:$0xff]
    %v2168 = vld [vmem:[%s9 + $0x178] sm:$0xff]
    %v2169 = vld [vmem:[%s10] sm:$0x7]
    %v2171 = vlaneseq
    %v2172 = vshrl.u32 %v2171, 7
    %v2173 = vsub.s32 0, %v2172
    %v2174 = vrot.slane %v2169, %v2173
    %v2175 = vlaneseq
    %v2176 = vshrl.u32 %v2175, 7
    %v2177 = vsub.s32 1, %v2176
    %v2178 = vrot.slane %v2169, %v2177
    %v2179 = vlaneseq
    %v2180 = vshrl.u32 %v2179, 7
    %v2181 = vsub.s32 2, %v2180
    %v2182 = vrot.slane %v2169, %v2181
    %2186 = vmatprep.subr.mxu0 %v2167
    %2187 = vmatpush1.msra.mxu0 %v2166
    %2188 = vmatprep.subr.mxu0 %v2164
    %2189 = vmatpush1.msra.mxu0 %v2163
    %2190 = vmatprep.subr.mxu0 %v2161
    %2191 = vmatpush1.msra.mxu0 %v2160
    %2192 = vmatprep.subr.mxu0 %v2158
    %2193 = vmatpush1.msra.mxu0 %v2157
    %2194 = vmatprep.subr.mxu0 %v2155
    %2195 = vmatpush1.msra.mxu0 %v2154
    %2196 = vmatprep.subr.mxu0 %v2152
    %2197 = vmatpush1.msra.mxu0 %v2151
    %2198 = vmatprep.subr.mxu0 %v2149
    %2199 = vmatpush1.msra.mxu0 %v2148
    %2200 = vmatprep.subr.mxu0 %v2146
    %2201 = vmatpush1.msra.mxu0 %v2145
    %2202 = vmatprep.subr.mxu0 %v2143
    %2203 = vmatpush1.msra.mxu0 %v2142
    %2204 = vmatprep.subr.mxu0 %v2140
    %2205 = vmatpush1.msra.mxu0 %v2139
    %2206 = vmatprep.subr.mxu0 %v2137
    %2207 = vmatpush1.msra.mxu0 %v2136
    %2208 = vmatprep.subr.mxu0 %v2134
    %2209 = vmatpush1.msra.mxu0 %v2133
    %2210 = vmatprep.subr.mxu0 %v2131
    %2211 = vmatpush1.msra.mxu0 %v2130
    %2212 = vmatprep.subr.mxu0 %v2128
    %2213 = vmatpush1.msra.mxu0 %v2127
    %2214 = vmatprep.subr.mxu0 %v2125
    %2215 = vmatpush1.msra.mxu0 %v2124
    %2216 = vmatprep.subr.mxu0 %v2122
    %2217 = vmatpush1.msra.mxu0 %v2121
    %2218 = vmatprep.subr.mxu0 0.0
    %2219 = vmatpush2.msra.mxu0 0.0
    %2220 = vmatprep.subr.mxu0 0.0
    %2221 = vmatpush2.msra.mxu0 0.0
    %2222 = vmatprep.subr.mxu0 0.0
    %2223 = vmatpush2.msra.mxu0 0.0
    %2224 = vmatprep.subr.mxu0 0.0
    %2225 = vmatpush2.msra.mxu0 0.0
    %2226 = vmatprep.subr.mxu0 0.0
    %2227 = vmatpush2.msra.mxu0 0.0
    %2228 = vmatprep.subr.mxu0 0.0
    %2229 = vmatpush2.msra.mxu0 0.0
    %2230 = vmatprep.subr.mxu0 0.0
    %2231 = vmatpush2.msra.mxu0 0.0
    %2232 = vmatprep.subr.mxu0 0.0
    %2233 = vmatpush2.msra.mxu0 0.0
    %2234 = vmatprep.subr.mxu0 0.0
    %2235 = vmatpush2.msra.mxu0 0.0
    %2236 = vmatprep.subr.mxu0 0.0
    %2237 = vmatpush2.msra.mxu0 0.0
    %2238 = vmatprep.subr.mxu0 0.0
    %2239 = vmatpush2.msra.mxu0 0.0
    %2240 = vmatprep.subr.mxu0 0.0
    %2241 = vmatpush2.msra.mxu0 0.0
    %2242 = vmatprep.subr.mxu0 0.0
    %2243 = vmatpush2.msra.mxu0 0.0
    %2244 = vmatprep.subr.mxu0 0.0
    %2245 = vmatpush2.msra.mxu0 0.0
    %2246 = vmatprep.subr.mxu0 0.0
    %2247 = vmatpush2.msra.mxu0 0.0
    %2248 = vmatprep.subr.mxu0 0.0
    %2249 = vmatpush2.msra.mxu0 0.0
    %2250 = vmatprep.mubr.f32.mxu0 0.0
    %2251 = vmatmul.mubr.f32.gmra.mxu0 %v2120
    %v2252 = vpop.f32.mrf.mxu0
    %v2253 = vadd.f32 %v2174, %v2252
    %v2254 = vpop.f32.mrf.mxu0
    %v2255 = vadd.f32 %v2178, %v2254
    %2256 = vdwg.mxu0
    %2257 = vmatprep.subr.mxu0 0.0
    %2258 = vmatpush1.msra.mxu0 %v2168
    %2259 = vmatprep.subr.mxu0 0.0
    %2260 = vmatpush1.msra.mxu0 %v2165
    %2261 = vmatprep.subr.mxu0 0.0
    %2262 = vmatpush1.msra.mxu0 %v2162
    %2263 = vmatprep.subr.mxu0 0.0
    %2264 = vmatpush1.msra.mxu0 %v2159
    %2265 = vmatprep.subr.mxu0 0.0
    %2266 = vmatpush1.msra.mxu0 %v2156
    %2267 = vmatprep.subr.mxu0 0.0
    %2268 = vmatpush1.msra.mxu0 %v2153
    %2269 = vmatprep.subr.mxu0 0.0
    %2270 = vmatpush1.msra.mxu0 %v2150
    %2271 = vmatprep.subr.mxu0 0.0
    %2272 = vmatpush1.msra.mxu0 %v2147
    %2273 = vmatprep.subr.mxu0 0.0
    %2274 = vmatpush1.msra.mxu0 %v2144
    %2275 = vmatprep.subr.mxu0 0.0
    %2276 = vmatpush1.msra.mxu0 %v2141
    %2277 = vmatprep.subr.mxu0 0.0
    %2278 = vmatpush1.msra.mxu0 %v2138
    %2279 = vmatprep.subr.mxu0 0.0
    %2280 = vmatpush1.msra.mxu0 %v2135
    %2281 = vmatprep.subr.mxu0 0.0
    %2282 = vmatpush1.msra.mxu0 %v2132
    %2283 = vmatprep.subr.mxu0 0.0
    %2284 = vmatpush1.msra.mxu0 %v2129
    %2285 = vmatprep.subr.mxu0 0.0
    %2286 = vmatpush1.msra.mxu0 %v2126
    %2287 = vmatprep.subr.mxu0 0.0
    %2288 = vmatpush1.msra.mxu0 %v2123
    %2289 = vmatprep.subr.mxu0 0.0
    %2290 = vmatpush2.msra.mxu0 0.0
    %2291 = vmatprep.subr.mxu0 0.0
    %2292 = vmatpush2.msra.mxu0 0.0
    %2293 = vmatprep.subr.mxu0 0.0
    %2294 = vmatpush2.msra.mxu0 0.0
    %2295 = vmatprep.subr.mxu0 0.0
    %2296 = vmatpush2.msra.mxu0 0.0
    %2297 = vmatprep.subr.mxu0 0.0
    %2298 = vmatpush2.msra.mxu0 0.0
    %2299 = vmatprep.subr.mxu0 0.0
    %2300 = vmatpush2.msra.mxu0 0.0
    %2301 = vmatprep.subr.mxu0 0.0
    %2302 = vmatpush2.msra.mxu0 0.0
    %2303 = vmatprep.subr.mxu0 0.0
    %2304 = vmatpush2.msra.mxu0 0.0
    %2305 = vmatprep.subr.mxu0 0.0
    %2306 = vmatpush2.msra.mxu0 0.0
    %2307 = vmatprep.subr.mxu0 0.0
    %2308 = vmatpush2.msra.mxu0 0.0
    %2309 = vmatprep.subr.mxu0 0.0
    %2310 = vmatpush2.msra.mxu0 0.0
    %2311 = vmatprep.subr.mxu0 0.0
    %2312 = vmatpush2.msra.mxu0 0.0
    %2313 = vmatprep.subr.mxu0 0.0
    %2314 = vmatpush2.msra.mxu0 0.0
    %2315 = vmatprep.subr.mxu0 0.0
    %2316 = vmatpush2.msra.mxu0 0.0
    %2317 = vmatprep.subr.mxu0 0.0
    %2318 = vmatpush2.msra.mxu0 0.0
    %2319 = vmatprep.subr.mxu0 0.0
    %2320 = vmatpush2.msra.mxu0 0.0
    %2321 = vmatprep.mubr.f32.mxu0 0.0
    %2322 = vmatmul.mubr.f32.gmra.mxu0 %v2120
    %v2323 = vpop.f32.mrf.mxu0
    %v2324 = vadd.f32 %v2182, %v2323
    %v2325 = vpop.f32.mrf.mxu0
    %2326 = vdwg.mxu0
    %2329 = vrot.lane.b32.xlu0 %v2253, 32
    %v2330 = vpop.permute.xlu0 %2329
    %2331 = vrot.lane.b32.xlu0 %v2255, 32
    %v2332 = vpop.permute.xlu0 %2331
    %v2333 = vsel %vm104, %v2330, %v2332
    %v2335 = vadd.f32 %v2253, %v2333
    %v2336 = vxor.u32 %v2335, 2147483648
    %v2337 = vmul.f32 %v2336, 1.442695
    %v2338 = vpow.pop %v2337
    %v2339 = vadd.f32 %v2338, 1.0
    %v2340 = vrcp.pop %v2339
    %v2341 = vmul.f32 1.0, %v2340
    %2342 = vrot.lane.b32.xlu0 %v2255, 96
    %v2343 = vpop.permute.xlu0 %2342
    %v2345 = vmul.f32 %v2341, %v2343
    %2347 = vrot.lane.b32.xlu0 %v2345, 64
    %v2348 = vpop.permute.xlu0 %2347
    %v2350 = vadd.f32 %v2253, %v2348
    %v2351 = vtanh.pop %v2350
    %v2352 = vsub.f32 1.0, %v2341
    %2354 = vrot.lane.b32.xlu0 %v2351, 96
    %v2355 = vpop.permute.xlu0 %2354
    %v2357 = vmul.f32 %v2352, %v2355
    %v2358 = vmul.f32 %v2341, %v2110
    %v2359 = vadd.f32 %v2357, %v2358
    %2361 = vrot.lane.b32.xlu0 %v2324, 32
    %v2362 = vpop.permute.xlu0 %2361
    %v2364 = vadd.f32 %v2255, %v2362
    %v2365 = vxor.u32 %v2364, 2147483648
    %v2366 = vmul.f32 %v2365, 1.442695
    %v2367 = vpow.pop %v2366
    %v2368 = vadd.f32 %v2367, 1.0
    %v2369 = vrcp.pop %v2368
    %v2370 = vmul.f32 1.0, %v2369
    %2371 = vrot.lane.b32.xlu0 %v2324, 96
    %v2372 = vpop.permute.xlu0 %2371
    %v2374 = vmul.f32 %v2370, %v2372
    %2376 = vrot.lane.b32.xlu0 %v2374, 64
    %v2377 = vpop.permute.xlu0 %2376
    %v2379 = vadd.f32 %v2324, %v2377
    %v2380 = vtanh.pop %v2379
    %v2381 = vsub.f32 1.0, %v2370
    %2383 = vrot.lane.b32.xlu0 %v2380, 96
    %v2384 = vpop.permute.xlu0 %2383
    %v2386 = vmul.f32 %v2381, %v2384
    %v2387 = vmul.f32 %v2370, %v2116
    %v2388 = vadd.f32 %v2386, %v2387
    %2390 = vrot.lane.b32.xlu0 %v2359, 96
    %v2391 = vpop.permute.xlu0 %2390
    %2393 = vst.msk [vmem:[%s1832] sm:$0x1] %vm685, %v2391
    %2395 = vrot.lane.b32.xlu0 %v2388, 32
    %v2396 = vpop.permute.xlu0 %2395
    %2398 = vst.msk [vmem:[%s1834] sm:$0x1] %vm685, %v2396
    %s2399 = sld [smem:[#allocation2 + $0x4]]
    %s2400 = sld [smem:[#allocation5 + $0x4]]
    %s2401 = scalar_lea.vmem [#allocation11], %s2399
    %v2402 = vld [vmem:[%s2401] sm:$0x1]
    %s2403 = scalar_lea.vmem [#allocation12], %s2400
    %v2404 = vld [vmem:[%s2403] sm:$0x1]
    %s2405 = sld [smem:[#allocation7 + $0x10]]
    %s2406 = scalar_lea.vmem [#allocation11], %s2405
    %v2407 = vld [vmem:[%s2406] sm:$0x1]
    %s2408 = sld [smem:[#allocation7 + $0x11]]
    %s2409 = scalar_lea.vmem [#allocation11], %s2408
    %v2410 = vld [vmem:[%s2409] sm:$0x1]
    %s2411 = sld [smem:[#allocation7 + $0x12]]
    %s2412 = scalar_lea.vmem [#allocation11], %s2411
    %v2413 = vld [vmem:[%s2412] sm:$0x1]
    %s2414 = sld [smem:[#allocation7 + $0x13]]
    %s2415 = scalar_lea.vmem [#allocation11], %s2414
    %v2416 = vld [vmem:[%s2415] sm:$0x1]
    %s2417 = sld [smem:[#allocation8 + $0x10]]
    %s2418 = scalar_lea.vmem [#allocation12], %s2417
    %v2419 = vld [vmem:[%s2418] sm:$0x1]
    %s2420 = sld [smem:[#allocation8 + $0x11]]
    %s2421 = scalar_lea.vmem [#allocation12], %s2420
    %v2422 = vld [vmem:[%s2421] sm:$0x1]
    %s2423 = sld [smem:[#allocation8 + $0x12]]
    %s2424 = scalar_lea.vmem [#allocation12], %s2423
    %v2425 = vld [vmem:[%s2424] sm:$0x1]
    %s2426 = sld [smem:[#allocation8 + $0x13]]
    %s2427 = scalar_lea.vmem [#allocation12], %s2426
    %v2428 = vld [vmem:[%s2427] sm:$0x1]
    %v2430 = vrot.slane %v2410, 7
    %v2433 = vrot.slane %v2413, 6
    %v2436 = vrot.slane %v2416, 5
    %v2438 = vsel %vm154, %v2407, %v2430
    %v2439 = vsel %vm156, %v2438, %v2433
    %v2440 = vsel %vm158, %v2439, %v2436
    %v2442 = vrot.slane %v2419, 7
    %v2445 = vrot.slane %v2422, 6
    %v2448 = vrot.slane %v2425, 5
    %v2451 = vrot.slane %v2428, 4
    %v2453 = vsel %vm154, %v2404, %v2442
    %v2454 = vsel %vm156, %v2453, %v2445
    %v2455 = vsel %vm158, %v2454, %v2448
    %v2456 = vsel %vm175, %v2455, %v2451
    %v2458 = vsel %vm104, %v2402, 0
    %v2461 = vsel %vm104, %v2456, 0
    %2463 = vmatprep.subr.mxu0 0.0
    %2464 = vmatpush1.xpose.msra.mxu0 0.0
    %2465 = vmatprep.subr.mxu0 0.0
    %2466 = vmatpush1.xpose.msra.mxu0 0.0
    %2467 = vmatprep.subr.mxu0 0.0
    %2468 = vmatpush1.xpose.msra.mxu0 0.0
    %2469 = vmatprep.subr.mxu0 0.0
    %2470 = vmatpush1.xpose.msra.mxu0 0.0
    %2471 = vmatprep.subr.mxu0 0.0
    %2472 = vmatpush1.xpose.msra.mxu0 0.0
    %2473 = vmatprep.subr.mxu0 0.0
    %2474 = vmatpush1.xpose.msra.mxu0 0.0
    %2475 = vmatprep.subr.mxu0 0.0
    %2476 = vmatpush1.xpose.msra.mxu0 0.0
    %2477 = vmatprep.subr.mxu0 0.0
    %2478 = vmatpush1.xpose.msra.mxu0 0.0
    %2479 = vmatprep.subr.mxu0 0.0
    %2480 = vmatpush1.xpose.msra.mxu0 0.0
    %2481 = vmatprep.subr.mxu0 0.0
    %2482 = vmatpush1.xpose.msra.mxu0 0.0
    %2483 = vmatprep.subr.mxu0 0.0
    %2484 = vmatpush1.xpose.msra.mxu0 0.0
    %2485 = vmatprep.subr.mxu0 0.0
    %2486 = vmatpush1.xpose.msra.mxu0 0.0
    %2487 = vmatprep.subr.mxu0 0.0
    %2488 = vmatpush1.xpose.msra.mxu0 0.0
    %2489 = vmatprep.subr.mxu0 0.0
    %2490 = vmatpush1.xpose.msra.mxu0 0.0
    %2491 = vmatprep.subr.mxu0 0.0
    %2492 = vmatpush1.xpose.msra.mxu0 0.0
    %2493 = vmatprep.subr.mxu0 0.0
    %2494 = vmatpush1.xpose.msra.mxu0 %v2461
    %2495 = vmatprep.subr.mxu0 0.0
    %2496 = vmatpush2.xpose.msra.mxu0 0.0
    %2497 = vmatprep.subr.mxu0 0.0
    %2498 = vmatpush2.xpose.msra.mxu0 0.0
    %2499 = vmatprep.subr.mxu0 0.0
    %2500 = vmatpush2.xpose.msra.mxu0 0.0
    %2501 = vmatprep.subr.mxu0 0.0
    %2502 = vmatpush2.xpose.msra.mxu0 0.0
    %2503 = vmatprep.subr.mxu0 0.0
    %2504 = vmatpush2.xpose.msra.mxu0 0.0
    %2505 = vmatprep.subr.mxu0 0.0
    %2506 = vmatpush2.xpose.msra.mxu0 0.0
    %2507 = vmatprep.subr.mxu0 0.0
    %2508 = vmatpush2.xpose.msra.mxu0 0.0
    %2509 = vmatprep.subr.mxu0 0.0
    %2510 = vmatpush2.xpose.msra.mxu0 0.0
    %2511 = vmatprep.subr.mxu0 0.0
    %2512 = vmatpush2.xpose.msra.mxu0 0.0
    %2513 = vmatprep.subr.mxu0 0.0
    %2514 = vmatpush2.xpose.msra.mxu0 0.0
    %2515 = vmatprep.subr.mxu0 0.0
    %2516 = vmatpush2.xpose.msra.mxu0 0.0
    %2517 = vmatprep.subr.mxu0 0.0
    %2518 = vmatpush2.xpose.msra.mxu0 0.0
    %2519 = vmatprep.subr.mxu0 0.0
    %2520 = vmatpush2.xpose.msra.mxu0 0.0
    %2521 = vmatprep.subr.mxu0 0.0
    %2522 = vmatpush2.xpose.msra.mxu0 0.0
    %2523 = vmatprep.subr.mxu0 0.0
    %2524 = vmatpush2.xpose.msra.mxu0 0.0
    %2525 = vmatprep.subr.mxu0 0.0
    %2526 = vmatpush2.xpose.msra.mxu0 0.0
    %2527 = vmatprep.mubr.f32.mxu0 0.0
    %2528 = vmatmul.mubr.f32.gmra.mxu0 %v2458
    %v2529 = vpop.f32.mrf.mxu0
    %v2530 = vadd.f32 0.0, %v2529
    %v2531 = vpop.f32.mrf.mxu0
    %2532 = vdwg.mxu0
    %v2533 = vmax.f32 %v2530, 0.0
    %v2534 = vand.u32 2147483647, %v2530
    %v2535 = vsub.f32 0.0, %v2534
    %v2536 = vmul.f32 %v2535, 1.442695
    %v2537 = vpow.pop %v2536
    %v2538 = vadd.f32 %v2537, 1.0
    %v2539 = vlog2.pop %v2538
    %v2540 = vmul.f32 %v2539, 0.6931472
    %v2541 = vmul.f32 -0.5, %v2537
    %v2542 = vadd.f32 %v2541, 1.0
    %v2543 = vmul.f32 %v2542, %v2537
    %v2544 = vand.u32 2147483647, %v2537
    %vm2545 = vcmp.lt.f32.partialorder %v2544, 0.0004427343
    %v2546 = vsel %vm2545, %v2543, %v2540
    %v2547 = vadd.f32 %v2533, %v2546
    %v2549 = vsel %vm104, %v2404, 0
    %v2552 = vsel %vm104, %v2440, 0
    %2554 = vmatprep.subr.mxu0 0.0
    %2555 = vmatpush1.xpose.msra.mxu0 0.0
    %2556 = vmatprep.subr.mxu0 0.0
    %2557 = vmatpush1.xpose.msra.mxu0 0.0
    %2558 = vmatprep.subr.mxu0 0.0
    %2559 = vmatpush1.xpose.msra.mxu0 0.0
    %2560 = vmatprep.subr.mxu0 0.0
    %2561 = vmatpush1.xpose.msra.mxu0 0.0
    %2562 = vmatprep.subr.mxu0 0.0
    %2563 = vmatpush1.xpose.msra.mxu0 0.0
    %2564 = vmatprep.subr.mxu0 0.0
    %2565 = vmatpush1.xpose.msra.mxu0 0.0
    %2566 = vmatprep.subr.mxu0 0.0
    %2567 = vmatpush1.xpose.msra.mxu0 0.0
    %2568 = vmatprep.subr.mxu0 0.0
    %2569 = vmatpush1.xpose.msra.mxu0 0.0
    %2570 = vmatprep.subr.mxu0 0.0
    %2571 = vmatpush1.xpose.msra.mxu0 0.0
    %2572 = vmatprep.subr.mxu0 0.0
    %2573 = vmatpush1.xpose.msra.mxu0 0.0
    %2574 = vmatprep.subr.mxu0 0.0
    %2575 = vmatpush1.xpose.msra.mxu0 0.0
    %2576 = vmatprep.subr.mxu0 0.0
    %2577 = vmatpush1.xpose.msra.mxu0 0.0
    %2578 = vmatprep.subr.mxu0 0.0
    %2579 = vmatpush1.xpose.msra.mxu0 0.0
    %2580 = vmatprep.subr.mxu0 0.0
    %2581 = vmatpush1.xpose.msra.mxu0 0.0
    %2582 = vmatprep.subr.mxu0 0.0
    %2583 = vmatpush1.xpose.msra.mxu0 0.0
    %2584 = vmatprep.subr.mxu0 0.0
    %2585 = vmatpush1.xpose.msra.mxu0 %v2552
    %2586 = vmatprep.subr.mxu0 0.0
    %2587 = vmatpush2.xpose.msra.mxu0 0.0
    %2588 = vmatprep.subr.mxu0 0.0
    %2589 = vmatpush2.xpose.msra.mxu0 0.0
    %2590 = vmatprep.subr.mxu0 0.0
    %2591 = vmatpush2.xpose.msra.mxu0 0.0
    %2592 = vmatprep.subr.mxu0 0.0
    %2593 = vmatpush2.xpose.msra.mxu0 0.0
    %2594 = vmatprep.subr.mxu0 0.0
    %2595 = vmatpush2.xpose.msra.mxu0 0.0
    %2596 = vmatprep.subr.mxu0 0.0
    %2597 = vmatpush2.xpose.msra.mxu0 0.0
    %2598 = vmatprep.subr.mxu0 0.0
    %2599 = vmatpush2.xpose.msra.mxu0 0.0
    %2600 = vmatprep.subr.mxu0 0.0
    %2601 = vmatpush2.xpose.msra.mxu0 0.0
    %2602 = vmatprep.subr.mxu0 0.0
    %2603 = vmatpush2.xpose.msra.mxu0 0.0
    %2604 = vmatprep.subr.mxu0 0.0
    %2605 = vmatpush2.xpose.msra.mxu0 0.0
    %2606 = vmatprep.subr.mxu0 0.0
    %2607 = vmatpush2.xpose.msra.mxu0 0.0
    %2608 = vmatprep.subr.mxu0 0.0
    %2609 = vmatpush2.xpose.msra.mxu0 0.0
    %2610 = vmatprep.subr.mxu0 0.0
    %2611 = vmatpush2.xpose.msra.mxu0 0.0
    %2612 = vmatprep.subr.mxu0 0.0
    %2613 = vmatpush2.xpose.msra.mxu0 0.0
    %2614 = vmatprep.subr.mxu0 0.0
    %2615 = vmatpush2.xpose.msra.mxu0 0.0
    %2616 = vmatprep.subr.mxu0 0.0
    %2617 = vmatpush2.xpose.msra.mxu0 0.0
    %2618 = vmatprep.mubr.f32.mxu0 0.0
    %2619 = vmatmul.mubr.f32.gmra.mxu0 %v2549
    %v2620 = vpop.f32.mrf.mxu0
    %v2621 = vadd.f32 0.0, %v2620
    %v2622 = vpop.f32.mrf.mxu0
    %2623 = vdwg.mxu0
    %v2624 = vmax.f32 %v2621, 0.0
    %v2625 = vand.u32 2147483647, %v2621
    %v2626 = vsub.f32 0.0, %v2625
    %v2627 = vmul.f32 %v2626, 1.442695
    %v2628 = vpow.pop %v2627
    %v2629 = vadd.f32 %v2628, 1.0
    %v2630 = vlog2.pop %v2629
    %v2631 = vmul.f32 %v2630, 0.6931472
    %v2632 = vmul.f32 -0.5, %v2628
    %v2633 = vadd.f32 %v2632, 1.0
    %v2634 = vmul.f32 %v2633, %v2628
    %v2635 = vand.u32 2147483647, %v2628
    %vm2636 = vcmp.lt.f32.partialorder %v2635, 0.0004427343
    %v2637 = vsel %vm2636, %v2634, %v2631
    %v2638 = vadd.f32 %v2624, %v2637
    %v2639 = vmax.f32 %v2547, 1e-20
    %s2640 = sld [smem:[#allocation10 + $0x4]]
    %v2641 = vmul.f32 %v2639, 2.0
    %v2642 = vrcp.pop %v2641
    %v2643 = vmul.f32 3.1415927, %v2642
    %v2644 = vrsqrt.pop %v2643
    %v2645 = vmul.f32 %v2643, %v2644
    %vm2646 = vcmp.eq.f32.partialorder %v2643, inf
    %v2647 = vsel %vm2646, %v2643, %v2645
    %vm2648 = vcmp.eq.f32.partialorder %v2643, 0.0
    %v2649 = vand.u32 %v2643, 2147483648
    %v2650 = vsel %vm2648, %v2649, %v2647
    %v2651 = vstv %s2640
    %v2652 = vsub.f32 %v2650, %v2651
    %v2653 = vand.u32 2147483647, %v2652
    %v2654 = vadd.f32 %v2085, %v2653
    %v2655 = vmul.f32 %v2652, %v2652
    %v2656 = vadd.f32 %v2087, %v2655
    %v2657 = vld [vmem:[%s5 + $0x4] sm:$0x1]
    %v2658 = vmul.f32 %v2638, %v2657
    %v2659 = vld [vmem:[%s6 + $0x4] sm:$0x1]
    %2661 = vrot.lane.b32.xlu0 %v2659, 1
    %v2662 = vpop.permute.xlu0 %2661
    %v2664 = vmul.f32 %v2547, %v2662
    %2666 = vrot.lane.b32.xlu0 %v2664, 127
    %v2667 = vpop.permute.xlu0 %2666
    %v2669 = vadd.f32 %v2658, %v2667
    %v2670 = vsel %vm390, %v2669, 0.0
    %2671 = vadd.xlane.f32.xlu0 %v2670
    %v2672 = vpop.xlane.xlu0 %2671
    %v2673 = vlog2.pop %v2639
    %v2674 = vmul.f32 %v2673, 0.6931472
    %v2675 = vsub.f32 0.0, %v2674
    %v2676 = vadd.f32 %v2675, %v2672
    %v2677 = vadd.f32 %v2108, %v2676
    %2678 = vrot.lane.b32.xlu0 %v2402, 32
    %v2679 = vpop.permute.xlu0 %2678
    %2681 = vrot.lane.b32.xlu0 %v2402, 64
    %v2682 = vpop.permute.xlu0 %2681
    %2684 = vrot.lane.b32.xlu0 %v2404, 96
    %v2685 = vpop.permute.xlu0 %2684
    %v2687 = vsel %vm104, %v2404, %v2679
    %v2688 = vsel %vm409, %v2687, %v2682
    %v2689 = vsel %vm411, %v2688, %v2685
    %v2690 = vld [vmem:[%s9] sm:$0xff]
    %v2691 = vld [vmem:[%s9 + $0x8] sm:$0xff]
    %v2692 = vld [vmem:[%s9 + $0x10] sm:$0xff]
    %v2693 = vld [vmem:[%s9 + $0x18] sm:$0xff]
    %v2694 = vld [vmem:[%s9 + $0x20] sm:$0xff]
    %v2695 = vld [vmem:[%s9 + $0x28] sm:$0xff]
    %v2696 = vld [vmem:[%s9 + $0x30] sm:$0xff]
    %v2697 = vld [vmem:[%s9 + $0x38] sm:$0xff]
    %v2698 = vld [vmem:[%s9 + $0x40] sm:$0xff]
    %v2699 = vld [vmem:[%s9 + $0x48] sm:$0xff]
    %v2700 = vld [vmem:[%s9 + $0x50] sm:$0xff]
    %v2701 = vld [vmem:[%s9 + $0x58] sm:$0xff]
    %v2702 = vld [vmem:[%s9 + $0x60] sm:$0xff]
    %v2703 = vld [vmem:[%s9 + $0x68] sm:$0xff]
    %v2704 = vld [vmem:[%s9 + $0x70] sm:$0xff]
    %v2705 = vld [vmem:[%s9 + $0x78] sm:$0xff]
    %v2706 = vld [vmem:[%s9 + $0x80] sm:$0xff]
    %v2707 = vld [vmem:[%s9 + $0x88] sm:$0xff]
    %v2708 = vld [vmem:[%s9 + $0x90] sm:$0xff]
    %v2709 = vld [vmem:[%s9 + $0x98] sm:$0xff]
    %v2710 = vld [vmem:[%s9 + $0xa0] sm:$0xff]
    %v2711 = vld [vmem:[%s9 + $0xa8] sm:$0xff]
    %v2712 = vld [vmem:[%s9 + $0xb0] sm:$0xff]
    %v2713 = vld [vmem:[%s9 + $0xb8] sm:$0xff]
    %v2714 = vld [vmem:[%s9 + $0xc0] sm:$0xff]
    %v2715 = vld [vmem:[%s9 + $0xc8] sm:$0xff]
    %v2716 = vld [vmem:[%s9 + $0xd0] sm:$0xff]
    %v2717 = vld [vmem:[%s9 + $0xd8] sm:$0xff]
    %v2718 = vld [vmem:[%s9 + $0xe0] sm:$0xff]
    %v2719 = vld [vmem:[%s9 + $0xe8] sm:$0xff]
    %v2720 = vld [vmem:[%s9 + $0xf0] sm:$0xff]
    %v2721 = vld [vmem:[%s9 + $0xf8] sm:$0xff]
    %v2722 = vld [vmem:[%s9 + $0x100] sm:$0xff]
    %v2723 = vld [vmem:[%s9 + $0x108] sm:$0xff]
    %v2724 = vld [vmem:[%s9 + $0x110] sm:$0xff]
    %v2725 = vld [vmem:[%s9 + $0x118] sm:$0xff]
    %v2726 = vld [vmem:[%s9 + $0x120] sm:$0xff]
    %v2727 = vld [vmem:[%s9 + $0x128] sm:$0xff]
    %v2728 = vld [vmem:[%s9 + $0x130] sm:$0xff]
    %v2729 = vld [vmem:[%s9 + $0x138] sm:$0xff]
    %v2730 = vld [vmem:[%s9 + $0x140] sm:$0xff]
    %v2731 = vld [vmem:[%s9 + $0x148] sm:$0xff]
    %v2732 = vld [vmem:[%s9 + $0x150] sm:$0xff]
    %v2733 = vld [vmem:[%s9 + $0x158] sm:$0xff]
    %v2734 = vld [vmem:[%s9 + $0x160] sm:$0xff]
    %v2735 = vld [vmem:[%s9 + $0x168] sm:$0xff]
    %v2736 = vld [vmem:[%s9 + $0x170] sm:$0xff]
    %v2737 = vld [vmem:[%s9 + $0x178] sm:$0xff]
    %v2738 = vld [vmem:[%s10] sm:$0x7]
    %v2740 = vlaneseq
    %v2741 = vshrl.u32 %v2740, 7
    %v2742 = vsub.s32 0, %v2741
    %v2743 = vrot.slane %v2738, %v2742
    %v2744 = vlaneseq
    %v2745 = vshrl.u32 %v2744, 7
    %v2746 = vsub.s32 1, %v2745
    %v2747 = vrot.slane %v2738, %v2746
    %v2748 = vlaneseq
    %v2749 = vshrl.u32 %v2748, 7
    %v2750 = vsub.s32 2, %v2749
    %v2751 = vrot.slane %v2738, %v2750
    %2755 = vmatprep.subr.mxu0 %v2736
    %2756 = vmatpush1.msra.mxu0 %v2735
    %2757 = vmatprep.subr.mxu0 %v2733
    %2758 = vmatpush1.msra.mxu0 %v2732
    %2759 = vmatprep.subr.mxu0 %v2730
    %2760 = vmatpush1.msra.mxu0 %v2729
    %2761 = vmatprep.subr.mxu0 %v2727
    %2762 = vmatpush1.msra.mxu0 %v2726
    %2763 = vmatprep.subr.mxu0 %v2724
    %2764 = vmatpush1.msra.mxu0 %v2723
    %2765 = vmatprep.subr.mxu0 %v2721
    %2766 = vmatpush1.msra.mxu0 %v2720
    %2767 = vmatprep.subr.mxu0 %v2718
    %2768 = vmatpush1.msra.mxu0 %v2717
    %2769 = vmatprep.subr.mxu0 %v2715
    %2770 = vmatpush1.msra.mxu0 %v2714
    %2771 = vmatprep.subr.mxu0 %v2712
    %2772 = vmatpush1.msra.mxu0 %v2711
    %2773 = vmatprep.subr.mxu0 %v2709
    %2774 = vmatpush1.msra.mxu0 %v2708
    %2775 = vmatprep.subr.mxu0 %v2706
    %2776 = vmatpush1.msra.mxu0 %v2705
    %2777 = vmatprep.subr.mxu0 %v2703
    %2778 = vmatpush1.msra.mxu0 %v2702
    %2779 = vmatprep.subr.mxu0 %v2700
    %2780 = vmatpush1.msra.mxu0 %v2699
    %2781 = vmatprep.subr.mxu0 %v2697
    %2782 = vmatpush1.msra.mxu0 %v2696
    %2783 = vmatprep.subr.mxu0 %v2694
    %2784 = vmatpush1.msra.mxu0 %v2693
    %2785 = vmatprep.subr.mxu0 %v2691
    %2786 = vmatpush1.msra.mxu0 %v2690
    %2787 = vmatprep.subr.mxu0 0.0
    %2788 = vmatpush2.msra.mxu0 0.0
    %2789 = vmatprep.subr.mxu0 0.0
    %2790 = vmatpush2.msra.mxu0 0.0
    %2791 = vmatprep.subr.mxu0 0.0
    %2792 = vmatpush2.msra.mxu0 0.0
    %2793 = vmatprep.subr.mxu0 0.0
    %2794 = vmatpush2.msra.mxu0 0.0
    %2795 = vmatprep.subr.mxu0 0.0
    %2796 = vmatpush2.msra.mxu0 0.0
    %2797 = vmatprep.subr.mxu0 0.0
    %2798 = vmatpush2.msra.mxu0 0.0
    %2799 = vmatprep.subr.mxu0 0.0
    %2800 = vmatpush2.msra.mxu0 0.0
    %2801 = vmatprep.subr.mxu0 0.0
    %2802 = vmatpush2.msra.mxu0 0.0
    %2803 = vmatprep.subr.mxu0 0.0
    %2804 = vmatpush2.msra.mxu0 0.0
    %2805 = vmatprep.subr.mxu0 0.0
    %2806 = vmatpush2.msra.mxu0 0.0
    %2807 = vmatprep.subr.mxu0 0.0
    %2808 = vmatpush2.msra.mxu0 0.0
    %2809 = vmatprep.subr.mxu0 0.0
    %2810 = vmatpush2.msra.mxu0 0.0
    %2811 = vmatprep.subr.mxu0 0.0
    %2812 = vmatpush2.msra.mxu0 0.0
    %2813 = vmatprep.subr.mxu0 0.0
    %2814 = vmatpush2.msra.mxu0 0.0
    %2815 = vmatprep.subr.mxu0 0.0
    %2816 = vmatpush2.msra.mxu0 0.0
    %2817 = vmatprep.subr.mxu0 0.0
    %2818 = vmatpush2.msra.mxu0 0.0
    %2819 = vmatprep.mubr.f32.mxu0 0.0
    %2820 = vmatmul.mubr.f32.gmra.mxu0 %v2689
    %v2821 = vpop.f32.mrf.mxu0
    %v2822 = vadd.f32 %v2743, %v2821
    %v2823 = vpop.f32.mrf.mxu0
    %v2824 = vadd.f32 %v2747, %v2823
    %2825 = vdwg.mxu0
    %2826 = vmatprep.subr.mxu0 0.0
    %2827 = vmatpush1.msra.mxu0 %v2737
    %2828 = vmatprep.subr.mxu0 0.0
    %2829 = vmatpush1.msra.mxu0 %v2734
    %2830 = vmatprep.subr.mxu0 0.0
    %2831 = vmatpush1.msra.mxu0 %v2731
    %2832 = vmatprep.subr.mxu0 0.0
    %2833 = vmatpush1.msra.mxu0 %v2728
    %2834 = vmatprep.subr.mxu0 0.0
    %2835 = vmatpush1.msra.mxu0 %v2725
    %2836 = vmatprep.subr.mxu0 0.0
    %2837 = vmatpush1.msra.mxu0 %v2722
    %2838 = vmatprep.subr.mxu0 0.0
    %2839 = vmatpush1.msra.mxu0 %v2719
    %2840 = vmatprep.subr.mxu0 0.0
    %2841 = vmatpush1.msra.mxu0 %v2716
    %2842 = vmatprep.subr.mxu0 0.0
    %2843 = vmatpush1.msra.mxu0 %v2713
    %2844 = vmatprep.subr.mxu0 0.0
    %2845 = vmatpush1.msra.mxu0 %v2710
    %2846 = vmatprep.subr.mxu0 0.0
    %2847 = vmatpush1.msra.mxu0 %v2707
    %2848 = vmatprep.subr.mxu0 0.0
    %2849 = vmatpush1.msra.mxu0 %v2704
    %2850 = vmatprep.subr.mxu0 0.0
    %2851 = vmatpush1.msra.mxu0 %v2701
    %2852 = vmatprep.subr.mxu0 0.0
    %2853 = vmatpush1.msra.mxu0 %v2698
    %2854 = vmatprep.subr.mxu0 0.0
    %2855 = vmatpush1.msra.mxu0 %v2695
    %2856 = vmatprep.subr.mxu0 0.0
    %2857 = vmatpush1.msra.mxu0 %v2692
    %2858 = vmatprep.subr.mxu0 0.0
    %2859 = vmatpush2.msra.mxu0 0.0
    %2860 = vmatprep.subr.mxu0 0.0
    %2861 = vmatpush2.msra.mxu0 0.0
    %2862 = vmatprep.subr.mxu0 0.0
    %2863 = vmatpush2.msra.mxu0 0.0
    %2864 = vmatprep.subr.mxu0 0.0
    %2865 = vmatpush2.msra.mxu0 0.0
    %2866 = vmatprep.subr.mxu0 0.0
    %2867 = vmatpush2.msra.mxu0 0.0
    %2868 = vmatprep.subr.mxu0 0.0
    %2869 = vmatpush2.msra.mxu0 0.0
    %2870 = vmatprep.subr.mxu0 0.0
    %2871 = vmatpush2.msra.mxu0 0.0
    %2872 = vmatprep.subr.mxu0 0.0
    %2873 = vmatpush2.msra.mxu0 0.0
    %2874 = vmatprep.subr.mxu0 0.0
    %2875 = vmatpush2.msra.mxu0 0.0
    %2876 = vmatprep.subr.mxu0 0.0
    %2877 = vmatpush2.msra.mxu0 0.0
    %2878 = vmatprep.subr.mxu0 0.0
    %2879 = vmatpush2.msra.mxu0 0.0
    %2880 = vmatprep.subr.mxu0 0.0
    %2881 = vmatpush2.msra.mxu0 0.0
    %2882 = vmatprep.subr.mxu0 0.0
    %2883 = vmatpush2.msra.mxu0 0.0
    %2884 = vmatprep.subr.mxu0 0.0
    %2885 = vmatpush2.msra.mxu0 0.0
    %2886 = vmatprep.subr.mxu0 0.0
    %2887 = vmatpush2.msra.mxu0 0.0
    %2888 = vmatprep.subr.mxu0 0.0
    %2889 = vmatpush2.msra.mxu0 0.0
    %2890 = vmatprep.mubr.f32.mxu0 0.0
    %2891 = vmatmul.mubr.f32.gmra.mxu0 %v2689
    %v2892 = vpop.f32.mrf.mxu0
    %v2893 = vadd.f32 %v2751, %v2892
    %v2894 = vpop.f32.mrf.mxu0
    %2895 = vdwg.mxu0
    %2898 = vrot.lane.b32.xlu0 %v2822, 32
    %v2899 = vpop.permute.xlu0 %2898
    %2900 = vrot.lane.b32.xlu0 %v2824, 32
    %v2901 = vpop.permute.xlu0 %2900
    %v2902 = vsel %vm104, %v2899, %v2901
    %v2904 = vadd.f32 %v2822, %v2902
    %v2905 = vxor.u32 %v2904, 2147483648
    %v2906 = vmul.f32 %v2905, 1.442695
    %v2907 = vpow.pop %v2906
    %v2908 = vadd.f32 %v2907, 1.0
    %v2909 = vrcp.pop %v2908
    %v2910 = vmul.f32 1.0, %v2909
    %2911 = vrot.lane.b32.xlu0 %v2824, 96
    %v2912 = vpop.permute.xlu0 %2911
    %v2914 = vmul.f32 %v2910, %v2912
    %2916 = vrot.lane.b32.xlu0 %v2914, 64
    %v2917 = vpop.permute.xlu0 %2916
    %v2919 = vadd.f32 %v2822, %v2917
    %v2920 = vtanh.pop %v2919
    %v2921 = vsub.f32 1.0, %v2910
    %2923 = vrot.lane.b32.xlu0 %v2920, 96
    %v2924 = vpop.permute.xlu0 %2923
    %v2926 = vmul.f32 %v2921, %v2924
    %v2927 = vmul.f32 %v2910, %v2679
    %v2928 = vadd.f32 %v2926, %v2927
    %2930 = vrot.lane.b32.xlu0 %v2893, 32
    %v2931 = vpop.permute.xlu0 %2930
    %v2933 = vadd.f32 %v2824, %v2931
    %v2934 = vxor.u32 %v2933, 2147483648
    %v2935 = vmul.f32 %v2934, 1.442695
    %v2936 = vpow.pop %v2935
    %v2937 = vadd.f32 %v2936, 1.0
    %v2938 = vrcp.pop %v2937
    %v2939 = vmul.f32 1.0, %v2938
    %2940 = vrot.lane.b32.xlu0 %v2893, 96
    %v2941 = vpop.permute.xlu0 %2940
    %v2943 = vmul.f32 %v2939, %v2941
    %2945 = vrot.lane.b32.xlu0 %v2943, 64
    %v2946 = vpop.permute.xlu0 %2945
    %v2948 = vadd.f32 %v2893, %v2946
    %v2949 = vtanh.pop %v2948
    %v2950 = vsub.f32 1.0, %v2939
    %2952 = vrot.lane.b32.xlu0 %v2949, 96
    %v2953 = vpop.permute.xlu0 %2952
    %v2955 = vmul.f32 %v2950, %v2953
    %v2956 = vmul.f32 %v2939, %v2685
    %v2957 = vadd.f32 %v2955, %v2956
    %2959 = vrot.lane.b32.xlu0 %v2928, 96
    %v2960 = vpop.permute.xlu0 %2959
    %2962 = vst.msk [vmem:[%s2401] sm:$0x1] %vm685, %v2960
    %2964 = vrot.lane.b32.xlu0 %v2957, 32
    %v2965 = vpop.permute.xlu0 %2964
    %2967 = vst.msk [vmem:[%s2403] sm:$0x1] %vm685, %v2965
    %s2968 = sld [smem:[#allocation2 + $0x5]]
    %s2969 = sld [smem:[#allocation5 + $0x5]]
    %s2970 = scalar_lea.vmem [#allocation11], %s2968
    %v2971 = vld [vmem:[%s2970] sm:$0x1]
    %s2972 = scalar_lea.vmem [#allocation12], %s2969
    %v2973 = vld [vmem:[%s2972] sm:$0x1]
    %s2974 = sld [smem:[#allocation7 + $0x14]]
    %s2975 = scalar_lea.vmem [#allocation11], %s2974
    %v2976 = vld [vmem:[%s2975] sm:$0x1]
    %s2977 = sld [smem:[#allocation7 + $0x15]]
    %s2978 = scalar_lea.vmem [#allocation11], %s2977
    %v2979 = vld [vmem:[%s2978] sm:$0x1]
    %s2980 = sld [smem:[#allocation7 + $0x16]]
    %s2981 = scalar_lea.vmem [#allocation11], %s2980
    %v2982 = vld [vmem:[%s2981] sm:$0x1]
    %s2983 = sld [smem:[#allocation7 + $0x17]]
    %s2984 = scalar_lea.vmem [#allocation11], %s2983
    %v2985 = vld [vmem:[%s2984] sm:$0x1]
    %s2986 = sld [smem:[#allocation8 + $0x14]]
    %s2987 = scalar_lea.vmem [#allocation12], %s2986
    %v2988 = vld [vmem:[%s2987] sm:$0x1]
    %s2989 = sld [smem:[#allocation8 + $0x15]]
    %s2990 = scalar_lea.vmem [#allocation12], %s2989
    %v2991 = vld [vmem:[%s2990] sm:$0x1]
    %s2992 = sld [smem:[#allocation8 + $0x16]]
    %s2993 = scalar_lea.vmem [#allocation12], %s2992
    %v2994 = vld [vmem:[%s2993] sm:$0x1]
    %s2995 = sld [smem:[#allocation8 + $0x17]]
    %s2996 = scalar_lea.vmem [#allocation12], %s2995
    %v2997 = vld [vmem:[%s2996] sm:$0x1]
    %v2999 = vrot.slane %v2979, 7
    %v3002 = vrot.slane %v2982, 6
    %v3005 = vrot.slane %v2985, 5
    %v3007 = vsel %vm154, %v2976, %v2999
    %v3008 = vsel %vm156, %v3007, %v3002
    %v3009 = vsel %vm158, %v3008, %v3005
    %v3011 = vrot.slane %v2988, 7
    %v3014 = vrot.slane %v2991, 6
    %v3017 = vrot.slane %v2994, 5
    %v3020 = vrot.slane %v2997, 4
    %v3022 = vsel %vm154, %v2973, %v3011
    %v3023 = vsel %vm156, %v3022, %v3014
    %v3024 = vsel %vm158, %v3023, %v3017
    %v3025 = vsel %vm175, %v3024, %v3020
    %v3027 = vsel %vm104, %v2971, 0
    %v3030 = vsel %vm104, %v3025, 0
    %3032 = vmatprep.subr.mxu0 0.0
    %3033 = vmatpush1.xpose.msra.mxu0 0.0
    %3034 = vmatprep.subr.mxu0 0.0
    %3035 = vmatpush1.xpose.msra.mxu0 0.0
    %3036 = vmatprep.subr.mxu0 0.0
    %3037 = vmatpush1.xpose.msra.mxu0 0.0
    %3038 = vmatprep.subr.mxu0 0.0
    %3039 = vmatpush1.xpose.msra.mxu0 0.0
    %3040 = vmatprep.subr.mxu0 0.0
    %3041 = vmatpush1.xpose.msra.mxu0 0.0
    %3042 = vmatprep.subr.mxu0 0.0
    %3043 = vmatpush1.xpose.msra.mxu0 0.0
    %3044 = vmatprep.subr.mxu0 0.0
    %3045 = vmatpush1.xpose.msra.mxu0 0.0
    %3046 = vmatprep.subr.mxu0 0.0
    %3047 = vmatpush1.xpose.msra.mxu0 0.0
    %3048 = vmatprep.subr.mxu0 0.0
    %3049 = vmatpush1.xpose.msra.mxu0 0.0
    %3050 = vmatprep.subr.mxu0 0.0
    %3051 = vmatpush1.xpose.msra.mxu0 0.0
    %3052 = vmatprep.subr.mxu0 0.0
    %3053 = vmatpush1.xpose.msra.mxu0 0.0
    %3054 = vmatprep.subr.mxu0 0.0
    %3055 = vmatpush1.xpose.msra.mxu0 0.0
    %3056 = vmatprep.subr.mxu0 0.0
    %3057 = vmatpush1.xpose.msra.mxu0 0.0
    %3058 = vmatprep.subr.mxu0 0.0
    %3059 = vmatpush1.xpose.msra.mxu0 0.0
    %3060 = vmatprep.subr.mxu0 0.0
    %3061 = vmatpush1.xpose.msra.mxu0 0.0
    %3062 = vmatprep.subr.mxu0 0.0
    %3063 = vmatpush1.xpose.msra.mxu0 %v3030
    %3064 = vmatprep.subr.mxu0 0.0
    %3065 = vmatpush2.xpose.msra.mxu0 0.0
    %3066 = vmatprep.subr.mxu0 0.0
    %3067 = vmatpush2.xpose.msra.mxu0 0.0
    %3068 = vmatprep.subr.mxu0 0.0
    %3069 = vmatpush2.xpose.msra.mxu0 0.0
    %3070 = vmatprep.subr.mxu0 0.0
    %3071 = vmatpush2.xpose.msra.mxu0 0.0
    %3072 = vmatprep.subr.mxu0 0.0
    %3073 = vmatpush2.xpose.msra.mxu0 0.0
    %3074 = vmatprep.subr.mxu0 0.0
    %3075 = vmatpush2.xpose.msra.mxu0 0.0
    %3076 = vmatprep.subr.mxu0 0.0
    %3077 = vmatpush2.xpose.msra.mxu0 0.0
    %3078 = vmatprep.subr.mxu0 0.0
    %3079 = vmatpush2.xpose.msra.mxu0 0.0
    %3080 = vmatprep.subr.mxu0 0.0
    %3081 = vmatpush2.xpose.msra.mxu0 0.0
    %3082 = vmatprep.subr.mxu0 0.0
    %3083 = vmatpush2.xpose.msra.mxu0 0.0
    %3084 = vmatprep.subr.mxu0 0.0
    %3085 = vmatpush2.xpose.msra.mxu0 0.0
    %3086 = vmatprep.subr.mxu0 0.0
    %3087 = vmatpush2.xpose.msra.mxu0 0.0
    %3088 = vmatprep.subr.mxu0 0.0
    %3089 = vmatpush2.xpose.msra.mxu0 0.0
    %3090 = vmatprep.subr.mxu0 0.0
    %3091 = vmatpush2.xpose.msra.mxu0 0.0
    %3092 = vmatprep.subr.mxu0 0.0
    %3093 = vmatpush2.xpose.msra.mxu0 0.0
    %3094 = vmatprep.subr.mxu0 0.0
    %3095 = vmatpush2.xpose.msra.mxu0 0.0
    %3096 = vmatprep.mubr.f32.mxu0 0.0
    %3097 = vmatmul.mubr.f32.gmra.mxu0 %v3027
    %v3098 = vpop.f32.mrf.mxu0
    %v3099 = vadd.f32 0.0, %v3098
    %v3100 = vpop.f32.mrf.mxu0
    %3101 = vdwg.mxu0
    %v3102 = vmax.f32 %v3099, 0.0
    %v3103 = vand.u32 2147483647, %v3099
    %v3104 = vsub.f32 0.0, %v3103
    %v3105 = vmul.f32 %v3104, 1.442695
    %v3106 = vpow.pop %v3105
    %v3107 = vadd.f32 %v3106, 1.0
    %v3108 = vlog2.pop %v3107
    %v3109 = vmul.f32 %v3108, 0.6931472
    %v3110 = vmul.f32 -0.5, %v3106
    %v3111 = vadd.f32 %v3110, 1.0
    %v3112 = vmul.f32 %v3111, %v3106
    %v3113 = vand.u32 2147483647, %v3106
    %vm3114 = vcmp.lt.f32.partialorder %v3113, 0.0004427343
    %v3115 = vsel %vm3114, %v3112, %v3109
    %v3116 = vadd.f32 %v3102, %v3115
    %v3118 = vsel %vm104, %v2973, 0
    %v3121 = vsel %vm104, %v3009, 0
    %3123 = vmatprep.subr.mxu0 0.0
    %3124 = vmatpush1.xpose.msra.mxu0 0.0
    %3125 = vmatprep.subr.mxu0 0.0
    %3126 = vmatpush1.xpose.msra.mxu0 0.0
    %3127 = vmatprep.subr.mxu0 0.0
    %3128 = vmatpush1.xpose.msra.mxu0 0.0
    %3129 = vmatprep.subr.mxu0 0.0
    %3130 = vmatpush1.xpose.msra.mxu0 0.0
    %3131 = vmatprep.subr.mxu0 0.0
    %3132 = vmatpush1.xpose.msra.mxu0 0.0
    %3133 = vmatprep.subr.mxu0 0.0
    %3134 = vmatpush1.xpose.msra.mxu0 0.0
    %3135 = vmatprep.subr.mxu0 0.0
    %3136 = vmatpush1.xpose.msra.mxu0 0.0
    %3137 = vmatprep.subr.mxu0 0.0
    %3138 = vmatpush1.xpose.msra.mxu0 0.0
    %3139 = vmatprep.subr.mxu0 0.0
    %3140 = vmatpush1.xpose.msra.mxu0 0.0
    %3141 = vmatprep.subr.mxu0 0.0
    %3142 = vmatpush1.xpose.msra.mxu0 0.0
    %3143 = vmatprep.subr.mxu0 0.0
    %3144 = vmatpush1.xpose.msra.mxu0 0.0
    %3145 = vmatprep.subr.mxu0 0.0
    %3146 = vmatpush1.xpose.msra.mxu0 0.0
    %3147 = vmatprep.subr.mxu0 0.0
    %3148 = vmatpush1.xpose.msra.mxu0 0.0
    %3149 = vmatprep.subr.mxu0 0.0
    %3150 = vmatpush1.xpose.msra.mxu0 0.0
    %3151 = vmatprep.subr.mxu0 0.0
    %3152 = vmatpush1.xpose.msra.mxu0 0.0
    %3153 = vmatprep.subr.mxu0 0.0
    %3154 = vmatpush1.xpose.msra.mxu0 %v3121
    %3155 = vmatprep.subr.mxu0 0.0
    %3156 = vmatpush2.xpose.msra.mxu0 0.0
    %3157 = vmatprep.subr.mxu0 0.0
    %3158 = vmatpush2.xpose.msra.mxu0 0.0
    %3159 = vmatprep.subr.mxu0 0.0
    %3160 = vmatpush2.xpose.msra.mxu0 0.0
    %3161 = vmatprep.subr.mxu0 0.0
    %3162 = vmatpush2.xpose.msra.mxu0 0.0
    %3163 = vmatprep.subr.mxu0 0.0
    %3164 = vmatpush2.xpose.msra.mxu0 0.0
    %3165 = vmatprep.subr.mxu0 0.0
    %3166 = vmatpush2.xpose.msra.mxu0 0.0
    %3167 = vmatprep.subr.mxu0 0.0
    %3168 = vmatpush2.xpose.msra.mxu0 0.0
    %3169 = vmatprep.subr.mxu0 0.0
    %3170 = vmatpush2.xpose.msra.mxu0 0.0
    %3171 = vmatprep.subr.mxu0 0.0
    %3172 = vmatpush2.xpose.msra.mxu0 0.0
    %3173 = vmatprep.subr.mxu0 0.0
    %3174 = vmatpush2.xpose.msra.mxu0 0.0
    %3175 = vmatprep.subr.mxu0 0.0
    %3176 = vmatpush2.xpose.msra.mxu0 0.0
    %3177 = vmatprep.subr.mxu0 0.0
    %3178 = vmatpush2.xpose.msra.mxu0 0.0
    %3179 = vmatprep.subr.mxu0 0.0
    %3180 = vmatpush2.xpose.msra.mxu0 0.0
    %3181 = vmatprep.subr.mxu0 0.0
    %3182 = vmatpush2.xpose.msra.mxu0 0.0
    %3183 = vmatprep.subr.mxu0 0.0
    %3184 = vmatpush2.xpose.msra.mxu0 0.0
    %3185 = vmatprep.subr.mxu0 0.0
    %3186 = vmatpush2.xpose.msra.mxu0 0.0
    %3187 = vmatprep.mubr.f32.mxu0 0.0
    %3188 = vmatmul.mubr.f32.gmra.mxu0 %v3118
    %v3189 = vpop.f32.mrf.mxu0
    %v3190 = vadd.f32 0.0, %v3189
    %v3191 = vpop.f32.mrf.mxu0
    %3192 = vdwg.mxu0
    %v3193 = vmax.f32 %v3190, 0.0
    %v3194 = vand.u32 2147483647, %v3190
    %v3195 = vsub.f32 0.0, %v3194
    %v3196 = vmul.f32 %v3195, 1.442695
    %v3197 = vpow.pop %v3196
    %v3198 = vadd.f32 %v3197, 1.0
    %v3199 = vlog2.pop %v3198
    %v3200 = vmul.f32 %v3199, 0.6931472
    %v3201 = vmul.f32 -0.5, %v3197
    %v3202 = vadd.f32 %v3201, 1.0
    %v3203 = vmul.f32 %v3202, %v3197
    %v3204 = vand.u32 2147483647, %v3197
    %vm3205 = vcmp.lt.f32.partialorder %v3204, 0.0004427343
    %v3206 = vsel %vm3205, %v3203, %v3200
    %v3207 = vadd.f32 %v3193, %v3206
    %v3208 = vmax.f32 %v3116, 1e-20
    %s3209 = sld [smem:[#allocation10 + $0x5]]
    %v3210 = vmul.f32 %v3208, 2.0
    %v3211 = vrcp.pop %v3210
    %v3212 = vmul.f32 3.1415927, %v3211
    %v3213 = vrsqrt.pop %v3212
    %v3214 = vmul.f32 %v3212, %v3213
    %vm3215 = vcmp.eq.f32.partialorder %v3212, inf
    %v3216 = vsel %vm3215, %v3212, %v3214
    %vm3217 = vcmp.eq.f32.partialorder %v3212, 0.0
    %v3218 = vand.u32 %v3212, 2147483648
    %v3219 = vsel %vm3217, %v3218, %v3216
    %v3220 = vstv %s3209
    %v3221 = vsub.f32 %v3219, %v3220
    %v3222 = vand.u32 2147483647, %v3221
    %v3223 = vadd.f32 %v2654, %v3222
    %v3224 = vmul.f32 %v3221, %v3221
    %v3225 = vadd.f32 %v2656, %v3224
    %v3226 = vld [vmem:[%s5 + $0x5] sm:$0x1]
    %v3227 = vmul.f32 %v3207, %v3226
    %v3228 = vld [vmem:[%s6 + $0x5] sm:$0x1]
    %3230 = vrot.lane.b32.xlu0 %v3228, 1
    %v3231 = vpop.permute.xlu0 %3230
    %v3233 = vmul.f32 %v3116, %v3231
    %3235 = vrot.lane.b32.xlu0 %v3233, 127
    %v3236 = vpop.permute.xlu0 %3235
    %v3238 = vadd.f32 %v3227, %v3236
    %v3239 = vsel %vm390, %v3238, 0.0
    %3240 = vadd.xlane.f32.xlu0 %v3239
    %v3241 = vpop.xlane.xlu0 %3240
    %v3242 = vlog2.pop %v3208
    %v3243 = vmul.f32 %v3242, 0.6931472
    %v3244 = vsub.f32 0.0, %v3243
    %v3245 = vadd.f32 %v3244, %v3241
    %v3246 = vadd.f32 %v2677, %v3245
    %3247 = vrot.lane.b32.xlu0 %v2971, 32
    %v3248 = vpop.permute.xlu0 %3247
    %3250 = vrot.lane.b32.xlu0 %v2971, 64
    %v3251 = vpop.permute.xlu0 %3250
    %3253 = vrot.lane.b32.xlu0 %v2973, 96
    %v3254 = vpop.permute.xlu0 %3253
    %v3256 = vsel %vm104, %v2973, %v3248
    %v3257 = vsel %vm409, %v3256, %v3251
    %v3258 = vsel %vm411, %v3257, %v3254
    %v3259 = vld [vmem:[%s9] sm:$0xff]
    %v3260 = vld [vmem:[%s9 + $0x8] sm:$0xff]
    %v3261 = vld [vmem:[%s9 + $0x10] sm:$0xff]
    %v3262 = vld [vmem:[%s9 + $0x18] sm:$0xff]
    %v3263 = vld [vmem:[%s9 + $0x20] sm:$0xff]
    %v3264 = vld [vmem:[%s9 + $0x28] sm:$0xff]
    %v3265 = vld [vmem:[%s9 + $0x30] sm:$0xff]
    %v3266 = vld [vmem:[%s9 + $0x38] sm:$0xff]
    %v3267 = vld [vmem:[%s9 + $0x40] sm:$0xff]
    %v3268 = vld [vmem:[%s9 + $0x48] sm:$0xff]
    %v3269 = vld [vmem:[%s9 + $0x50] sm:$0xff]
    %v3270 = vld [vmem:[%s9 + $0x58] sm:$0xff]
    %v3271 = vld [vmem:[%s9 + $0x60] sm:$0xff]
    %v3272 = vld [vmem:[%s9 + $0x68] sm:$0xff]
    %v3273 = vld [vmem:[%s9 + $0x70] sm:$0xff]
    %v3274 = vld [vmem:[%s9 + $0x78] sm:$0xff]
    %v3275 = vld [vmem:[%s9 + $0x80] sm:$0xff]
    %v3276 = vld [vmem:[%s9 + $0x88] sm:$0xff]
    %v3277 = vld [vmem:[%s9 + $0x90] sm:$0xff]
    %v3278 = vld [vmem:[%s9 + $0x98] sm:$0xff]
    %v3279 = vld [vmem:[%s9 + $0xa0] sm:$0xff]
    %v3280 = vld [vmem:[%s9 + $0xa8] sm:$0xff]
    %v3281 = vld [vmem:[%s9 + $0xb0] sm:$0xff]
    %v3282 = vld [vmem:[%s9 + $0xb8] sm:$0xff]
    %v3283 = vld [vmem:[%s9 + $0xc0] sm:$0xff]
    %v3284 = vld [vmem:[%s9 + $0xc8] sm:$0xff]
    %v3285 = vld [vmem:[%s9 + $0xd0] sm:$0xff]
    %v3286 = vld [vmem:[%s9 + $0xd8] sm:$0xff]
    %v3287 = vld [vmem:[%s9 + $0xe0] sm:$0xff]
    %v3288 = vld [vmem:[%s9 + $0xe8] sm:$0xff]
    %v3289 = vld [vmem:[%s9 + $0xf0] sm:$0xff]
    %v3290 = vld [vmem:[%s9 + $0xf8] sm:$0xff]
    %v3291 = vld [vmem:[%s9 + $0x100] sm:$0xff]
    %v3292 = vld [vmem:[%s9 + $0x108] sm:$0xff]
    %v3293 = vld [vmem:[%s9 + $0x110] sm:$0xff]
    %v3294 = vld [vmem:[%s9 + $0x118] sm:$0xff]
    %v3295 = vld [vmem:[%s9 + $0x120] sm:$0xff]
    %v3296 = vld [vmem:[%s9 + $0x128] sm:$0xff]
    %v3297 = vld [vmem:[%s9 + $0x130] sm:$0xff]
    %v3298 = vld [vmem:[%s9 + $0x138] sm:$0xff]
    %v3299 = vld [vmem:[%s9 + $0x140] sm:$0xff]
    %v3300 = vld [vmem:[%s9 + $0x148] sm:$0xff]
    %v3301 = vld [vmem:[%s9 + $0x150] sm:$0xff]
    %v3302 = vld [vmem:[%s9 + $0x158] sm:$0xff]
    %v3303 = vld [vmem:[%s9 + $0x160] sm:$0xff]
    %v3304 = vld [vmem:[%s9 + $0x168] sm:$0xff]
    %v3305 = vld [vmem:[%s9 + $0x170] sm:$0xff]
    %v3306 = vld [vmem:[%s9 + $0x178] sm:$0xff]
    %v3307 = vld [vmem:[%s10] sm:$0x7]
    %v3309 = vlaneseq
    %v3310 = vshrl.u32 %v3309, 7
    %v3311 = vsub.s32 0, %v3310
    %v3312 = vrot.slane %v3307, %v3311
    %v3313 = vlaneseq
    %v3314 = vshrl.u32 %v3313, 7
    %v3315 = vsub.s32 1, %v3314
    %v3316 = vrot.slane %v3307, %v3315
    %v3317 = vlaneseq
    %v3318 = vshrl.u32 %v3317, 7
    %v3319 = vsub.s32 2, %v3318
    %v3320 = vrot.slane %v3307, %v3319
    %3324 = vmatprep.subr.mxu0 %v3305
    %3325 = vmatpush1.msra.mxu0 %v3304
    %3326 = vmatprep.subr.mxu0 %v3302
    %3327 = vmatpush1.msra.mxu0 %v3301
    %3328 = vmatprep.subr.mxu0 %v3299
    %3329 = vmatpush1.msra.mxu0 %v3298
    %3330 = vmatprep.subr.mxu0 %v3296
    %3331 = vmatpush1.msra.mxu0 %v3295
    %3332 = vmatprep.subr.mxu0 %v3293
    %3333 = vmatpush1.msra.mxu0 %v3292
    %3334 = vmatprep.subr.mxu0 %v3290
    %3335 = vmatpush1.msra.mxu0 %v3289
    %3336 = vmatprep.subr.mxu0 %v3287
    %3337 = vmatpush1.msra.mxu0 %v3286
    %3338 = vmatprep.subr.mxu0 %v3284
    %3339 = vmatpush1.msra.mxu0 %v3283
    %3340 = vmatprep.subr.mxu0 %v3281
    %3341 = vmatpush1.msra.mxu0 %v3280
    %3342 = vmatprep.subr.mxu0 %v3278
    %3343 = vmatpush1.msra.mxu0 %v3277
    %3344 = vmatprep.subr.mxu0 %v3275
    %3345 = vmatpush1.msra.mxu0 %v3274
    %3346 = vmatprep.subr.mxu0 %v3272
    %3347 = vmatpush1.msra.mxu0 %v3271
    %3348 = vmatprep.subr.mxu0 %v3269
    %3349 = vmatpush1.msra.mxu0 %v3268
    %3350 = vmatprep.subr.mxu0 %v3266
    %3351 = vmatpush1.msra.mxu0 %v3265
    %3352 = vmatprep.subr.mxu0 %v3263
    %3353 = vmatpush1.msra.mxu0 %v3262
    %3354 = vmatprep.subr.mxu0 %v3260
    %3355 = vmatpush1.msra.mxu0 %v3259
    %3356 = vmatprep.subr.mxu0 0.0
    %3357 = vmatpush2.msra.mxu0 0.0
    %3358 = vmatprep.subr.mxu0 0.0
    %3359 = vmatpush2.msra.mxu0 0.0
    %3360 = vmatprep.subr.mxu0 0.0
    %3361 = vmatpush2.msra.mxu0 0.0
    %3362 = vmatprep.subr.mxu0 0.0
    %3363 = vmatpush2.msra.mxu0 0.0
    %3364 = vmatprep.subr.mxu0 0.0
    %3365 = vmatpush2.msra.mxu0 0.0
    %3366 = vmatprep.subr.mxu0 0.0
    %3367 = vmatpush2.msra.mxu0 0.0
    %3368 = vmatprep.subr.mxu0 0.0
    %3369 = vmatpush2.msra.mxu0 0.0
    %3370 = vmatprep.subr.mxu0 0.0
    %3371 = vmatpush2.msra.mxu0 0.0
    %3372 = vmatprep.subr.mxu0 0.0
    %3373 = vmatpush2.msra.mxu0 0.0
    %3374 = vmatprep.subr.mxu0 0.0
    %3375 = vmatpush2.msra.mxu0 0.0
    %3376 = vmatprep.subr.mxu0 0.0
    %3377 = vmatpush2.msra.mxu0 0.0
    %3378 = vmatprep.subr.mxu0 0.0
    %3379 = vmatpush2.msra.mxu0 0.0
    %3380 = vmatprep.subr.mxu0 0.0
    %3381 = vmatpush2.msra.mxu0 0.0
    %3382 = vmatprep.subr.mxu0 0.0
    %3383 = vmatpush2.msra.mxu0 0.0
    %3384 = vmatprep.subr.mxu0 0.0
    %3385 = vmatpush2.msra.mxu0 0.0
    %3386 = vmatprep.subr.mxu0 0.0
    %3387 = vmatpush2.msra.mxu0 0.0
    %3388 = vmatprep.mubr.f32.mxu0 0.0
    %3389 = vmatmul.mubr.f32.gmra.mxu0 %v3258
    %v3390 = vpop.f32.mrf.mxu0
    %v3391 = vadd.f32 %v3312, %v3390
    %v3392 = vpop.f32.mrf.mxu0
    %v3393 = vadd.f32 %v3316, %v3392
    %3394 = vdwg.mxu0
    %3395 = vmatprep.subr.mxu0 0.0
    %3396 = vmatpush1.msra.mxu0 %v3306
    %3397 = vmatprep.subr.mxu0 0.0
    %3398 = vmatpush1.msra.mxu0 %v3303
    %3399 = vmatprep.subr.mxu0 0.0
    %3400 = vmatpush1.msra.mxu0 %v3300
    %3401 = vmatprep.subr.mxu0 0.0
    %3402 = vmatpush1.msra.mxu0 %v3297
    %3403 = vmatprep.subr.mxu0 0.0
    %3404 = vmatpush1.msra.mxu0 %v3294
    %3405 = vmatprep.subr.mxu0 0.0
    %3406 = vmatpush1.msra.mxu0 %v3291
    %3407 = vmatprep.subr.mxu0 0.0
    %3408 = vmatpush1.msra.mxu0 %v3288
    %3409 = vmatprep.subr.mxu0 0.0
    %3410 = vmatpush1.msra.mxu0 %v3285
    %3411 = vmatprep.subr.mxu0 0.0
    %3412 = vmatpush1.msra.mxu0 %v3282
    %3413 = vmatprep.subr.mxu0 0.0
    %3414 = vmatpush1.msra.mxu0 %v3279
    %3415 = vmatprep.subr.mxu0 0.0
    %3416 = vmatpush1.msra.mxu0 %v3276
    %3417 = vmatprep.subr.mxu0 0.0
    %3418 = vmatpush1.msra.mxu0 %v3273
    %3419 = vmatprep.subr.mxu0 0.0
    %3420 = vmatpush1.msra.mxu0 %v3270
    %3421 = vmatprep.subr.mxu0 0.0
    %3422 = vmatpush1.msra.mxu0 %v3267
    %3423 = vmatprep.subr.mxu0 0.0
    %3424 = vmatpush1.msra.mxu0 %v3264
    %3425 = vmatprep.subr.mxu0 0.0
    %3426 = vmatpush1.msra.mxu0 %v3261
    %3427 = vmatprep.subr.mxu0 0.0
    %3428 = vmatpush2.msra.mxu0 0.0
    %3429 = vmatprep.subr.mxu0 0.0
    %3430 = vmatpush2.msra.mxu0 0.0
    %3431 = vmatprep.subr.mxu0 0.0
    %3432 = vmatpush2.msra.mxu0 0.0
    %3433 = vmatprep.subr.mxu0 0.0
    %3434 = vmatpush2.msra.mxu0 0.0
    %3435 = vmatprep.subr.mxu0 0.0
    %3436 = vmatpush2.msra.mxu0 0.0
    %3437 = vmatprep.subr.mxu0 0.0
    %3438 = vmatpush2.msra.mxu0 0.0
    %3439 = vmatprep.subr.mxu0 0.0
    %3440 = vmatpush2.msra.mxu0 0.0
    %3441 = vmatprep.subr.mxu0 0.0
    %3442 = vmatpush2.msra.mxu0 0.0
    %3443 = vmatprep.subr.mxu0 0.0
    %3444 = vmatpush2.msra.mxu0 0.0
    %3445 = vmatprep.subr.mxu0 0.0
    %3446 = vmatpush2.msra.mxu0 0.0
    %3447 = vmatprep.subr.mxu0 0.0
    %3448 = vmatpush2.msra.mxu0 0.0
    %3449 = vmatprep.subr.mxu0 0.0
    %3450 = vmatpush2.msra.mxu0 0.0
    %3451 = vmatprep.subr.mxu0 0.0
    %3452 = vmatpush2.msra.mxu0 0.0
    %3453 = vmatprep.subr.mxu0 0.0
    %3454 = vmatpush2.msra.mxu0 0.0
    %3455 = vmatprep.subr.mxu0 0.0
    %3456 = vmatpush2.msra.mxu0 0.0
    %3457 = vmatprep.subr.mxu0 0.0
    %3458 = vmatpush2.msra.mxu0 0.0
    %3459 = vmatprep.mubr.f32.mxu0 0.0
    %3460 = vmatmul.mubr.f32.gmra.mxu0 %v3258
    %v3461 = vpop.f32.mrf.mxu0
    %v3462 = vadd.f32 %v3320, %v3461
    %v3463 = vpop.f32.mrf.mxu0
    %3464 = vdwg.mxu0
    %3467 = vrot.lane.b32.xlu0 %v3391, 32
    %v3468 = vpop.permute.xlu0 %3467
    %3469 = vrot.lane.b32.xlu0 %v3393, 32
    %v3470 = vpop.permute.xlu0 %3469
    %v3471 = vsel %vm104, %v3468, %v3470
    %v3473 = vadd.f32 %v3391, %v3471
    %v3474 = vxor.u32 %v3473, 2147483648
    %v3475 = vmul.f32 %v3474, 1.442695
    %v3476 = vpow.pop %v3475
    %v3477 = vadd.f32 %v3476, 1.0
    %v3478 = vrcp.pop %v3477
    %v3479 = vmul.f32 1.0, %v3478
    %3480 = vrot.lane.b32.xlu0 %v3393, 96
    %v3481 = vpop.permute.xlu0 %3480
    %v3483 = vmul.f32 %v3479, %v3481
    %3485 = vrot.lane.b32.xlu0 %v3483, 64
    %v3486 = vpop.permute.xlu0 %3485
    %v3488 = vadd.f32 %v3391, %v3486
    %v3489 = vtanh.pop %v3488
    %v3490 = vsub.f32 1.0, %v3479
    %3492 = vrot.lane.b32.xlu0 %v3489, 96
    %v3493 = vpop.permute.xlu0 %3492
    %v3495 = vmul.f32 %v3490, %v3493
    %v3496 = vmul.f32 %v3479, %v3248
    %v3497 = vadd.f32 %v3495, %v3496
    %3499 = vrot.lane.b32.xlu0 %v3462, 32
    %v3500 = vpop.permute.xlu0 %3499
    %v3502 = vadd.f32 %v3393, %v3500
    %v3503 = vxor.u32 %v3502, 2147483648
    %v3504 = vmul.f32 %v3503, 1.442695
    %v3505 = vpow.pop %v3504
    %v3506 = vadd.f32 %v3505, 1.0
    %v3507 = vrcp.pop %v3506
    %v3508 = vmul.f32 1.0, %v3507
    %3509 = vrot.lane.b32.xlu0 %v3462, 96
    %v3510 = vpop.permute.xlu0 %3509
    %v3512 = vmul.f32 %v3508, %v3510
    %3514 = vrot.lane.b32.xlu0 %v3512, 64
    %v3515 = vpop.permute.xlu0 %3514
    %v3517 = vadd.f32 %v3462, %v3515
    %v3518 = vtanh.pop %v3517
    %v3519 = vsub.f32 1.0, %v3508
    %3521 = vrot.lane.b32.xlu0 %v3518, 96
    %v3522 = vpop.permute.xlu0 %3521
    %v3524 = vmul.f32 %v3519, %v3522
    %v3525 = vmul.f32 %v3508, %v3254
    %v3526 = vadd.f32 %v3524, %v3525
    %3528 = vrot.lane.b32.xlu0 %v3497, 96
    %v3529 = vpop.permute.xlu0 %3528
    %3531 = vst.msk [vmem:[%s2970] sm:$0x1] %vm685, %v3529
    %3533 = vrot.lane.b32.xlu0 %v3526, 32
    %v3534 = vpop.permute.xlu0 %3533
    %3536 = vst.msk [vmem:[%s2972] sm:$0x1] %vm685, %v3534
    %s3537 = sld [smem:[#allocation2 + $0x6]]
    %s3538 = sld [smem:[#allocation5 + $0x6]]
    %s3539 = scalar_lea.vmem [#allocation11], %s3537
    %v3540 = vld [vmem:[%s3539] sm:$0x1]
    %s3541 = scalar_lea.vmem [#allocation12], %s3538
    %v3542 = vld [vmem:[%s3541] sm:$0x1]
    %s3543 = sld [smem:[#allocation7 + $0x18]]
    %s3544 = scalar_lea.vmem [#allocation11], %s3543
    %v3545 = vld [vmem:[%s3544] sm:$0x1]
    %s3546 = sld [smem:[#allocation7 + $0x19]]
    %s3547 = scalar_lea.vmem [#allocation11], %s3546
    %v3548 = vld [vmem:[%s3547] sm:$0x1]
    %s3549 = sld [smem:[#allocation7 + $0x1a]]
    %s3550 = scalar_lea.vmem [#allocation11], %s3549
    %v3551 = vld [vmem:[%s3550] sm:$0x1]
    %s3552 = sld [smem:[#allocation7 + $0x1b]]
    %s3553 = scalar_lea.vmem [#allocation11], %s3552
    %v3554 = vld [vmem:[%s3553] sm:$0x1]
    %s3555 = sld [smem:[#allocation8 + $0x18]]
    %s3556 = scalar_lea.vmem [#allocation12], %s3555
    %v3557 = vld [vmem:[%s3556] sm:$0x1]
    %s3558 = sld [smem:[#allocation8 + $0x19]]
    %s3559 = scalar_lea.vmem [#allocation12], %s3558
    %v3560 = vld [vmem:[%s3559] sm:$0x1]
    %s3561 = sld [smem:[#allocation8 + $0x1a]]
    %s3562 = scalar_lea.vmem [#allocation12], %s3561
    %v3563 = vld [vmem:[%s3562] sm:$0x1]
    %s3564 = sld [smem:[#allocation8 + $0x1b]]
    %s3565 = scalar_lea.vmem [#allocation12], %s3564
    %v3566 = vld [vmem:[%s3565] sm:$0x1]
    %v3568 = vrot.slane %v3548, 7
    %v3571 = vrot.slane %v3551, 6
    %v3574 = vrot.slane %v3554, 5
    %v3576 = vsel %vm154, %v3545, %v3568
    %v3577 = vsel %vm156, %v3576, %v3571
    %v3578 = vsel %vm158, %v3577, %v3574
    %v3580 = vrot.slane %v3557, 7
    %v3583 = vrot.slane %v3560, 6
    %v3586 = vrot.slane %v3563, 5
    %v3589 = vrot.slane %v3566, 4
    %v3591 = vsel %vm154, %v3542, %v3580
    %v3592 = vsel %vm156, %v3591, %v3583
    %v3593 = vsel %vm158, %v3592, %v3586
    %v3594 = vsel %vm175, %v3593, %v3589
    %v3596 = vsel %vm104, %v3540, 0
    %v3599 = vsel %vm104, %v3594, 0
    %3601 = vmatprep.subr.mxu0 0.0
    %3602 = vmatpush1.xpose.msra.mxu0 0.0
    %3603 = vmatprep.subr.mxu0 0.0
    %3604 = vmatpush1.xpose.msra.mxu0 0.0
    %3605 = vmatprep.subr.mxu0 0.0
    %3606 = vmatpush1.xpose.msra.mxu0 0.0
    %3607 = vmatprep.subr.mxu0 0.0
    %3608 = vmatpush1.xpose.msra.mxu0 0.0
    %3609 = vmatprep.subr.mxu0 0.0
    %3610 = vmatpush1.xpose.msra.mxu0 0.0
    %3611 = vmatprep.subr.mxu0 0.0
    %3612 = vmatpush1.xpose.msra.mxu0 0.0
    %3613 = vmatprep.subr.mxu0 0.0
    %3614 = vmatpush1.xpose.msra.mxu0 0.0
    %3615 = vmatprep.subr.mxu0 0.0
    %3616 = vmatpush1.xpose.msra.mxu0 0.0
    %3617 = vmatprep.subr.mxu0 0.0
    %3618 = vmatpush1.xpose.msra.mxu0 0.0
    %3619 = vmatprep.subr.mxu0 0.0
    %3620 = vmatpush1.xpose.msra.mxu0 0.0
    %3621 = vmatprep.subr.mxu0 0.0
    %3622 = vmatpush1.xpose.msra.mxu0 0.0
    %3623 = vmatprep.subr.mxu0 0.0
    %3624 = vmatpush1.xpose.msra.mxu0 0.0
    %3625 = vmatprep.subr.mxu0 0.0
    %3626 = vmatpush1.xpose.msra.mxu0 0.0
    %3627 = vmatprep.subr.mxu0 0.0
    %3628 = vmatpush1.xpose.msra.mxu0 0.0
    %3629 = vmatprep.subr.mxu0 0.0
    %3630 = vmatpush1.xpose.msra.mxu0 0.0
    %3631 = vmatprep.subr.mxu0 0.0
    %3632 = vmatpush1.xpose.msra.mxu0 %v3599
    %3633 = vmatprep.subr.mxu0 0.0
    %3634 = vmatpush2.xpose.msra.mxu0 0.0
    %3635 = vmatprep.subr.mxu0 0.0
    %3636 = vmatpush2.xpose.msra.mxu0 0.0
    %3637 = vmatprep.subr.mxu0 0.0
    %3638 = vmatpush2.xpose.msra.mxu0 0.0
    %3639 = vmatprep.subr.mxu0 0.0
    %3640 = vmatpush2.xpose.msra.mxu0 0.0
    %3641 = vmatprep.subr.mxu0 0.0
    %3642 = vmatpush2.xpose.msra.mxu0 0.0
    %3643 = vmatprep.subr.mxu0 0.0
    %3644 = vmatpush2.xpose.msra.mxu0 0.0
    %3645 = vmatprep.subr.mxu0 0.0
    %3646 = vmatpush2.xpose.msra.mxu0 0.0
    %3647 = vmatprep.subr.mxu0 0.0
    %3648 = vmatpush2.xpose.msra.mxu0 0.0
    %3649 = vmatprep.subr.mxu0 0.0
    %3650 = vmatpush2.xpose.msra.mxu0 0.0
    %3651 = vmatprep.subr.mxu0 0.0
    %3652 = vmatpush2.xpose.msra.mxu0 0.0
    %3653 = vmatprep.subr.mxu0 0.0
    %3654 = vmatpush2.xpose.msra.mxu0 0.0
    %3655 = vmatprep.subr.mxu0 0.0
    %3656 = vmatpush2.xpose.msra.mxu0 0.0
    %3657 = vmatprep.subr.mxu0 0.0
    %3658 = vmatpush2.xpose.msra.mxu0 0.0
    %3659 = vmatprep.subr.mxu0 0.0
    %3660 = vmatpush2.xpose.msra.mxu0 0.0
    %3661 = vmatprep.subr.mxu0 0.0
    %3662 = vmatpush2.xpose.msra.mxu0 0.0
    %3663 = vmatprep.subr.mxu0 0.0
    %3664 = vmatpush2.xpose.msra.mxu0 0.0
    %3665 = vmatprep.mubr.f32.mxu0 0.0
    %3666 = vmatmul.mubr.f32.gmra.mxu0 %v3596
    %v3667 = vpop.f32.mrf.mxu0
    %v3668 = vadd.f32 0.0, %v3667
    %v3669 = vpop.f32.mrf.mxu0
    %3670 = vdwg.mxu0
    %v3671 = vmax.f32 %v3668, 0.0
    %v3672 = vand.u32 2147483647, %v3668
    %v3673 = vsub.f32 0.0, %v3672
    %v3674 = vmul.f32 %v3673, 1.442695
    %v3675 = vpow.pop %v3674
    %v3676 = vadd.f32 %v3675, 1.0
    %v3677 = vlog2.pop %v3676
    %v3678 = vmul.f32 %v3677, 0.6931472
    %v3679 = vmul.f32 -0.5, %v3675
    %v3680 = vadd.f32 %v3679, 1.0
    %v3681 = vmul.f32 %v3680, %v3675
    %v3682 = vand.u32 2147483647, %v3675
    %vm3683 = vcmp.lt.f32.partialorder %v3682, 0.0004427343
    %v3684 = vsel %vm3683, %v3681, %v3678
    %v3685 = vadd.f32 %v3671, %v3684
    %v3687 = vsel %vm104, %v3542, 0
    %v3690 = vsel %vm104, %v3578, 0
    %3692 = vmatprep.subr.mxu0 0.0
    %3693 = vmatpush1.xpose.msra.mxu0 0.0
    %3694 = vmatprep.subr.mxu0 0.0
    %3695 = vmatpush1.xpose.msra.mxu0 0.0
    %3696 = vmatprep.subr.mxu0 0.0
    %3697 = vmatpush1.xpose.msra.mxu0 0.0
    %3698 = vmatprep.subr.mxu0 0.0
    %3699 = vmatpush1.xpose.msra.mxu0 0.0
    %3700 = vmatprep.subr.mxu0 0.0
    %3701 = vmatpush1.xpose.msra.mxu0 0.0
    %3702 = vmatprep.subr.mxu0 0.0
    %3703 = vmatpush1.xpose.msra.mxu0 0.0
    %3704 = vmatprep.subr.mxu0 0.0
    %3705 = vmatpush1.xpose.msra.mxu0 0.0
    %3706 = vmatprep.subr.mxu0 0.0
    %3707 = vmatpush1.xpose.msra.mxu0 0.0
    %3708 = vmatprep.subr.mxu0 0.0
    %3709 = vmatpush1.xpose.msra.mxu0 0.0
    %3710 = vmatprep.subr.mxu0 0.0
    %3711 = vmatpush1.xpose.msra.mxu0 0.0
    %3712 = vmatprep.subr.mxu0 0.0
    %3713 = vmatpush1.xpose.msra.mxu0 0.0
    %3714 = vmatprep.subr.mxu0 0.0
    %3715 = vmatpush1.xpose.msra.mxu0 0.0
    %3716 = vmatprep.subr.mxu0 0.0
    %3717 = vmatpush1.xpose.msra.mxu0 0.0
    %3718 = vmatprep.subr.mxu0 0.0
    %3719 = vmatpush1.xpose.msra.mxu0 0.0
    %3720 = vmatprep.subr.mxu0 0.0
    %3721 = vmatpush1.xpose.msra.mxu0 0.0
    %3722 = vmatprep.subr.mxu0 0.0
    %3723 = vmatpush1.xpose.msra.mxu0 %v3690
    %3724 = vmatprep.subr.mxu0 0.0
    %3725 = vmatpush2.xpose.msra.mxu0 0.0
    %3726 = vmatprep.subr.mxu0 0.0
    %3727 = vmatpush2.xpose.msra.mxu0 0.0
    %3728 = vmatprep.subr.mxu0 0.0
    %3729 = vmatpush2.xpose.msra.mxu0 0.0
    %3730 = vmatprep.subr.mxu0 0.0
    %3731 = vmatpush2.xpose.msra.mxu0 0.0
    %3732 = vmatprep.subr.mxu0 0.0
    %3733 = vmatpush2.xpose.msra.mxu0 0.0
    %3734 = vmatprep.subr.mxu0 0.0
    %3735 = vmatpush2.xpose.msra.mxu0 0.0
    %3736 = vmatprep.subr.mxu0 0.0
    %3737 = vmatpush2.xpose.msra.mxu0 0.0
    %3738 = vmatprep.subr.mxu0 0.0
    %3739 = vmatpush2.xpose.msra.mxu0 0.0
    %3740 = vmatprep.subr.mxu0 0.0
    %3741 = vmatpush2.xpose.msra.mxu0 0.0
    %3742 = vmatprep.subr.mxu0 0.0
    %3743 = vmatpush2.xpose.msra.mxu0 0.0
    %3744 = vmatprep.subr.mxu0 0.0
    %3745 = vmatpush2.xpose.msra.mxu0 0.0
    %3746 = vmatprep.subr.mxu0 0.0
    %3747 = vmatpush2.xpose.msra.mxu0 0.0
    %3748 = vmatprep.subr.mxu0 0.0
    %3749 = vmatpush2.xpose.msra.mxu0 0.0
    %3750 = vmatprep.subr.mxu0 0.0
    %3751 = vmatpush2.xpose.msra.mxu0 0.0
    %3752 = vmatprep.subr.mxu0 0.0
    %3753 = vmatpush2.xpose.msra.mxu0 0.0
    %3754 = vmatprep.subr.mxu0 0.0
    %3755 = vmatpush2.xpose.msra.mxu0 0.0
    %3756 = vmatprep.mubr.f32.mxu0 0.0
    %3757 = vmatmul.mubr.f32.gmra.mxu0 %v3687
    %v3758 = vpop.f32.mrf.mxu0
    %v3759 = vadd.f32 0.0, %v3758
    %v3760 = vpop.f32.mrf.mxu0
    %3761 = vdwg.mxu0
    %v3762 = vmax.f32 %v3759, 0.0
    %v3763 = vand.u32 2147483647, %v3759
    %v3764 = vsub.f32 0.0, %v3763
    %v3765 = vmul.f32 %v3764, 1.442695
    %v3766 = vpow.pop %v3765
    %v3767 = vadd.f32 %v3766, 1.0
    %v3768 = vlog2.pop %v3767
    %v3769 = vmul.f32 %v3768, 0.6931472
    %v3770 = vmul.f32 -0.5, %v3766
    %v3771 = vadd.f32 %v3770, 1.0
    %v3772 = vmul.f32 %v3771, %v3766
    %v3773 = vand.u32 2147483647, %v3766
    %vm3774 = vcmp.lt.f32.partialorder %v3773, 0.0004427343
    %v3775 = vsel %vm3774, %v3772, %v3769
    %v3776 = vadd.f32 %v3762, %v3775
    %v3777 = vmax.f32 %v3685, 1e-20
    %s3778 = sld [smem:[#allocation10 + $0x6]]
    %v3779 = vmul.f32 %v3777, 2.0
    %v3780 = vrcp.pop %v3779
    %v3781 = vmul.f32 3.1415927, %v3780
    %v3782 = vrsqrt.pop %v3781
    %v3783 = vmul.f32 %v3781, %v3782
    %vm3784 = vcmp.eq.f32.partialorder %v3781, inf
    %v3785 = vsel %vm3784, %v3781, %v3783
    %vm3786 = vcmp.eq.f32.partialorder %v3781, 0.0
    %v3787 = vand.u32 %v3781, 2147483648
    %v3788 = vsel %vm3786, %v3787, %v3785
    %v3789 = vstv %s3778
    %v3790 = vsub.f32 %v3788, %v3789
    %v3791 = vand.u32 2147483647, %v3790
    %v3792 = vadd.f32 %v3223, %v3791
    %v3793 = vmul.f32 %v3790, %v3790
    %v3794 = vadd.f32 %v3225, %v3793
    %v3795 = vld [vmem:[%s5 + $0x6] sm:$0x1]
    %v3796 = vmul.f32 %v3776, %v3795
    %v3797 = vld [vmem:[%s6 + $0x6] sm:$0x1]
    %3799 = vrot.lane.b32.xlu0 %v3797, 1
    %v3800 = vpop.permute.xlu0 %3799
    %v3802 = vmul.f32 %v3685, %v3800
    %3804 = vrot.lane.b32.xlu0 %v3802, 127
    %v3805 = vpop.permute.xlu0 %3804
    %v3807 = vadd.f32 %v3796, %v3805
    %v3808 = vsel %vm390, %v3807, 0.0
    %3809 = vadd.xlane.f32.xlu0 %v3808
    %v3810 = vpop.xlane.xlu0 %3809
    %v3811 = vlog2.pop %v3777
    %v3812 = vmul.f32 %v3811, 0.6931472
    %v3813 = vsub.f32 0.0, %v3812
    %v3814 = vadd.f32 %v3813, %v3810
    %v3815 = vadd.f32 %v3246, %v3814
    %3816 = vrot.lane.b32.xlu0 %v3540, 32
    %v3817 = vpop.permute.xlu0 %3816
    %3819 = vrot.lane.b32.xlu0 %v3540, 64
    %v3820 = vpop.permute.xlu0 %3819
    %3822 = vrot.lane.b32.xlu0 %v3542, 96
    %v3823 = vpop.permute.xlu0 %3822
    %v3825 = vsel %vm104, %v3542, %v3817
    %v3826 = vsel %vm409, %v3825, %v3820
    %v3827 = vsel %vm411, %v3826, %v3823
    %v3828 = vld [vmem:[%s9] sm:$0xff]
    %v3829 = vld [vmem:[%s9 + $0x8] sm:$0xff]
    %v3830 = vld [vmem:[%s9 + $0x10] sm:$0xff]
    %v3831 = vld [vmem:[%s9 + $0x18] sm:$0xff]
    %v3832 = vld [vmem:[%s9 + $0x20] sm:$0xff]
    %v3833 = vld [vmem:[%s9 + $0x28] sm:$0xff]
    %v3834 = vld [vmem:[%s9 + $0x30] sm:$0xff]
    %v3835 = vld [vmem:[%s9 + $0x38] sm:$0xff]
    %v3836 = vld [vmem:[%s9 + $0x40] sm:$0xff]
    %v3837 = vld [vmem:[%s9 + $0x48] sm:$0xff]
    %v3838 = vld [vmem:[%s9 + $0x50] sm:$0xff]
    %v3839 = vld [vmem:[%s9 + $0x58] sm:$0xff]
    %v3840 = vld [vmem:[%s9 + $0x60] sm:$0xff]
    %v3841 = vld [vmem:[%s9 + $0x68] sm:$0xff]
    %v3842 = vld [vmem:[%s9 + $0x70] sm:$0xff]
    %v3843 = vld [vmem:[%s9 + $0x78] sm:$0xff]
    %v3844 = vld [vmem:[%s9 + $0x80] sm:$0xff]
    %v3845 = vld [vmem:[%s9 + $0x88] sm:$0xff]
    %v3846 = vld [vmem:[%s9 + $0x90] sm:$0xff]
    %v3847 = vld [vmem:[%s9 + $0x98] sm:$0xff]
    %v3848 = vld [vmem:[%s9 + $0xa0] sm:$0xff]
    %v3849 = vld [vmem:[%s9 + $0xa8] sm:$0xff]
    %v3850 = vld [vmem:[%s9 + $0xb0] sm:$0xff]
    %v3851 = vld [vmem:[%s9 + $0xb8] sm:$0xff]
    %v3852 = vld [vmem:[%s9 + $0xc0] sm:$0xff]
    %v3853 = vld [vmem:[%s9 + $0xc8] sm:$0xff]
    %v3854 = vld [vmem:[%s9 + $0xd0] sm:$0xff]
    %v3855 = vld [vmem:[%s9 + $0xd8] sm:$0xff]
    %v3856 = vld [vmem:[%s9 + $0xe0] sm:$0xff]
    %v3857 = vld [vmem:[%s9 + $0xe8] sm:$0xff]
    %v3858 = vld [vmem:[%s9 + $0xf0] sm:$0xff]
    %v3859 = vld [vmem:[%s9 + $0xf8] sm:$0xff]
    %v3860 = vld [vmem:[%s9 + $0x100] sm:$0xff]
    %v3861 = vld [vmem:[%s9 + $0x108] sm:$0xff]
    %v3862 = vld [vmem:[%s9 + $0x110] sm:$0xff]
    %v3863 = vld [vmem:[%s9 + $0x118] sm:$0xff]
    %v3864 = vld [vmem:[%s9 + $0x120] sm:$0xff]
    %v3865 = vld [vmem:[%s9 + $0x128] sm:$0xff]
    %v3866 = vld [vmem:[%s9 + $0x130] sm:$0xff]
    %v3867 = vld [vmem:[%s9 + $0x138] sm:$0xff]
    %v3868 = vld [vmem:[%s9 + $0x140] sm:$0xff]
    %v3869 = vld [vmem:[%s9 + $0x148] sm:$0xff]
    %v3870 = vld [vmem:[%s9 + $0x150] sm:$0xff]
    %v3871 = vld [vmem:[%s9 + $0x158] sm:$0xff]
    %v3872 = vld [vmem:[%s9 + $0x160] sm:$0xff]
    %v3873 = vld [vmem:[%s9 + $0x168] sm:$0xff]
    %v3874 = vld [vmem:[%s9 + $0x170] sm:$0xff]
    %v3875 = vld [vmem:[%s9 + $0x178] sm:$0xff]
    %v3876 = vld [vmem:[%s10] sm:$0x7]
    %v3878 = vlaneseq
    %v3879 = vshrl.u32 %v3878, 7
    %v3880 = vsub.s32 0, %v3879
    %v3881 = vrot.slane %v3876, %v3880
    %v3882 = vlaneseq
    %v3883 = vshrl.u32 %v3882, 7
    %v3884 = vsub.s32 1, %v3883
    %v3885 = vrot.slane %v3876, %v3884
    %v3886 = vlaneseq
    %v3887 = vshrl.u32 %v3886, 7
    %v3888 = vsub.s32 2, %v3887
    %v3889 = vrot.slane %v3876, %v3888
    %3893 = vmatprep.subr.mxu0 %v3874
    %3894 = vmatpush1.msra.mxu0 %v3873
    %3895 = vmatprep.subr.mxu0 %v3871
    %3896 = vmatpush1.msra.mxu0 %v3870
    %3897 = vmatprep.subr.mxu0 %v3868
    %3898 = vmatpush1.msra.mxu0 %v3867
    %3899 = vmatprep.subr.mxu0 %v3865
    %3900 = vmatpush1.msra.mxu0 %v3864
    %3901 = vmatprep.subr.mxu0 %v3862
    %3902 = vmatpush1.msra.mxu0 %v3861
    %3903 = vmatprep.subr.mxu0 %v3859
    %3904 = vmatpush1.msra.mxu0 %v3858
    %3905 = vmatprep.subr.mxu0 %v3856
    %3906 = vmatpush1.msra.mxu0 %v3855
    %3907 = vmatprep.subr.mxu0 %v3853
    %3908 = vmatpush1.msra.mxu0 %v3852
    %3909 = vmatprep.subr.mxu0 %v3850
    %3910 = vmatpush1.msra.mxu0 %v3849
    %3911 = vmatprep.subr.mxu0 %v3847
    %3912 = vmatpush1.msra.mxu0 %v3846
    %3913 = vmatprep.subr.mxu0 %v3844
    %3914 = vmatpush1.msra.mxu0 %v3843
    %3915 = vmatprep.subr.mxu0 %v3841
    %3916 = vmatpush1.msra.mxu0 %v3840
    %3917 = vmatprep.subr.mxu0 %v3838
    %3918 = vmatpush1.msra.mxu0 %v3837
    %3919 = vmatprep.subr.mxu0 %v3835
    %3920 = vmatpush1.msra.mxu0 %v3834
    %3921 = vmatprep.subr.mxu0 %v3832
    %3922 = vmatpush1.msra.mxu0 %v3831
    %3923 = vmatprep.subr.mxu0 %v3829
    %3924 = vmatpush1.msra.mxu0 %v3828
    %3925 = vmatprep.subr.mxu0 0.0
    %3926 = vmatpush2.msra.mxu0 0.0
    %3927 = vmatprep.subr.mxu0 0.0
    %3928 = vmatpush2.msra.mxu0 0.0
    %3929 = vmatprep.subr.mxu0 0.0
    %3930 = vmatpush2.msra.mxu0 0.0
    %3931 = vmatprep.subr.mxu0 0.0
    %3932 = vmatpush2.msra.mxu0 0.0
    %3933 = vmatprep.subr.mxu0 0.0
    %3934 = vmatpush2.msra.mxu0 0.0
    %3935 = vmatprep.subr.mxu0 0.0
    %3936 = vmatpush2.msra.mxu0 0.0
    %3937 = vmatprep.subr.mxu0 0.0
    %3938 = vmatpush2.msra.mxu0 0.0
    %3939 = vmatprep.subr.mxu0 0.0
    %3940 = vmatpush2.msra.mxu0 0.0
    %3941 = vmatprep.subr.mxu0 0.0
    %3942 = vmatpush2.msra.mxu0 0.0
    %3943 = vmatprep.subr.mxu0 0.0
    %3944 = vmatpush2.msra.mxu0 0.0
    %3945 = vmatprep.subr.mxu0 0.0
    %3946 = vmatpush2.msra.mxu0 0.0
    %3947 = vmatprep.subr.mxu0 0.0
    %3948 = vmatpush2.msra.mxu0 0.0
    %3949 = vmatprep.subr.mxu0 0.0
    %3950 = vmatpush2.msra.mxu0 0.0
    %3951 = vmatprep.subr.mxu0 0.0
    %3952 = vmatpush2.msra.mxu0 0.0
    %3953 = vmatprep.subr.mxu0 0.0
    %3954 = vmatpush2.msra.mxu0 0.0
    %3955 = vmatprep.subr.mxu0 0.0
    %3956 = vmatpush2.msra.mxu0 0.0
    %3957 = vmatprep.mubr.f32.mxu0 0.0
    %3958 = vmatmul.mubr.f32.gmra.mxu0 %v3827
    %v3959 = vpop.f32.mrf.mxu0
    %v3960 = vadd.f32 %v3881, %v3959
    %v3961 = vpop.f32.mrf.mxu0
    %v3962 = vadd.f32 %v3885, %v3961
    %3963 = vdwg.mxu0
    %3964 = vmatprep.subr.mxu0 0.0
    %3965 = vmatpush1.msra.mxu0 %v3875
    %3966 = vmatprep.subr.mxu0 0.0
    %3967 = vmatpush1.msra.mxu0 %v3872
    %3968 = vmatprep.subr.mxu0 0.0
    %3969 = vmatpush1.msra.mxu0 %v3869
    %3970 = vmatprep.subr.mxu0 0.0
    %3971 = vmatpush1.msra.mxu0 %v3866
    %3972 = vmatprep.subr.mxu0 0.0
    %3973 = vmatpush1.msra.mxu0 %v3863
    %3974 = vmatprep.subr.mxu0 0.0
    %3975 = vmatpush1.msra.mxu0 %v3860
    %3976 = vmatprep.subr.mxu0 0.0
    %3977 = vmatpush1.msra.mxu0 %v3857
    %3978 = vmatprep.subr.mxu0 0.0
    %3979 = vmatpush1.msra.mxu0 %v3854
    %3980 = vmatprep.subr.mxu0 0.0
    %3981 = vmatpush1.msra.mxu0 %v3851
    %3982 = vmatprep.subr.mxu0 0.0
    %3983 = vmatpush1.msra.mxu0 %v3848
    %3984 = vmatprep.subr.mxu0 0.0
    %3985 = vmatpush1.msra.mxu0 %v3845
    %3986 = vmatprep.subr.mxu0 0.0
    %3987 = vmatpush1.msra.mxu0 %v3842
    %3988 = vmatprep.subr.mxu0 0.0
    %3989 = vmatpush1.msra.mxu0 %v3839
    %3990 = vmatprep.subr.mxu0 0.0
    %3991 = vmatpush1.msra.mxu0 %v3836
    %3992 = vmatprep.subr.mxu0 0.0
    %3993 = vmatpush1.msra.mxu0 %v3833
    %3994 = vmatprep.subr.mxu0 0.0
    %3995 = vmatpush1.msra.mxu0 %v3830
    %3996 = vmatprep.subr.mxu0 0.0
    %3997 = vmatpush2.msra.mxu0 0.0
    %3998 = vmatprep.subr.mxu0 0.0
    %3999 = vmatpush2.msra.mxu0 0.0
    %4000 = vmatprep.subr.mxu0 0.0
    %4001 = vmatpush2.msra.mxu0 0.0
    %4002 = vmatprep.subr.mxu0 0.0
    %4003 = vmatpush2.msra.mxu0 0.0
    %4004 = vmatprep.subr.mxu0 0.0
    %4005 = vmatpush2.msra.mxu0 0.0
    %4006 = vmatprep.subr.mxu0 0.0
    %4007 = vmatpush2.msra.mxu0 0.0
    %4008 = vmatprep.subr.mxu0 0.0
    %4009 = vmatpush2.msra.mxu0 0.0
    %4010 = vmatprep.subr.mxu0 0.0
    %4011 = vmatpush2.msra.mxu0 0.0
    %4012 = vmatprep.subr.mxu0 0.0
    %4013 = vmatpush2.msra.mxu0 0.0
    %4014 = vmatprep.subr.mxu0 0.0
    %4015 = vmatpush2.msra.mxu0 0.0
    %4016 = vmatprep.subr.mxu0 0.0
    %4017 = vmatpush2.msra.mxu0 0.0
    %4018 = vmatprep.subr.mxu0 0.0
    %4019 = vmatpush2.msra.mxu0 0.0
    %4020 = vmatprep.subr.mxu0 0.0
    %4021 = vmatpush2.msra.mxu0 0.0
    %4022 = vmatprep.subr.mxu0 0.0
    %4023 = vmatpush2.msra.mxu0 0.0
    %4024 = vmatprep.subr.mxu0 0.0
    %4025 = vmatpush2.msra.mxu0 0.0
    %4026 = vmatprep.subr.mxu0 0.0
    %4027 = vmatpush2.msra.mxu0 0.0
    %4028 = vmatprep.mubr.f32.mxu0 0.0
    %4029 = vmatmul.mubr.f32.gmra.mxu0 %v3827
    %v4030 = vpop.f32.mrf.mxu0
    %v4031 = vadd.f32 %v3889, %v4030
    %v4032 = vpop.f32.mrf.mxu0
    %4033 = vdwg.mxu0
    %4036 = vrot.lane.b32.xlu0 %v3960, 32
    %v4037 = vpop.permute.xlu0 %4036
    %4038 = vrot.lane.b32.xlu0 %v3962, 32
    %v4039 = vpop.permute.xlu0 %4038
    %v4040 = vsel %vm104, %v4037, %v4039
    %v4042 = vadd.f32 %v3960, %v4040
    %v4043 = vxor.u32 %v4042, 2147483648
    %v4044 = vmul.f32 %v4043, 1.442695
    %v4045 = vpow.pop %v4044
    %v4046 = vadd.f32 %v4045, 1.0
    %v4047 = vrcp.pop %v4046
    %v4048 = vmul.f32 1.0, %v4047
    %4049 = vrot.lane.b32.xlu0 %v3962, 96
    %v4050 = vpop.permute.xlu0 %4049
    %v4052 = vmul.f32 %v4048, %v4050
    %4054 = vrot.lane.b32.xlu0 %v4052, 64
    %v4055 = vpop.permute.xlu0 %4054
    %v4057 = vadd.f32 %v3960, %v4055
    %v4058 = vtanh.pop %v4057
    %v4059 = vsub.f32 1.0, %v4048
    %4061 = vrot.lane.b32.xlu0 %v4058, 96
    %v4062 = vpop.permute.xlu0 %4061
    %v4064 = vmul.f32 %v4059, %v4062
    %v4065 = vmul.f32 %v4048, %v3817
    %v4066 = vadd.f32 %v4064, %v4065
    %4068 = vrot.lane.b32.xlu0 %v4031, 32
    %v4069 = vpop.permute.xlu0 %4068
    %v4071 = vadd.f32 %v3962, %v4069
    %v4072 = vxor.u32 %v4071, 2147483648
    %v4073 = vmul.f32 %v4072, 1.442695
    %v4074 = vpow.pop %v4073
    %v4075 = vadd.f32 %v4074, 1.0
    %v4076 = vrcp.pop %v4075
    %v4077 = vmul.f32 1.0, %v4076
    %4078 = vrot.lane.b32.xlu0 %v4031, 96
    %v4079 = vpop.permute.xlu0 %4078
    %v4081 = vmul.f32 %v4077, %v4079
    %4083 = vrot.lane.b32.xlu0 %v4081, 64
    %v4084 = vpop.permute.xlu0 %4083
    %v4086 = vadd.f32 %v4031, %v4084
    %v4087 = vtanh.pop %v4086
    %v4088 = vsub.f32 1.0, %v4077
    %4090 = vrot.lane.b32.xlu0 %v4087, 96
    %v4091 = vpop.permute.xlu0 %4090
    %v4093 = vmul.f32 %v4088, %v4091
    %v4094 = vmul.f32 %v4077, %v3823
    %v4095 = vadd.f32 %v4093, %v4094
    %4097 = vrot.lane.b32.xlu0 %v4066, 96
    %v4098 = vpop.permute.xlu0 %4097
    %4100 = vst.msk [vmem:[%s3539] sm:$0x1] %vm685, %v4098
    %4102 = vrot.lane.b32.xlu0 %v4095, 32
    %v4103 = vpop.permute.xlu0 %4102
    %4105 = vst.msk [vmem:[%s3541] sm:$0x1] %vm685, %v4103
    %s4106 = sld [smem:[#allocation2 + $0x7]]
    %s4107 = sld [smem:[#allocation5 + $0x7]]
    %s4108 = scalar_lea.vmem [#allocation11], %s4106
    %v4109 = vld [vmem:[%s4108] sm:$0x1]
    %s4110 = scalar_lea.vmem [#allocation12], %s4107
    %v4111 = vld [vmem:[%s4110] sm:$0x1]
    %s4112 = sld [smem:[#allocation7 + $0x1c]]
    %s4113 = scalar_lea.vmem [#allocation11], %s4112
    %v4114 = vld [vmem:[%s4113] sm:$0x1]
    %s4115 = sld [smem:[#allocation7 + $0x1d]]
    %s4116 = scalar_lea.vmem [#allocation11], %s4115
    %v4117 = vld [vmem:[%s4116] sm:$0x1]
    %s4118 = sld [smem:[#allocation7 + $0x1e]]
    %s4119 = scalar_lea.vmem [#allocation11], %s4118
    %v4120 = vld [vmem:[%s4119] sm:$0x1]
    %s4121 = sld [smem:[#allocation7 + $0x1f]]
    %s4122 = scalar_lea.vmem [#allocation11], %s4121
    %v4123 = vld [vmem:[%s4122] sm:$0x1]
    %s4124 = sld [smem:[#allocation8 + $0x1c]]
    %s4125 = scalar_lea.vmem [#allocation12], %s4124
    %v4126 = vld [vmem:[%s4125] sm:$0x1]
    %s4127 = sld [smem:[#allocation8 + $0x1d]]
    %s4128 = scalar_lea.vmem [#allocation12], %s4127
    %v4129 = vld [vmem:[%s4128] sm:$0x1]
    %s4130 = sld [smem:[#allocation8 + $0x1e]]
    %s4131 = scalar_lea.vmem [#allocation12], %s4130
    %v4132 = vld [vmem:[%s4131] sm:$0x1]
    %s4133 = sld [smem:[#allocation8 + $0x1f]]
    %s4134 = scalar_lea.vmem [#allocation12], %s4133
    %v4135 = vld [vmem:[%s4134] sm:$0x1]
    %v4137 = vrot.slane %v4117, 7
    %v4140 = vrot.slane %v4120, 6
    %v4143 = vrot.slane %v4123, 5
    %v4145 = vsel %vm154, %v4114, %v4137
    %v4146 = vsel %vm156, %v4145, %v4140
    %v4147 = vsel %vm158, %v4146, %v4143
    %v4149 = vrot.slane %v4126, 7
    %v4152 = vrot.slane %v4129, 6
    %v4155 = vrot.slane %v4132, 5
    %v4158 = vrot.slane %v4135, 4
    %v4160 = vsel %vm154, %v4111, %v4149
    %v4161 = vsel %vm156, %v4160, %v4152
    %v4162 = vsel %vm158, %v4161, %v4155
    %v4163 = vsel %vm175, %v4162, %v4158
    %v4165 = vsel %vm104, %v4109, 0
    %v4168 = vsel %vm104, %v4163, 0
    %4170 = vmatprep.subr.mxu0 0.0
    %4171 = vmatpush1.xpose.msra.mxu0 0.0
    %4172 = vmatprep.subr.mxu0 0.0
    %4173 = vmatpush1.xpose.msra.mxu0 0.0
    %4174 = vmatprep.subr.mxu0 0.0
    %4175 = vmatpush1.xpose.msra.mxu0 0.0
    %4176 = vmatprep.subr.mxu0 0.0
    %4177 = vmatpush1.xpose.msra.mxu0 0.0
    %4178 = vmatprep.subr.mxu0 0.0
    %4179 = vmatpush1.xpose.msra.mxu0 0.0
    %4180 = vmatprep.subr.mxu0 0.0
    %4181 = vmatpush1.xpose.msra.mxu0 0.0
    %4182 = vmatprep.subr.mxu0 0.0
    %4183 = vmatpush1.xpose.msra.mxu0 0.0
    %4184 = vmatprep.subr.mxu0 0.0
    %4185 = vmatpush1.xpose.msra.mxu0 0.0
    %4186 = vmatprep.subr.mxu0 0.0
    %4187 = vmatpush1.xpose.msra.mxu0 0.0
    %4188 = vmatprep.subr.mxu0 0.0
    %4189 = vmatpush1.xpose.msra.mxu0 0.0
    %4190 = vmatprep.subr.mxu0 0.0
    %4191 = vmatpush1.xpose.msra.mxu0 0.0
    %4192 = vmatprep.subr.mxu0 0.0
    %4193 = vmatpush1.xpose.msra.mxu0 0.0
    %4194 = vmatprep.subr.mxu0 0.0
    %4195 = vmatpush1.xpose.msra.mxu0 0.0
    %4196 = vmatprep.subr.mxu0 0.0
    %4197 = vmatpush1.xpose.msra.mxu0 0.0
    %4198 = vmatprep.subr.mxu0 0.0
    %4199 = vmatpush1.xpose.msra.mxu0 0.0
    %4200 = vmatprep.subr.mxu0 0.0
    %4201 = vmatpush1.xpose.msra.mxu0 %v4168
    %4202 = vmatprep.subr.mxu0 0.0
    %4203 = vmatpush2.xpose.msra.mxu0 0.0
    %4204 = vmatprep.subr.mxu0 0.0
    %4205 = vmatpush2.xpose.msra.mxu0 0.0
    %4206 = vmatprep.subr.mxu0 0.0
    %4207 = vmatpush2.xpose.msra.mxu0 0.0
    %4208 = vmatprep.subr.mxu0 0.0
    %4209 = vmatpush2.xpose.msra.mxu0 0.0
    %4210 = vmatprep.subr.mxu0 0.0
    %4211 = vmatpush2.xpose.msra.mxu0 0.0
    %4212 = vmatprep.subr.mxu0 0.0
    %4213 = vmatpush2.xpose.msra.mxu0 0.0
    %4214 = vmatprep.subr.mxu0 0.0
    %4215 = vmatpush2.xpose.msra.mxu0 0.0
    %4216 = vmatprep.subr.mxu0 0.0
    %4217 = vmatpush2.xpose.msra.mxu0 0.0
    %4218 = vmatprep.subr.mxu0 0.0
    %4219 = vmatpush2.xpose.msra.mxu0 0.0
    %4220 = vmatprep.subr.mxu0 0.0
    %4221 = vmatpush2.xpose.msra.mxu0 0.0
    %4222 = vmatprep.subr.mxu0 0.0
    %4223 = vmatpush2.xpose.msra.mxu0 0.0
    %4224 = vmatprep.subr.mxu0 0.0
    %4225 = vmatpush2.xpose.msra.mxu0 0.0
    %4226 = vmatprep.subr.mxu0 0.0
    %4227 = vmatpush2.xpose.msra.mxu0 0.0
    %4228 = vmatprep.subr.mxu0 0.0
    %4229 = vmatpush2.xpose.msra.mxu0 0.0
    %4230 = vmatprep.subr.mxu0 0.0
    %4231 = vmatpush2.xpose.msra.mxu0 0.0
    %4232 = vmatprep.subr.mxu0 0.0
    %4233 = vmatpush2.xpose.msra.mxu0 0.0
    %4234 = vmatprep.mubr.f32.mxu0 0.0
    %4235 = vmatmul.mubr.f32.gmra.mxu0 %v4165
    %v4236 = vpop.f32.mrf.mxu0
    %v4237 = vadd.f32 0.0, %v4236
    %v4238 = vpop.f32.mrf.mxu0
    %4239 = vdwg.mxu0
    %v4240 = vmax.f32 %v4237, 0.0
    %v4241 = vand.u32 2147483647, %v4237
    %v4242 = vsub.f32 0.0, %v4241
    %v4243 = vmul.f32 %v4242, 1.442695
    %v4244 = vpow.pop %v4243
    %v4245 = vadd.f32 %v4244, 1.0
    %v4246 = vlog2.pop %v4245
    %v4247 = vmul.f32 %v4246, 0.6931472
    %v4248 = vmul.f32 -0.5, %v4244
    %v4249 = vadd.f32 %v4248, 1.0
    %v4250 = vmul.f32 %v4249, %v4244
    %v4251 = vand.u32 2147483647, %v4244
    %vm4252 = vcmp.lt.f32.partialorder %v4251, 0.0004427343
    %v4253 = vsel %vm4252, %v4250, %v4247
    %v4254 = vadd.f32 %v4240, %v4253
    %v4256 = vsel %vm104, %v4111, 0
    %v4259 = vsel %vm104, %v4147, 0
    %4261 = vmatprep.subr.mxu0 0.0
    %4262 = vmatpush1.xpose.msra.mxu0 0.0
    %4263 = vmatprep.subr.mxu0 0.0
    %4264 = vmatpush1.xpose.msra.mxu0 0.0
    %4265 = vmatprep.subr.mxu0 0.0
    %4266 = vmatpush1.xpose.msra.mxu0 0.0
    %4267 = vmatprep.subr.mxu0 0.0
    %4268 = vmatpush1.xpose.msra.mxu0 0.0
    %4269 = vmatprep.subr.mxu0 0.0
    %4270 = vmatpush1.xpose.msra.mxu0 0.0
    %4271 = vmatprep.subr.mxu0 0.0
    %4272 = vmatpush1.xpose.msra.mxu0 0.0
    %4273 = vmatprep.subr.mxu0 0.0
    %4274 = vmatpush1.xpose.msra.mxu0 0.0
    %4275 = vmatprep.subr.mxu0 0.0
    %4276 = vmatpush1.xpose.msra.mxu0 0.0
    %4277 = vmatprep.subr.mxu0 0.0
    %4278 = vmatpush1.xpose.msra.mxu0 0.0
    %4279 = vmatprep.subr.mxu0 0.0
    %4280 = vmatpush1.xpose.msra.mxu0 0.0
    %4281 = vmatprep.subr.mxu0 0.0
    %4282 = vmatpush1.xpose.msra.mxu0 0.0
    %4283 = vmatprep.subr.mxu0 0.0
    %4284 = vmatpush1.xpose.msra.mxu0 0.0
    %4285 = vmatprep.subr.mxu0 0.0
    %4286 = vmatpush1.xpose.msra.mxu0 0.0
    %4287 = vmatprep.subr.mxu0 0.0
    %4288 = vmatpush1.xpose.msra.mxu0 0.0
    %4289 = vmatprep.subr.mxu0 0.0
    %4290 = vmatpush1.xpose.msra.mxu0 0.0
    %4291 = vmatprep.subr.mxu0 0.0
    %4292 = vmatpush1.xpose.msra.mxu0 %v4259
    %4293 = vmatprep.subr.mxu0 0.0
    %4294 = vmatpush2.xpose.msra.mxu0 0.0
    %4295 = vmatprep.subr.mxu0 0.0
    %4296 = vmatpush2.xpose.msra.mxu0 0.0
    %4297 = vmatprep.subr.mxu0 0.0
    %4298 = vmatpush2.xpose.msra.mxu0 0.0
    %4299 = vmatprep.subr.mxu0 0.0
    %4300 = vmatpush2.xpose.msra.mxu0 0.0
    %4301 = vmatprep.subr.mxu0 0.0
    %4302 = vmatpush2.xpose.msra.mxu0 0.0
    %4303 = vmatprep.subr.mxu0 0.0
    %4304 = vmatpush2.xpose.msra.mxu0 0.0
    %4305 = vmatprep.subr.mxu0 0.0
    %4306 = vmatpush2.xpose.msra.mxu0 0.0
    %4307 = vmatprep.subr.mxu0 0.0
    %4308 = vmatpush2.xpose.msra.mxu0 0.0
    %4309 = vmatprep.subr.mxu0 0.0
    %4310 = vmatpush2.xpose.msra.mxu0 0.0
    %4311 = vmatprep.subr.mxu0 0.0
    %4312 = vmatpush2.xpose.msra.mxu0 0.0
    %4313 = vmatprep.subr.mxu0 0.0
    %4314 = vmatpush2.xpose.msra.mxu0 0.0
    %4315 = vmatprep.subr.mxu0 0.0
    %4316 = vmatpush2.xpose.msra.mxu0 0.0
    %4317 = vmatprep.subr.mxu0 0.0
    %4318 = vmatpush2.xpose.msra.mxu0 0.0
    %4319 = vmatprep.subr.mxu0 0.0
    %4320 = vmatpush2.xpose.msra.mxu0 0.0
    %4321 = vmatprep.subr.mxu0 0.0
    %4322 = vmatpush2.xpose.msra.mxu0 0.0
    %4323 = vmatprep.subr.mxu0 0.0
    %4324 = vmatpush2.xpose.msra.mxu0 0.0
    %4325 = vmatprep.mubr.f32.mxu0 0.0
    %4326 = vmatmul.mubr.f32.gmra.mxu0 %v4256
    %v4327 = vpop.f32.mrf.mxu0
    %v4328 = vadd.f32 0.0, %v4327
    %v4329 = vpop.f32.mrf.mxu0
    %4330 = vdwg.mxu0
    %v4331 = vmax.f32 %v4328, 0.0
    %v4332 = vand.u32 2147483647, %v4328
    %v4333 = vsub.f32 0.0, %v4332
    %v4334 = vmul.f32 %v4333, 1.442695
    %v4335 = vpow.pop %v4334
    %v4336 = vadd.f32 %v4335, 1.0
    %v4337 = vlog2.pop %v4336
    %v4338 = vmul.f32 %v4337, 0.6931472
    %v4339 = vmul.f32 -0.5, %v4335
    %v4340 = vadd.f32 %v4339, 1.0
    %v4341 = vmul.f32 %v4340, %v4335
    %v4342 = vand.u32 2147483647, %v4335
    %vm4343 = vcmp.lt.f32.partialorder %v4342, 0.0004427343
    %v4344 = vsel %vm4343, %v4341, %v4338
    %v4345 = vadd.f32 %v4331, %v4344
    %v4346 = vmax.f32 %v4254, 1e-20
    %s4347 = sld [smem:[#allocation10 + $0x7]]
    %v4348 = vmul.f32 %v4346, 2.0
    %v4349 = vrcp.pop %v4348
    %v4350 = vmul.f32 3.1415927, %v4349
    %v4351 = vrsqrt.pop %v4350
    %v4352 = vmul.f32 %v4350, %v4351
    %vm4353 = vcmp.eq.f32.partialorder %v4350, inf
    %v4354 = vsel %vm4353, %v4350, %v4352
    %vm4355 = vcmp.eq.f32.partialorder %v4350, 0.0
    %v4356 = vand.u32 %v4350, 2147483648
    %v4357 = vsel %vm4355, %v4356, %v4354
    %v4358 = vstv %s4347
    %v4359 = vsub.f32 %v4357, %v4358
    %v4360 = vand.u32 2147483647, %v4359
    %v4361 = vadd.f32 %v3792, %v4360
    %v4362 = vmul.f32 %v4359, %v4359
    %v4363 = vadd.f32 %v3794, %v4362
    %v4364 = vld [vmem:[%s5 + $0x7] sm:$0x1]
    %v4365 = vmul.f32 %v4345, %v4364
    %v4366 = vld [vmem:[%s6 + $0x7] sm:$0x1]
    %4368 = vrot.lane.b32.xlu0 %v4366, 1
    %v4369 = vpop.permute.xlu0 %4368
    %v4371 = vmul.f32 %v4254, %v4369
    %4373 = vrot.lane.b32.xlu0 %v4371, 127
    %v4374 = vpop.permute.xlu0 %4373
    %v4376 = vadd.f32 %v4365, %v4374
    %v4377 = vsel %vm390, %v4376, 0.0
    %4378 = vadd.xlane.f32.xlu0 %v4377
    %v4379 = vpop.xlane.xlu0 %4378
    %v4380 = vlog2.pop %v4346
    %v4381 = vmul.f32 %v4380, 0.6931472
    %v4382 = vsub.f32 0.0, %v4381
    %v4383 = vadd.f32 %v4382, %v4379
    %v4384 = vadd.f32 %v3815, %v4383
    %v4385 = vlaneseq
    %v4386 = vand.u32 %v4385, 127
    %vm4387 = vcmp.eq.s32.totalorder %v4386, 0
    %4389 = vset.pattern.permute.xlu0 0
    %4390 = vperm.xlu0 %4389, %v4384
    %v4391 = vpop.permute.xlu0 %4390
    %v4393 = vsel %vm4387, %v4391, 0.0
    %vm4394 = vcmp.eq.s32.totalorder %v4386, 1
    %4396 = vset.pattern.permute.xlu0 0
    %4397 = vperm.xlu0 %4396, %v4361
    %v4398 = vpop.permute.xlu0 %4397
    %v4400 = vsel %vm4394, %v4398, 0.0
    %v4401 = vadd.f32 %v4393, %v4400
    %vm4402 = vcmp.eq.s32.totalorder %v4386, 2
    %4404 = vset.pattern.permute.xlu0 0
    %4405 = vperm.xlu0 %4404, %v4363
    %v4406 = vpop.permute.xlu0 %4405
    %v4408 = vsel %vm4402, %v4406, 0.0
    %v4409 = vadd.f32 %v4401, %v4408
    %4410 = vst [vmem:[%s11] sm:$0x1] %v4409
    // Predicated region
    $region66: #{deepcoevolve_forward.1} parent=1 // pred_check
      _
    $region67: #{deepcoevolve_forward.1} parent=1 // pred_check_branch
      %4412 = sbr.rel (0) target = $region69
    $region68: #{deepcoevolve_forward.1} parent=1 // pred_region
      _
    $region69: #{deepcoevolve_forward.1} parent=1 // pred_fallthru
      _
    // Predicated region
    $region70: #{deepcoevolve_forward.1} parent=1 // pred_check
      _
    $region71: #{deepcoevolve_forward.1} parent=1 // pred_check_branch
      %4414 = sbr.rel (0) target = $region73
    $region72: #{deepcoevolve_forward.1} parent=1 // pred_region
      %s4416 = ssub.s32 256, 256
      %4417 = vsyncadd [#allocation3], %s4416
      %s4418 = sshll.u32 [#allocation11], 4
      %s4419 = int_to_ptr.vmem [resolvable:$true] %s4418
      %4424 = dma.vmem_to_hbm [thread:$0]  %s4419, 256, %s12, [#allocation3], 128, 128, 8
    $region73: #{deepcoevolve_forward.1} parent=1 // pred_fallthru
      _
    // Predicated region
    $region74: #{deepcoevolve_forward.1} parent=1 // pred_check
      _
    $region75: #{deepcoevolve_forward.1} parent=1 // pred_check_branch
      %4426 = sbr.rel (0) target = $region77
    $region76: #{deepcoevolve_forward.1} parent=1 // pred_region
      %s4428 = ssub.s32 512, 512
      %4429 = vsyncadd [#allocation13], %s4428
      %s4430 = sshll.u32 [#allocation12], 4
      %s4431 = int_to_ptr.vmem [resolvable:$true] %s4430
      %4436 = dma.vmem_to_hbm [thread:$0]  %s4431, 512, %s13, [#allocation13], 128, 128, 8
    $region77: #{deepcoevolve_forward.1} parent=1 // pred_fallthru
      _
    // Predicated region
    $region78: #{deepcoevolve_forward.1} parent=1 // pred_check
      _
    $region79: #{deepcoevolve_forward.1} parent=1 // pred_check_branch
      %4438 = sbr.rel (0) target = $region81
    $region80: #{deepcoevolve_forward.1} parent=1 // pred_region
      _
    $region81: #{deepcoevolve_forward.1} parent=1 // pred_fallthru
      _
    // Predicated region
    $region82: #{deepcoevolve_forward.1} parent=1 // pred_check
      _
    $region83: #{deepcoevolve_forward.1} parent=1 // pred_check_branch
      %4440 = sbr.rel (0) target = $region85
    $region84: #{deepcoevolve_forward.1} parent=1 // pred_region
      %4441 = dma.done [#allocation3], 256
    $region85: #{deepcoevolve_forward.1} parent=1 // pred_fallthru
      _
    // Predicated region
    $region86: #{deepcoevolve_forward.1} parent=1 // pred_check
      _
    $region87: #{deepcoevolve_forward.1} parent=1 // pred_check_branch
      %4443 = sbr.rel (0) target = $region89
    $region88: #{deepcoevolve_forward.1} parent=1 // pred_region
      %4444 = dma.done [#allocation13], 512
    $region89: #{deepcoevolve_forward.1} parent=1 // pred_fallthru
      _
    %4445 = vsyncpa [#allocation3], 1
    %4446 = vsyncpa [#allocation13], 1
    %4447 = vsyncpa [#allocation4], 1
    %4448 = vsyncpa [#allocation6], 1
    %4449 = vsyncpa [#allocation9], 1

</llo_original>
